<compile_context>
chip_gen: v7x
topology: tpu7x:2x2x1
jax: 0.10.0
libtpu: 0.0.40
codegen_flags: <defaults>
</compile_context>

<pallas_src>
import functools

import jax
import jax.numpy as jnp
from jax.experimental import pallas as pl
from jax.experimental.pallas import tpu as pltpu

BN_EPS = 1e-5
LANE = 128                            # lane-dense channel padding (vreg lane width)
ACT_DTYPE = jnp.bfloat16              # inter-layer activation storage dtype
VMEM_LIMIT_BYTES = 32 * 1024 * 1024   # v7x-safe scoped budget; fine on v5e/v6e too
MXU_TARGET_M = 256                    # rows per matmul we try to reach via batching

# ----------------------------------------------------------------------------
# Config (MobileNet-style, scaled down so the script runs at small shapes).
# Mirrors the PyTorch CONFIG structure consumed by MobileNet._build_model.
# ----------------------------------------------------------------------------
CONFIG = {
    "layers": [
        {"type": "conv",
         "params": {"out_channels": 8, "kernel_size": 3, "stride": 2, "padding": 1}},
        {"type": "dw_conv",
         "params": {"out_channels": 16, "kernel_size": 3, "stride": 1, "padding": 1}},
        {"type": "dw_conv",
         "params": {"out_channels": 32, "kernel_size": 3, "stride": 2, "padding": 1}},
        {"type": "dw_conv",
         "params": {"out_channels": 32, "kernel_size": 3, "stride": 1, "padding": 1}},
        {"type": "avg_pool", "params": {"kernel_size": 4}},
        {"type": "flatten", "params": {}},
        {"type": "fc", "params": {"in_features": 32}},
    ]
}


# ----------------------------------------------------------------------------
# In-kernel helpers (shared by the conv / depthwise kernels)
# ----------------------------------------------------------------------------
def _fill_padded_scratch(x_ref, xpad_ref, *, h, w, pad):
    """Zero a (bsz, h+2p, w+2p, C) VMEM scratch and copy the (bsz, h*w, C) input
    block into its interior. Pure static-slice stores, no in-kernel reshapes."""
    xpad_ref[...] = jnp.zeros(xpad_ref.shape, xpad_ref.dtype)
    for r in range(h):                                   # static unroll over rows
        xpad_ref[:, pad + r, pad:pad + w, :] = (
            x_ref[:, r * w:(r + 1) * w, :].astype(xpad_ref.dtype))


def _taps_from_padded(xpad_ref, kh, kw, ho, wo):
    """k*k tap windows from an in-kernel zero-padded scratch (stride == 1)."""
    return [xpad_ref[:, dh:dh + ho, dw:dw + wo, :]
            for dh in range(kh) for dw in range(kw)]


def _taps_from_phases(xph, kh, kw, stride, ho, wo, php):
    """k*k tap windows from a phase-split (space-to-depth) input (stride > 1)."""
    taps = []
    for dh in range(kh):
        for dw in range(kw):
            pidx = (dh % stride) * stride + (dw % stride)
            r0 = pidx * php + dh // stride
            c0 = dw // stride
            taps.append(xph[:, r0:r0 + ho, c0:c0 + wo, :])
    return taps


def _store_rows(o_ref, y):
    """Store a (bsz*M, C) value into a (bsz, M, C) output block without any
    split reshape (per-image static slices only)."""
    bsz, m, _ = o_ref.shape
    for b in range(bsz):
        o_ref[b] = y[b * m:(b + 1) * m, :].astype(o_ref.dtype)


def _im2col_conv(taps, w_ref, b_ref, o_ref):
    """Standard conv via one im2col matmul: concat k*k taps along the lane axis
    (K = k*k*128) and hit the MXU once; folded-BN bias + ReLU; bf16 store."""
    bsz, ho, wo, c = taps[0].shape
    xcol = jnp.concatenate(taps, axis=-1).reshape(bsz * ho * wo, len(taps) * c)
    y = jnp.dot(xcol, w_ref[...], preferred_element_type=jnp.float32)
    y = jnp.maximum(y + b_ref[...], 0.0)
    _store_rows(o_ref, y)


def _dw_pw_body(taps_f32, wdw_ref, bdw_ref, wpw_ref, bpw_ref, o_ref):
    """Depthwise MAC (f32 VPU, v5e-safe) + BN + ReLU, then the fused pointwise
    1x1 MXU matmul + BN + ReLU. The depthwise intermediate never touches HBM."""
    bsz, ho, wo, c = taps_f32[0].shape
    acc = jnp.zeros((bsz, ho, wo, c), jnp.float32)
    for t, tap in enumerate(taps_f32):                   # static unroll over taps
        acc = acc + tap * wdw_ref[t]                     # wdw_ref[t]: (1, C) broadcast
    hdw = jnp.maximum(acc + bdw_ref[...], 0.0)           # depthwise BN + ReLU
    y = jnp.dot(hdw.reshape(bsz * ho * wo, c).astype(jnp.bfloat16), wpw_ref[...],
                preferred_element_type=jnp.float32)
    y = jnp.maximum(y + bpw_ref[...], 0.0)
    _store_rows(o_ref, y)


# ----------------------------------------------------------------------------
# Pallas kernels
# ----------------------------------------------------------------------------
def _conv_s1_kernel(x_ref, w_ref, b_ref, o_ref, xpad_ref,
                    *, kh, kw, pad, h, w, ho, wo):
    _fill_padded_scratch(x_ref, xpad_ref, h=h, w=w, pad=pad)
    taps = _taps_from_padded(xpad_ref, kh, kw, ho, wo)
    _im2col_conv(taps, w_ref, b_ref, o_ref)


def _conv_ph_kernel(xph_ref, w_ref, b_ref, o_ref, *, kh, kw, stride, ho, wo, php):
    taps = _taps_from_phases(xph_ref, kh, kw, stride, ho, wo, php)
    _im2col_conv(taps, w_ref, b_ref, o_ref)


def _dw_s1_kernel(x_ref, wdw_ref, bdw_ref, wpw_ref, bpw_ref, o_ref, xpad_ref,
                  *, kh, kw, pad, h, w, ho, wo):
    # f32 scratch: the bf16 -> f32 cast happens exactly once at the scratch fill.
    _fill_padded_scratch(x_ref, xpad_ref, h=h, w=w, pad=pad)
    taps = _taps_from_padded(xpad_ref, kh, kw, ho, wo)
    _dw_pw_body(taps, wdw_ref, bdw_ref, wpw_ref, bpw_ref, o_ref)


def _dw_ph_kernel(xph_ref, wdw_ref, bdw_ref, wpw_ref, bpw_ref, o_ref,
                  *, kh, kw, stride, ho, wo, php):
    xph = xph_ref[...].astype(jnp.float32)               # cast the block once
    taps = _taps_from_phases(xph, kh, kw, stride, ho, wo, php)
    _dw_pw_body(taps, wdw_ref, bdw_ref, wpw_ref, bpw_ref, o_ref)


def _pool_fc_kernel(x_ref, w_ref, b_ref, o_ref):
    """Fused avg_pool (full window) + flatten + fc on one batch block."""
    xm = jnp.mean(x_ref[...].astype(jnp.float32), axis=1)          # (bsz, C_p)
    y = jnp.dot(xm.astype(jnp.bfloat16), w_ref[...],
                preferred_element_type=jnp.float32)
    o_ref[:, 0, :] = y + b_ref[...]


# ----------------------------------------------------------------------------
# Plain-JAX glue
# ----------------------------------------------------------------------------
def _pad_lanes(a, size):
    return jnp.pad(a, [(0, 0)] * (a.ndim - 1) + [(0, size - a.shape[-1])])


def _pad2(a, s0, s1):
    return jnp.pad(a, [(0, 0)] * (a.ndim - 2)
                   + [(0, s0 - a.shape[-2]), (0, s1 - a.shape[-1])])


def _fold_bn(bn, conv_bias):
    s = bn["gamma"] / jnp.sqrt(bn["var"] + BN_EPS)
    b = (conv_bias - bn["mean"]) * s + bn["beta"]
    return s, b


def _phase_split(x, kh, kw, stride, padding, ho, wo):
    """Pad x (NHWC) and split into stride*stride phases so every conv tap becomes
    an unstrided, statically shifted in-kernel slice. Only used for stride > 1."""
    n, h, w, c = x.shape
    s = stride
    hp = s * (ho + (kh - 1) // s)
    wp = s * (wo + (kw - 1) // s)
    xp = jnp.pad(x, ((0, 0),
                     (padding, max(hp - h - padding, 0)),
                     (padding, max(wp - w - padding, 0)),
                     (0, 0)))[:, :hp, :wp, :]
    php, pwp = hp // s, wp // s
    ph = xp.reshape(n, php, s, pwp, s, c).transpose(0, 2, 4, 1, 3, 5)
    return ph.reshape(n, s * s * php, pwp, c), php


def _compiler_params():
    return pltpu.CompilerParams(
        dimension_semantics=("parallel",),
        vmem_limit_bytes=VMEM_LIMIT_BYTES,
    )


def _batch_per_step(n, m_per_image, target_m=MXU_TARGET_M):
    """Images per grid step: reach M >= target_m for the MXU when the batch allows
    it, while keeping >= 2 grid steps so megacore parts can shard the grid."""
    divisors = [d for d in range(1, n + 1) if n % d == 0]
    usable = [d for d in divisors if n // d >= 2] or [1]
    for d in usable:
        if d * m_per_image >= target_m:
            return d
    return usable[-1]


# ----------------------------------------------------------------------------
# Layer wrappers
# ----------------------------------------------------------------------------
def conv_bn_relu(x, h, w, prep, *, kernel_size, stride, padding):
    """x: (N, h*w, 128) bf16 lane-padded NHWC. Returns ((N, ho*wo, 128) bf16, ho, wo)."""
    n = x.shape[0]
    kh = kw = kernel_size
    ho = (h + 2 * padding - kh) // stride + 1
    wo = (w + 2 * padding - kw) // stride + 1
    bpg = _batch_per_step(n, ho * wo)
    grid = (n // bpg,)
    out_shape = jax.ShapeDtypeStruct((n, ho * wo, LANE), ACT_DTYPE)
    out_spec = pl.BlockSpec((bpg, ho * wo, LANE), lambda i: (i, 0, 0))
    w_spec = pl.BlockSpec(prep["w"].shape, lambda i: (0, 0))
    b_spec = pl.BlockSpec(prep["b"].shape, lambda i: (0, 0))

    if stride == 1:
        kernel = functools.partial(_conv_s1_kernel, kh=kh, kw=kw, pad=padding,
                                   h=h, w=w, ho=ho, wo=wo)
        out = pl.pallas_call(
            kernel,
            out_shape=out_shape,
            grid=grid,
            in_specs=[pl.BlockSpec((bpg, h * w, LANE), lambda i: (i, 0, 0)),
                      w_spec, b_spec],
            out_specs=out_spec,
            scratch_shapes=[pltpu.VMEM(
                (bpg, h + 2 * padding, w + 2 * padding, LANE), ACT_DTYPE)],
            compiler_params=_compiler_params(),
        )(x, prep["w"], prep["b"])
    else:
        # TODO(synk): fold this stride>1 phase split into the kernel (pl.ds strided
        # reads from a padded VMEM scratch) to drop the remaining XLA-side HBM pass.
        ph, php = _phase_split(x.reshape(n, h, w, LANE), kh, kw, stride, padding, ho, wo)
        kernel = functools.partial(_conv_ph_kernel, kh=kh, kw=kw, stride=stride,
                                   ho=ho, wo=wo, php=php)
        out = pl.pallas_call(
            kernel,
            out_shape=out_shape,
            grid=grid,
            in_specs=[pl.BlockSpec((bpg,) + ph.shape[1:], lambda i: (i, 0, 0, 0)),
                      w_spec, b_spec],
            out_specs=out_spec,
            compiler_params=_compiler_params(),
        )(ph, prep["w"], prep["b"])
    return out, ho, wo


def dw_pw_bn_relu(x, h, w, prep, *, kernel_size, stride, padding):
    """Fused DepthWiseConv2d block: depthwise kxk + BN + ReLU followed by the
    pointwise 1x1 + BN + ReLU, in one kernel (no HBM round trip between)."""
    n = x.shape[0]
    kh = kw = kernel_size
    ho = (h + 2 * padding - kh) // stride + 1
    wo = (w + 2 * padding - kw) // stride + 1
    bpg = _batch_per_step(n, ho * wo)
    grid = (n // bpg,)
    out_shape = jax.ShapeDtypeStruct((n, ho * wo, LANE), ACT_DTYPE)
    out_spec = pl.BlockSpec((bpg, ho * wo, LANE), lambda i: (i, 0, 0))
    wdw_spec = pl.BlockSpec(prep["wdw"].shape, lambda i: (0, 0, 0))
    bdw_spec = pl.BlockSpec(prep["bdw"].shape, lambda i: (0, 0))
    wpw_spec = pl.BlockSpec(prep["wpw"].shape, lambda i: (0, 0))
    bpw_spec = pl.BlockSpec(prep["bpw"].shape, lambda i: (0, 0))
    weights = (prep["wdw"], prep["bdw"], prep["wpw"], prep["bpw"])

    if stride == 1:
        kernel = functools.partial(_dw_s1_kernel, kh=kh, kw=kw, pad=padding,
                                   h=h, w=w, ho=ho, wo=wo)
        out = pl.pallas_call(
            kernel,
            out_shape=out_shape,
            grid=grid,
            in_specs=[pl.BlockSpec((bpg, h * w, LANE), lambda i: (i, 0, 0)),
                      wdw_spec, bdw_spec, wpw_spec, bpw_spec],
            out_specs=out_spec,
            scratch_shapes=[pltpu.VMEM(
                (bpg, h + 2 * padding, w + 2 * padding, LANE), jnp.float32)],
            compiler_params=_compiler_params(),
        )(x, *weights)
    else:
        ph, php = _phase_split(x.reshape(n, h, w, LANE), kh, kw, stride, padding, ho, wo)
        kernel = functools.partial(_dw_ph_kernel, kh=kh, kw=kw, stride=stride,
                                   ho=ho, wo=wo, php=php)
        out = pl.pallas_call(
            kernel,
            out_shape=out_shape,
            grid=grid,
            in_specs=[pl.BlockSpec((bpg,) + ph.shape[1:], lambda i: (i, 0, 0, 0)),
                      wdw_spec, bdw_spec, wpw_spec, bpw_spec],
            out_specs=out_spec,
            compiler_params=_compiler_params(),
        )(ph, *weights)
    return out, ho, wo


def avgpool_flatten_fc(x, h, w, fc_prep, pool_k, n_classes):
    """Fused tail: AvgPool2d(pool_k) (full spatial window) + Flatten + Linear."""
    n = x.shape[0]
    assert h == pool_k and w == pool_k, "avg_pool must cover the full spatial extent"
    bpg = _batch_per_step(n, 1)
    grid = (n // bpg,)
    out = pl.pallas_call(
        _pool_fc_kernel,
        out_shape=jax.ShapeDtypeStruct((n, 1, LANE), jnp.float32),
        grid=grid,
        in_specs=[pl.BlockSpec((bpg, h * w, LANE), lambda i: (i, 0, 0)),
                  pl.BlockSpec(fc_prep["w"].shape, lambda i: (0, 0)),
                  pl.BlockSpec(fc_prep["b"].shape, lambda i: (0, 0))],
        out_specs=pl.BlockSpec((bpg, 1, LANE), lambda i: (i, 0, 0)),
        compiler_params=_compiler_params(),
    )(x, fc_prep["w"], fc_prep["b"])
    return out.reshape(n, LANE)[:, :n_classes]


# ----------------------------------------------------------------------------
# One-time weight preprocessing (hoisted out of the per-forward path)
# ----------------------------------------------------------------------------
def prepare_params(params, config):
    prepped = []
    for layer, p in zip(config["layers"], params):
        lt = layer["type"]
        if lt == "conv":
            o, i, kh, kw = p["w"].shape
            s_bn, b_bn = _fold_bn(p["bn"], p["b"])
            wt = jnp.transpose(p["w"], (2, 3, 1, 0)) * s_bn            # (kh,kw,I,O)
            wt = jnp.pad(wt, ((0, 0), (0, 0), (0, LANE - i), (0, LANE - o)))
            prepped.append({
                "w": wt.reshape(kh * kw * LANE, LANE).astype(jnp.bfloat16),
                "b": _pad_lanes(b_bn, LANE).reshape(1, LANE),
            })
        elif lt == "dw_conv":
            c, _, kh, kw = p["dw"]["w"].shape
            s_dw, b_dw = _fold_bn(p["dw"]["bn"], p["dw"]["b"])
            wdw = jnp.transpose(p["dw"]["w"][:, 0], (1, 2, 0)).reshape(kh * kw, c) * s_dw
            s_pw, b_pw = _fold_bn(p["pw"]["bn"], p["pw"]["b"])
            wpw = p["pw"]["w"][:, :, 0, 0].T * s_pw                    # (C, O)
            prepped.append({
                "wdw": _pad_lanes(wdw, LANE).reshape(kh * kw, 1, LANE),  # f32 VPU MAC
                "bdw": _pad_lanes(b_dw, LANE).reshape(1, LANE),
                "wpw": _pad2(wpw, LANE, LANE).astype(jnp.bfloat16),
                "bpw": _pad_lanes(b_pw, LANE).reshape(1, LANE),
            })
        elif lt == "fc":
            prepped.append({
                "w": _pad2(p["w"].T, LANE, LANE).astype(jnp.bfloat16),   # (in_p, out_p)
                "b": _pad_lanes(p["b"], LANE).reshape(1, LANE),
            })
        else:  # flatten / avg_pool have no params
            prepped.append(None)
    return prepped


# ----------------------------------------------------------------------------
# Parameter construction (deterministic, mirrors nn.Module shapes)
# ----------------------------------------------------------------------------
def _init_conv(key, out_c, in_c_per_group, kh, kw):
    k1, k2 = jax.random.split(key)
    return {
        "w": 0.1 * jax.random.normal(k1, (out_c, in_c_per_group, kh, kw), jnp.float32),
        "b": 0.1 * jax.random.normal(k2, (out_c,), jnp.float32),
    }


def _init_bn(key, c):
    k1, k2, k3, k4 = jax.random.split(key, 4)
    return {
        "gamma": 1.0 + 0.1 * jax.random.normal(k1, (c,), jnp.float32),
        "beta": 0.1 * jax.random.normal(k2, (c,), jnp.float32),
        "mean": 0.1 * jax.random.normal(k3, (c,), jnp.float32),
        "var": 1.0 + 0.1 * jnp.abs(jax.random.normal(k4, (c,), jnp.float32)),
    }


def init_mobilenet_params(key, in_channels, n_classes, config):
    params = []
    c = in_channels
    for layer in config["layers"]:
        key, sub = jax.random.split(key)
        lt, lp = layer["type"], layer["params"]
        if lt == "conv":
            k1, k2 = jax.random.split(sub)
            conv = _init_conv(k1, lp["out_channels"], c, lp["kernel_size"], lp["kernel_size"])
            conv["bn"] = _init_bn(k2, lp["out_channels"])
            params.append(conv)
            c = lp["out_channels"]
        elif lt == "dw_conv":
            k1, k2, k3, k4 = jax.random.split(sub, 4)
            dw = _init_conv(k1, c, 1, lp["kernel_size"], lp["kernel_size"])  # (C,1,kh,kw)
            dw["bn"] = _init_bn(k2, c)
            pw = _init_conv(k3, lp["out_channels"], c, 1, 1)
            pw["bn"] = _init_bn(k4, lp["out_channels"])
            params.append({"dw": dw, "pw": pw})
            c = lp["out_channels"]
        elif lt == "fc":
            k1, k2 = jax.random.split(sub)
            params.append({
                "w": 0.1 * jax.random.normal(k1, (n_classes, lp["in_features"]), jnp.float32),
                "b": 0.1 * jax.random.normal(k2, (n_classes,), jnp.float32),
            })
            c = n_classes
        else:  # flatten / avg_pool have no params
            params.append(None)
    return params


# ----------------------------------------------------------------------------
# Forward pass
# ----------------------------------------------------------------------------
def mobilenet_forward(prepped, x_nchw, config=CONFIG, n_classes=10):
    layers = config["layers"]
    n, _, h, w = x_nchw.shape
    x = jnp.transpose(x_nchw, (0, 2, 3, 1))                      # NCHW -> NHWC
    x = _pad_lanes(x, LANE).astype(ACT_DTYPE).reshape(n, h * w, LANE)
    idx = 0
    while idx < len(layers):
        lt, lp = layers[idx]["type"], layers[idx]["params"]
        if lt == "conv":
            x, h, w = conv_bn_relu(x, h, w, prepped[idx],
                                   kernel_size=lp["kernel_size"],
                                   stride=lp.get("stride", 1),
                                   padding=lp.get("padding", 1))
        elif lt == "dw_conv":
            x, h, w = dw_pw_bn_relu(x, h, w, prepped[idx],
                                    kernel_size=lp["kernel_size"],
                                    stride=lp.get("stride", 1),
                                    padding=lp.get("padding", 1))
        elif lt == "avg_pool":
            # Fused tail: avg_pool + flatten + fc collapse into one kernel.
            fc_idx = idx + 1
            while layers[fc_idx]["type"] != "fc":
                fc_idx += 1
            x = avgpool_flatten_fc(x, h, w, prepped[fc_idx], lp["kernel_size"], n_classes)
            idx = fc_idx
        else:
            # flatten / fc are consumed by the fused avg_pool tail above.
            raise NotImplementedError(f"standalone layer type: {lt}")
        idx += 1
    return x


if __name__ == "__main__":
    in_channels, n_classes = 4, 10
    key = jax.random.PRNGKey(0)
    key, pkey, xkey = jax.random.split(key, 3)

    params = init_mobilenet_params(pkey, in_channels, n_classes, CONFIG)
    prepped = prepare_params(params, CONFIG)          # one-time weight prep (hoisted)
    x = jax.random.normal(xkey, (2, in_channels, 16, 16), jnp.float32)  # NCHW like PyTorch

    fwd = jax.jit(functools.partial(mobilenet_forward, config=CONFIG, n_classes=n_classes))
    out = jax.block_until_ready(fwd(prepped, x))
    assert out.shape == (2, n_classes), out.shape
    assert jnp.all(jnp.isfinite(out))
    print("KERNEL_OK")
</pallas_src>

<mosaic_0001>
module attributes {stable_mosaic.version = 11 : i64} {
  func.func @_conv_ph_kernel(%arg0: i32, %arg1: memref<1x36x9x128xbf16, #tpu.memory_space<vmem>>, %arg2: memref<1152x128xbf16, #tpu.memory_space<vmem>>, %arg3: memref<1x128xf32, #tpu.memory_space<vmem>>, %arg4: memref<1x64x128xbf16, #tpu.memory_space<vmem>>) attributes {dimension_semantics = [#tpu.dimension_semantics<parallel>], iteration_bounds = array<i64: 2>, scalar_prefetch = 0 : i64, scratch_operands = 0 : i64, tpu.core_type = #tpu.core_type<tc>, window_params = [{transform_indices = @transform_0, window_bounds = array<i64: 1, 36, 9, 128>}, {pipeline_mode = #tpu.pipeline_mode<synchronous>, transform_indices = @transform_1, window_bounds = array<i64: 1152, 128>}, {pipeline_mode = #tpu.pipeline_mode<synchronous>, transform_indices = @transform_2, window_bounds = array<i64: 1, 128>}, {transform_indices = @transform_3, window_bounds = array<i64: 1, 64, 128>}]} {
    %c0 = arith.constant 0 : index
    %c0_0 = arith.constant 0 : index
    %c0_1 = arith.constant 0 : index
    %c0_2 = arith.constant 0 : index
    %0 = vector.load %arg1[%c0, %c0_0, %c0_1, %c0_2] : memref<1x36x9x128xbf16, #tpu.memory_space<vmem>>, vector<1x8x8x128xbf16>
    %c0_3 = arith.constant 0 : index
    %c9 = arith.constant 9 : index
    %c0_4 = arith.constant 0 : index
    %c0_5 = arith.constant 0 : index
    %1 = vector.load %arg1[%c0_3, %c9, %c0_4, %c0_5] : memref<1x36x9x128xbf16, #tpu.memory_space<vmem>>, vector<1x8x8x128xbf16>
    %c0_6 = arith.constant 0 : index
    %c0_7 = arith.constant 0 : index
    %c1 = arith.constant 1 : index
    %c0_8 = arith.constant 0 : index
    %2 = vector.load %arg1[%c0_6, %c0_7, %c1, %c0_8] : memref<1x36x9x128xbf16, #tpu.memory_space<vmem>>, vector<1x8x8x128xbf16>
    %c0_9 = arith.constant 0 : index
    %c18 = arith.constant 18 : index
    %c0_10 = arith.constant 0 : index
    %c0_11 = arith.constant 0 : index
    %3 = vector.load %arg1[%c0_9, %c18, %c0_10, %c0_11] : memref<1x36x9x128xbf16, #tpu.memory_space<vmem>>, vector<1x8x8x128xbf16>
    %c0_12 = arith.constant 0 : index
    %c27 = arith.constant 27 : index
    %c0_13 = arith.constant 0 : index
    %c0_14 = arith.constant 0 : index
    %4 = vector.load %arg1[%c0_12, %c27, %c0_13, %c0_14] : memref<1x36x9x128xbf16, #tpu.memory_space<vmem>>, vector<1x8x8x128xbf16>
    %c0_15 = arith.constant 0 : index
    %c18_16 = arith.constant 18 : index
    %c1_17 = arith.constant 1 : index
    %c0_18 = arith.constant 0 : index
    %5 = vector.load %arg1[%c0_15, %c18_16, %c1_17, %c0_18] : memref<1x36x9x128xbf16, #tpu.memory_space<vmem>>, vector<1x8x8x128xbf16>
    %c0_19 = arith.constant 0 : index
    %c1_20 = arith.constant 1 : index
    %c0_21 = arith.constant 0 : index
    %c0_22 = arith.constant 0 : index
    %6 = vector.load %arg1[%c0_19, %c1_20, %c0_21, %c0_22] : memref<1x36x9x128xbf16, #tpu.memory_space<vmem>>, vector<1x8x8x128xbf16>
    %c0_23 = arith.constant 0 : index
    %c10 = arith.constant 10 : index
    %c0_24 = arith.constant 0 : index
    %c0_25 = arith.constant 0 : index
    %7 = vector.load %arg1[%c0_23, %c10, %c0_24, %c0_25] : memref<1x36x9x128xbf16, #tpu.memory_space<vmem>>, vector<1x8x8x128xbf16>
    %c0_26 = arith.constant 0 : index
    %c1_27 = arith.constant 1 : index
    %c1_28 = arith.constant 1 : index
    %c0_29 = arith.constant 0 : index
    %8 = vector.load %arg1[%c0_26, %c1_27, %c1_28, %c0_29] : memref<1x36x9x128xbf16, #tpu.memory_space<vmem>>, vector<1x8x8x128xbf16>
    %9 = tpu.concatenate %0, %1, %2, %3, %4, %5, %6, %7, %8 in 3 : vector<1x8x8x128xbf16>, vector<1x8x8x128xbf16>, vector<1x8x8x128xbf16>, vector<1x8x8x128xbf16>, vector<1x8x8x128xbf16>, vector<1x8x8x128xbf16>, vector<1x8x8x128xbf16>, vector<1x8x8x128xbf16>, vector<1x8x8x128xbf16> -> vector<1x8x8x1152xbf16>
    %10 = vector.shape_cast %9 : vector<1x8x8x1152xbf16> to vector<64x1152xbf16>
    %c0_30 = arith.constant 0 : index
    %c0_31 = arith.constant 0 : index
    %11 = vector.load %arg2[%c0_30, %c0_31] : memref<1152x128xbf16, #tpu.memory_space<vmem>>, vector<1152x128xbf16>
    %cst = arith.constant dense<0.000000e+00> : vector<64x128xf32>
    %12 = tpu.matmul %10, %11, %cst {dimension_numbers = #tpu.dot_dimension_numbers<[1], [0], [0], [1], [0, 0, 1, 1], [], []>} : vector<64x1152xbf16>, vector<1152x128xbf16>, vector<64x128xf32> -> vector<64x128xf32>
    %c0_32 = arith.constant 0 : index
    %c0_33 = arith.constant 0 : index
    %13 = vector.load %arg3[%c0_32, %c0_33] : memref<1x128xf32, #tpu.memory_space<vmem>>, vector<1x128xf32>
    %14 = vector.broadcast %13 : vector<1x128xf32> to vector<64x128xf32>
    %15 = arith.addf %12, %14 : vector<64x128xf32>
    %cst_34 = arith.constant 0.000000e+00 : f32
    %16 = vector.broadcast %cst_34 : f32 to vector<64x128xf32>
    %17 = arith.maximumf %15, %16 : vector<64x128xf32>
    %18 = arith.truncf %17 : vector<64x128xf32> to vector<64x128xbf16>
    %c0_35 = arith.constant 0 : index
    %c0_36 = arith.constant 0 : index
    %c0_37 = arith.constant 0 : index
    %19 = vector.load %arg4[%c0_35, %c0_36, %c0_37] : memref<1x64x128xbf16, #tpu.memory_space<vmem>>, vector<1x64x128xbf16>
    %20 = vector.shape_cast %19 : vector<1x64x128xbf16> to vector<64x128xbf16>
    %21 = vector.shape_cast %18 : vector<64x128xbf16> to vector<1x64x128xbf16>
    tpu.vector_store %arg4[%c0_35, %c0_36, %c0_37], %21 {strides = array<i32>} : memref<1x64x128xbf16, #tpu.memory_space<vmem>>, vector<1x64x128xbf16>,
    return
  }
  func.func @transform_0(%arg0: i32) -> (i32, i32, i32, i32) {
    %c0_i32 = arith.constant 0 : i32
    %c0_i32_0 = arith.constant 0 : i32
    %c0_i32_1 = arith.constant 0 : i32
    %c0_i32_2 = arith.constant 0 : i32
    return %arg0, %c0_i32, %c0_i32_0, %c0_i32_1 : i32, i32, i32, i32
  }
  func.func @transform_1(%arg0: i32) -> (i32, i32) {
    %c0_i32 = arith.constant 0 : i32
    %c0_i32_0 = arith.constant 0 : i32
    %c0_i32_1 = arith.constant 0 : i32
    return %c0_i32, %c0_i32_0 : i32, i32
  }
  func.func @transform_2(%arg0: i32) -> (i32, i32) {
    %c0_i32 = arith.constant 0 : i32
    %c0_i32_0 = arith.constant 0 : i32
    %c0_i32_1 = arith.constant 0 : i32
    return %c0_i32, %c0_i32_0 : i32, i32
  }
  func.func @transform_3(%arg0: i32) -> (i32, i32, i32) {
    %c0_i32 = arith.constant 0 : i32
    %c0_i32_0 = arith.constant 0 : i32
    %c0_i32_1 = arith.constant 0 : i32
    return %arg0, %c0_i32, %c0_i32_0 : i32, i32, i32
  }
}

module attributes {stable_mosaic.version = 11 : i64} {
  func.func @_dw_s1_kernel(%arg0: i32, %arg1: memref<1x64x128xbf16, #tpu.memory_space<vmem>>, %arg2: memref<9x1x128xf32, #tpu.memory_space<vmem>>, %arg3: memref<1x128xf32, #tpu.memory_space<vmem>>, %arg4: memref<128x128xbf16, #tpu.memory_space<vmem>>, %arg5: memref<1x128xf32, #tpu.memory_space<vmem>>, %arg6: memref<1x64x128xbf16, #tpu.memory_space<vmem>>, %arg7: memref<1x10x10x128xf32, #tpu.memory_space<vmem>>) attributes {dimension_semantics = [#tpu.dimension_semantics<parallel>], iteration_bounds = array<i64: 2>, scalar_prefetch = 0 : i64, scratch_operands = 1 : i64, tpu.core_type = #tpu.core_type<tc>, window_params = [{transform_indices = @transform_0, window_bounds = array<i64: 1, 64, 128>}, {pipeline_mode = #tpu.pipeline_mode<synchronous>, transform_indices = @transform_1, window_bounds = array<i64: 9, 1, 128>}, {pipeline_mode = #tpu.pipeline_mode<synchronous>, transform_indices = @transform_2, window_bounds = array<i64: 1, 128>}, {pipeline_mode = #tpu.pipeline_mode<synchronous>, transform_indices = @transform_3, window_bounds = array<i64: 128, 128>}, {pipeline_mode = #tpu.pipeline_mode<synchronous>, transform_indices = @transform_4, window_bounds = array<i64: 1, 128>}, {transform_indices = @transform_5, window_bounds = array<i64: 1, 64, 128>}]} {
    %cst = arith.constant 0.000000e+00 : f32
    %0 = vector.broadcast %cst : f32 to vector<1x10x10x128xf32>
    %c0 = arith.constant 0 : index
    %c0_0 = arith.constant 0 : index
    %c0_1 = arith.constant 0 : index
    %c0_2 = arith.constant 0 : index
    %1 = vector.load %arg7[%c0, %c0_0, %c0_1, %c0_2] : memref<1x10x10x128xf32, #tpu.memory_space<vmem>>, vector<1x10x10x128xf32>
    tpu.vector_store %arg7[%c0, %c0_0, %c0_1, %c0_2], %0 {strides = array<i32>} : memref<1x10x10x128xf32, #tpu.memory_space<vmem>>, vector<1x10x10x128xf32>,
    %c0_3 = arith.constant 0 : index
    %c0_4 = arith.constant 0 : index
    %c0_5 = arith.constant 0 : index
    %2 = vector.load %arg1[%c0_3, %c0_4, %c0_5] : memref<1x64x128xbf16, #tpu.memory_space<vmem>>, vector<1x8x128xbf16>
    %3 = arith.extf %2 : vector<1x8x128xbf16> to vector<1x8x128xf32>
    %c0_6 = arith.constant 0 : index
    %c1 = arith.constant 1 : index
    %c1_7 = arith.constant 1 : index
    %c0_8 = arith.constant 0 : index
    %4 = vector.load %arg7[%c0_6, %c1, %c1_7, %c0_8] : memref<1x10x10x128xf32, #tpu.memory_space<vmem>>, vector<1x1x8x128xf32>
    %5 = vector.shape_cast %4 : vector<1x1x8x128xf32> to vector<1x8x128xf32>
    %6 = vector.shape_cast %3 : vector<1x8x128xf32> to vector<1x1x8x128xf32>
    tpu.vector_store %arg7[%c0_6, %c1, %c1_7, %c0_8], %6 {strides = array<i32>} : memref<1x10x10x128xf32, #tpu.memory_space<vmem>>, vector<1x1x8x128xf32>,
    %c0_9 = arith.constant 0 : index
    %c8 = arith.constant 8 : index
    %c0_10 = arith.constant 0 : index
    %7 = vector.load %arg1[%c0_9, %c8, %c0_10] : memref<1x64x128xbf16, #tpu.memory_space<vmem>>, vector<1x8x128xbf16>
    %8 = arith.extf %7 : vector<1x8x128xbf16> to vector<1x8x128xf32>
    %c0_11 = arith.constant 0 : index
    %c2 = arith.constant 2 : index
    %c1_12 = arith.constant 1 : index
    %c0_13 = arith.constant 0 : index
    %9 = vector.load %arg7[%c0_11, %c2, %c1_12, %c0_13] : memref<1x10x10x128xf32, #tpu.memory_space<vmem>>, vector<1x1x8x128xf32>
    %10 = vector.shape_cast %9 : vector<1x1x8x128xf32> to vector<1x8x128xf32>
    %11 = vector.shape_cast %8 : vector<1x8x128xf32> to vector<1x1x8x128xf32>
    tpu.vector_store %arg7[%c0_11, %c2, %c1_12, %c0_13], %11 {strides = array<i32>} : memref<1x10x10x128xf32, #tpu.memory_space<vmem>>, vector<1x1x8x128xf32>,
    %c0_14 = arith.constant 0 : index
    %c16 = arith.constant 16 : index
    %c0_15 = arith.constant 0 : index
    %12 = vector.load %arg1[%c0_14, %c16, %c0_15] : memref<1x64x128xbf16, #tpu.memory_space<vmem>>, vector<1x8x128xbf16>
    %13 = arith.extf %12 : vector<1x8x128xbf16> to vector<1x8x128xf32>
    %c0_16 = arith.constant 0 : index
    %c3 = arith.constant 3 : index
    %c1_17 = arith.constant 1 : index
    %c0_18 = arith.constant 0 : index
    %14 = vector.load %arg7[%c0_16, %c3, %c1_17, %c0_18] : memref<1x10x10x128xf32, #tpu.memory_space<vmem>>, vector<1x1x8x128xf32>
    %15 = vector.shape_cast %14 : vector<1x1x8x128xf32> to vector<1x8x128xf32>
    %16 = vector.shape_cast %13 : vector<1x8x128xf32> to vector<1x1x8x128xf32>
    tpu.vector_store %arg7[%c0_16, %c3, %c1_17, %c0_18], %16 {strides = array<i32>} : memref<1x10x10x128xf32, #tpu.memory_space<vmem>>, vector<1x1x8x128xf32>,
    %c0_19 = arith.constant 0 : index
    %c24 = arith.constant 24 : index
    %c0_20 = arith.constant 0 : index
    %17 = vector.load %arg1[%c0_19, %c24, %c0_20] : memref<1x64x128xbf16, #tpu.memory_space<vmem>>, vector<1x8x128xbf16>
    %18 = arith.extf %17 : vector<1x8x128xbf16> to vector<1x8x128xf32>
    %c0_21 = arith.constant 0 : index
    %c4 = arith.constant 4 : index
    %c1_22 = arith.constant 1 : index
    %c0_23 = arith.constant 0 : index
    %19 = vector.load %arg7[%c0_21, %c4, %c1_22, %c0_23] : memref<1x10x10x128xf32, #tpu.memory_space<vmem>>, vector<1x1x8x128xf32>
    %20 = vector.shape_cast %19 : vector<1x1x8x128xf32> to vector<1x8x128xf32>
    %21 = vector.shape_cast %18 : vector<1x8x128xf32> to vector<1x1x8x128xf32>
    tpu.vector_store %arg7[%c0_21, %c4, %c1_22, %c0_23], %21 {strides = array<i32>} : memref<1x10x10x128xf32, #tpu.memory_space<vmem>>, vector<1x1x8x128xf32>,
    %c0_24 = arith.constant 0 : index
    %c32 = arith.constant 32 : index
    %c0_25 = arith.constant 0 : index
    %22 = vector.load %arg1[%c0_24, %c32, %c0_25] : memref<1x64x128xbf16, #tpu.memory_space<vmem>>, vector<1x8x128xbf16>
    %23 = arith.extf %22 : vector<1x8x128xbf16> to vector<1x8x128xf32>
    %c0_26 = arith.constant 0 : index
    %c5 = arith.constant 5 : index
    %c1_27 = arith.constant 1 : index
    %c0_28 = arith.constant 0 : index
    %24 = vector.load %arg7[%c0_26, %c5, %c1_27, %c0_28] : memref<1x10x10x128xf32, #tpu.memory_space<vmem>>, vector<1x1x8x128xf32>
    %25 = vector.shape_cast %24 : vector<1x1x8x128xf32> to vector<1x8x128xf32>
    %26 = vector.shape_cast %23 : vector<1x8x128xf32> to vector<1x1x8x128xf32>
    tpu.vector_store %arg7[%c0_26, %c5, %c1_27, %c0_28], %26 {strides = array<i32>} : memref<1x10x10x128xf32, #tpu.memory_space<vmem>>, vector<1x1x8x128xf32>,
    %c0_29 = arith.constant 0 : index
    %c40 = arith.constant 40 : index
    %c0_30 = arith.constant 0 : index
    %27 = vector.load %arg1[%c0_29, %c40, %c0_30] : memref<1x64x128xbf16, #tpu.memory_space<vmem>>, vector<1x8x128xbf16>
    %28 = arith.extf %27 : vector<1x8x128xbf16> to vector<1x8x128xf32>
    %c0_31 = arith.constant 0 : index
    %c6 = arith.constant 6 : index
    %c1_32 = arith.constant 1 : index
    %c0_33 = arith.constant 0 : index
    %29 = vector.load %arg7[%c0_31, %c6, %c1_32, %c0_33] : memref<1x10x10x128xf32, #tpu.memory_space<vmem>>, vector<1x1x8x128xf32>
    %30 = vector.shape_cast %29 : vector<1x1x8x128xf32> to vector<1x8x128xf32>
    %31 = vector.shape_cast %28 : vector<1x8x128xf32> to vector<1x1x8x128xf32>
    tpu.vector_store %arg7[%c0_31, %c6, %c1_32, %c0_33], %31 {strides = array<i32>} : memref<1x10x10x128xf32, #tpu.memory_space<vmem>>, vector<1x1x8x128xf32>,
    %c0_34 = arith.constant 0 : index
    %c48 = arith.constant 48 : index
    %c0_35 = arith.constant 0 : index
    %32 = vector.load %arg1[%c0_34, %c48, %c0_35] : memref<1x64x128xbf16, #tpu.memory_space<vmem>>, vector<1x8x128xbf16>
    %33 = arith.extf %32 : vector<1x8x128xbf16> to vector<1x8x128xf32>
    %c0_36 = arith.constant 0 : index
    %c7 = arith.constant 7 : index
    %c1_37 = arith.constant 1 : index
    %c0_38 = arith.constant 0 : index
    %34 = vector.load %arg7[%c0_36, %c7, %c1_37, %c0_38] : memref<1x10x10x128xf32, #tpu.memory_space<vmem>>, vector<1x1x8x128xf32>
    %35 = vector.shape_cast %34 : vector<1x1x8x128xf32> to vector<1x8x128xf32>
    %36 = vector.shape_cast %33 : vector<1x8x128xf32> to vector<1x1x8x128xf32>
    tpu.vector_store %arg7[%c0_36, %c7, %c1_37, %c0_38], %36 {strides = array<i32>} : memref<1x10x10x128xf32, #tpu.memory_space<vmem>>, vector<1x1x8x128xf32>,
    %c0_39 = arith.constant 0 : index
    %c56 = arith.constant 56 : index
    %c0_40 = arith.constant 0 : index
    %37 = vector.load %arg1[%c0_39, %c56, %c0_40] : memref<1x64x128xbf16, #tpu.memory_space<vmem>>, vector<1x8x128xbf16>
    %38 = arith.extf %37 : vector<1x8x128xbf16> to vector<1x8x128xf32>
    %c0_41 = arith.constant 0 : index
    %c8_42 = arith.constant 8 : index
    %c1_43 = arith.constant 1 : index
    %c0_44 = arith.constant 0 : index
    %39 = vector.load %arg7[%c0_41, %c8_42, %c1_43, %c0_44] : memref<1x10x10x128xf32, #tpu.memory_space<vmem>>, vector<1x1x8x128xf32>
    %40 = vector.shape_cast %39 : vector<1x1x8x128xf32> to vector<1x8x128xf32>
    %41 = vector.shape_cast %38 : vector<1x8x128xf32> to vector<1x1x8x128xf32>
    tpu.vector_store %arg7[%c0_41, %c8_42, %c1_43, %c0_44], %41 {strides = array<i32>} : memref<1x10x10x128xf32, #tpu.memory_space<vmem>>, vector<1x1x8x128xf32>,
    %c0_45 = arith.constant 0 : index
    %c0_46 = arith.constant 0 : index
    %c0_47 = arith.constant 0 : index
    %c0_48 = arith.constant 0 : index
    %42 = vector.load %arg7[%c0_45, %c0_46, %c0_47, %c0_48] : memref<1x10x10x128xf32, #tpu.memory_space<vmem>>, vector<1x8x8x128xf32>
    %c0_49 = arith.constant 0 : index
    %c0_50 = arith.constant 0 : index
    %c1_51 = arith.constant 1 : index
    %c0_52 = arith.constant 0 : index
    %43 = vector.load %arg7[%c0_49, %c0_50, %c1_51, %c0_52] : memref<1x10x10x128xf32, #tpu.memory_space<vmem>>, vector<1x8x8x128xf32>
    %c0_53 = arith.constant 0 : index
    %c0_54 = arith.constant 0 : index
    %c2_55 = arith.constant 2 : index
    %c0_56 = arith.constant 0 : index
    %44 = vector.load %arg7[%c0_53, %c0_54, %c2_55, %c0_56] : memref<1x10x10x128xf32, #tpu.memory_space<vmem>>, vector<1x8x8x128xf32>
    %c0_57 = arith.constant 0 : index
    %c1_58 = arith.constant 1 : index
    %c0_59 = arith.constant 0 : index
    %c0_60 = arith.constant 0 : index
    %45 = vector.load %arg7[%c0_57, %c1_58, %c0_59, %c0_60] : memref<1x10x10x128xf32, #tpu.memory_space<vmem>>, vector<1x8x8x128xf32>
    %c0_61 = arith.constant 0 : index
    %c1_62 = arith.constant 1 : index
    %c1_63 = arith.constant 1 : index
    %c0_64 = arith.constant 0 : index
    %46 = vector.load %arg7[%c0_61, %c1_62, %c1_63, %c0_64] : memref<1x10x10x128xf32, #tpu.memory_space<vmem>>, vector<1x8x8x128xf32>
    %c0_65 = arith.constant 0 : index
    %c1_66 = arith.constant 1 : index
    %c2_67 = arith.constant 2 : index
    %c0_68 = arith.constant 0 : index
    %47 = vector.load %arg7[%c0_65, %c1_66, %c2_67, %c0_68] : memref<1x10x10x128xf32, #tpu.memory_space<vmem>>, vector<1x8x8x128xf32>
    %c0_69 = arith.constant 0 : index
    %c2_70 = arith.constant 2 : index
    %c0_71 = arith.constant 0 : index
    %c0_72 = arith.constant 0 : index
    %48 = vector.load %arg7[%c0_69, %c2_70, %c0_71, %c0_72] : memref<1x10x10x128xf32, #tpu.memory_space<vmem>>, vector<1x8x8x128xf32>
    %c0_73 = arith.constant 0 : index
    %c2_74 = arith.constant 2 : index
    %c1_75 = arith.constant 1 : index
    %c0_76 = arith.constant 0 : index
    %49 = vector.load %arg7[%c0_73, %c2_74, %c1_75, %c0_76] : memref<1x10x10x128xf32, #tpu.memory_space<vmem>>, vector<1x8x8x128xf32>
    %c0_77 = arith.constant 0 : index
    %c2_78 = arith.constant 2 : index
    %c2_79 = arith.constant 2 : index
    %c0_80 = arith.constant 0 : index
    %50 = vector.load %arg7[%c0_77, %c2_78, %c2_79, %c0_80] : memref<1x10x10x128xf32, #tpu.memory_space<vmem>>, vector<1x8x8x128xf32>
    %cst_81 = arith.constant 0.000000e+00 : f32
    %51 = vector.broadcast %cst_81 : f32 to vector<1x8x8x128xf32>
    %c0_82 = arith.constant 0 : index
    %c0_83 = arith.constant 0 : index
    %c0_84 = arith.constant 0 : index
    %52 = vector.load %arg2[%c0_82, %c0_83, %c0_84] : memref<9x1x128xf32, #tpu.memory_space<vmem>>, vector<1x1x128xf32>
    %53 = vector.shape_cast %52 : vector<1x1x128xf32> to vector<1x128xf32>
    %54 = vector.shape_cast %53 : vector<1x128xf32> to vector<1x1x1x128xf32>
    %55 = vector.broadcast %54 : vector<1x1x1x128xf32> to vector<1x8x8x128xf32>
    %56 = arith.mulf %42, %55 : vector<1x8x8x128xf32>
    %57 = arith.addf %51, %56 : vector<1x8x8x128xf32>
    %c1_85 = arith.constant 1 : index
    %c0_86 = arith.constant 0 : index
    %c0_87 = arith.constant 0 : index
    %58 = vector.load %arg2[%c1_85, %c0_86, %c0_87] : memref<9x1x128xf32, #tpu.memory_space<vmem>>, vector<1x1x128xf32>
    %59 = vector.shape_cast %58 : vector<1x1x128xf32> to vector<1x128xf32>
    %60 = vector.shape_cast %59 : vector<1x128xf32> to vector<1x1x1x128xf32>
    %61 = vector.broadcast %60 : vector<1x1x1x128xf32> to vector<1x8x8x128xf32>
    %62 = arith.mulf %43, %61 : vector<1x8x8x128xf32>
    %63 = arith.addf %57, %62 : vector<1x8x8x128xf32>
    %c2_88 = arith.constant 2 : index
    %c0_89 = arith.constant 0 : index
    %c0_90 = arith.constant 0 : index
    %64 = vector.load %arg2[%c2_88, %c0_89, %c0_90] : memref<9x1x128xf32, #tpu.memory_space<vmem>>, vector<1x1x128xf32>
    %65 = vector.shape_cast %64 : vector<1x1x128xf32> to vector<1x128xf32>
    %66 = vector.shape_cast %65 : vector<1x128xf32> to vector<1x1x1x128xf32>
    %67 = vector.broadcast %66 : vector<1x1x1x128xf32> to vector<1x8x8x128xf32>
    %68 = arith.mulf %44, %67 : vector<1x8x8x128xf32>
    %69 = arith.addf %63, %68 : vector<1x8x8x128xf32>
    %c3_91 = arith.constant 3 : index
    %c0_92 = arith.constant 0 : index
    %c0_93 = arith.constant 0 : index
    %70 = vector.load %arg2[%c3_91, %c0_92, %c0_93] : memref<9x1x128xf32, #tpu.memory_space<vmem>>, vector<1x1x128xf32>
    %71 = vector.shape_cast %70 : vector<1x1x128xf32> to vector<1x128xf32>
    %72 = vector.shape_cast %71 : vector<1x128xf32> to vector<1x1x1x128xf32>
    %73 = vector.broadcast %72 : vector<1x1x1x128xf32> to vector<1x8x8x128xf32>
    %74 = arith.mulf %45, %73 : vector<1x8x8x128xf32>
    %75 = arith.addf %69, %74 : vector<1x8x8x128xf32>
    %c4_94 = arith.constant 4 : index
    %c0_95 = arith.constant 0 : index
    %c0_96 = arith.constant 0 : index
    %76 = vector.load %arg2[%c4_94, %c0_95, %c0_96] : memref<9x1x128xf32, #tpu.memory_space<vmem>>, vector<1x1x128xf32>
    %77 = vector.shape_cast %76 : vector<1x1x128xf32> to vector<1x128xf32>
    %78 = vector.shape_cast %77 : vector<1x128xf32> to vector<1x1x1x128xf32>
    %79 = vector.broadcast %78 : vector<1x1x1x128xf32> to vector<1x8x8x128xf32>
    %80 = arith.mulf %46, %79 : vector<1x8x8x128xf32>
    %81 = arith.addf %75, %80 : vector<1x8x8x128xf32>
    %c5_97 = arith.constant 5 : index
    %c0_98 = arith.constant 0 : index
    %c0_99 = arith.constant 0 : index
    %82 = vector.load %arg2[%c5_97, %c0_98, %c0_99] : memref<9x1x128xf32, #tpu.memory_space<vmem>>, vector<1x1x128xf32>
    %83 = vector.shape_cast %82 : vector<1x1x128xf32> to vector<1x128xf32>
    %84 = vector.shape_cast %83 : vector<1x128xf32> to vector<1x1x1x128xf32>
    %85 = vector.broadcast %84 : vector<1x1x1x128xf32> to vector<1x8x8x128xf32>
    %86 = arith.mulf %47, %85 : vector<1x8x8x128xf32>
    %87 = arith.addf %81, %86 : vector<1x8x8x128xf32>
    %c6_100 = arith.constant 6 : index
    %c0_101 = arith.constant 0 : index
    %c0_102 = arith.constant 0 : index
    %88 = vector.load %arg2[%c6_100, %c0_101, %c0_102] : memref<9x1x128xf32, #tpu.memory_space<vmem>>, vector<1x1x128xf32>
    %89 = vector.shape_cast %88 : vector<1x1x128xf32> to vector<1x128xf32>
    %90 = vector.shape_cast %89 : vector<1x128xf32> to vector<1x1x1x128xf32>
    %91 = vector.broadcast %90 : vector<1x1x1x128xf32> to vector<1x8x8x128xf32>
    %92 = arith.mulf %48, %91 : vector<1x8x8x128xf32>
    %93 = arith.addf %87, %92 : vector<1x8x8x128xf32>
    %c7_103 = arith.constant 7 : index
    %c0_104 = arith.constant 0 : index
    %c0_105 = arith.constant 0 : index
    %94 = vector.load %arg2[%c7_103, %c0_104, %c0_105] : memref<9x1x128xf32, #tpu.memory_space<vmem>>, vector<1x1x128xf32>
    %95 = vector.shape_cast %94 : vector<1x1x128xf32> to vector<1x128xf32>
    %96 = vector.shape_cast %95 : vector<1x128xf32> to vector<1x1x1x128xf32>
    %97 = vector.broadcast %96 : vector<1x1x1x128xf32> to vector<1x8x8x128xf32>
    %98 = arith.mulf %49, %97 : vector<1x8x8x128xf32>
    %99 = arith.addf %93, %98 : vector<1x8x8x128xf32>
    %c8_106 = arith.constant 8 : index
    %c0_107 = arith.constant 0 : index
    %c0_108 = arith.constant 0 : index
    %100 = vector.load %arg2[%c8_106, %c0_107, %c0_108] : memref<9x1x128xf32, #tpu.memory_space<vmem>>, vector<1x1x128xf32>
    %101 = vector.shape_cast %100 : vector<1x1x128xf32> to vector<1x128xf32>
    %102 = vector.shape_cast %101 : vector<1x128xf32> to vector<1x1x1x128xf32>
    %103 = vector.broadcast %102 : vector<1x1x1x128xf32> to vector<1x8x8x128xf32>
    %104 = arith.mulf %50, %103 : vector<1x8x8x128xf32>
    %105 = arith.addf %99, %104 : vector<1x8x8x128xf32>
    %c0_109 = arith.constant 0 : index
    %c0_110 = arith.constant 0 : index
    %106 = vector.load %arg3[%c0_109, %c0_110] : memref<1x128xf32, #tpu.memory_space<vmem>>, vector<1x128xf32>
    %107 = vector.shape_cast %106 : vector<1x128xf32> to vector<1x1x1x128xf32>
    %108 = vector.broadcast %107 : vector<1x1x1x128xf32> to vector<1x8x8x128xf32>
    %109 = arith.addf %105, %108 : vector<1x8x8x128xf32>
    %cst_111 = arith.constant 0.000000e+00 : f32
    %110 = vector.broadcast %cst_111 : f32 to vector<1x8x8x128xf32>
    %111 = arith.maximumf %109, %110 : vector<1x8x8x128xf32>
    %112 = vector.shape_cast %111 : vector<1x8x8x128xf32> to vector<64x128xf32>
    %113 = arith.truncf %112 : vector<64x128xf32> to vector<64x128xbf16>
    %c0_112 = arith.constant 0 : index
    %c0_113 = arith.constant 0 : index
    %114 = vector.load %arg4[%c0_112, %c0_113] : memref<128x128xbf16, #tpu.memory_space<vmem>>, vector<128x128xbf16>
    %cst_114 = arith.constant dense<0.000000e+00> : vector<64x128xf32>
    %115 = tpu.matmul %113, %114, %cst_114 {dimension_numbers = #tpu.dot_dimension_numbers<[1], [0], [0], [1], [0, 0, 1, 1], [], []>} : vector<64x128xbf16>, vector<128x128xbf16>, vector<64x128xf32> -> vector<64x128xf32>
    %c0_115 = arith.constant 0 : index
    %c0_116 = arith.constant 0 : index
    %116 = vector.load %arg5[%c0_115, %c0_116] : memref<1x128xf32, #tpu.memory_space<vmem>>, vector<1x128xf32>
    %117 = vector.broadcast %116 : vector<1x128xf32> to vector<64x128xf32>
    %118 = arith.addf %115, %117 : vector<64x128xf32>
    %cst_117 = arith.constant 0.000000e+00 : f32
    %119 = vector.broadcast %cst_117 : f32 to vector<64x128xf32>
    %120 = arith.maximumf %118, %119 : vector<64x128xf32>
    %121 = arith.truncf %120 : vector<64x128xf32> to vector<64x128xbf16>
    %c0_118 = arith.constant 0 : index
    %c0_119 = arith.constant 0 : index
    %c0_120 = arith.constant 0 : index
    %122 = vector.load %arg6[%c0_118, %c0_119, %c0_120] : memref<1x64x128xbf16, #tpu.memory_space<vmem>>, vector<1x64x128xbf16>
    %123 = vector.shape_cast %122 : vector<1x64x128xbf16> to vector<64x128xbf16>
    %124 = vector.shape_cast %121 : vector<64x128xbf16> to vector<1x64x128xbf16>
    tpu.vector_store %arg6[%c0_118, %c0_119, %c0_120], %124 {strides = array<i32>} : memref<1x64x128xbf16, #tpu.memory_space<vmem>>, vector<1x64x128xbf16>,
    return
  }
  func.func @transform_0(%arg0: i32) -> (i32, i32, i32) {
    %c0_i32 = arith.constant 0 : i32
    %c0_i32_0 = arith.constant 0 : i32
    %c0_i32_1 = arith.constant 0 : i32
    return %arg0, %c0_i32, %c0_i32_0 : i32, i32, i32
  }
  func.func @transform_1(%arg0: i32) -> (i32, i32, i32) {
    %c0_i32 = arith.constant 0 : i32
    %c0_i32_0 = arith.constant 0 : i32
    %c0_i32_1 = arith.constant 0 : i32
    %c0_i32_2 = arith.constant 0 : i32
    return %c0_i32, %c0_i32_0, %c0_i32_1 : i32, i32, i32
  }
  func.func @transform_2(%arg0: i32) -> (i32, i32) {
    %c0_i32 = arith.constant 0 : i32
    %c0_i32_0 = arith.constant 0 : i32
    %c0_i32_1 = arith.constant 0 : i32
    return %c0_i32, %c0_i32_0 : i32, i32
  }
  func.func @transform_3(%arg0: i32) -> (i32, i32) {
    %c0_i32 = arith.constant 0 : i32
    %c0_i32_0 = arith.constant 0 : i32
    %c0_i32_1 = arith.constant 0 : i32
    return %c0_i32, %c0_i32_0 : i32, i32
  }
  func.func @transform_4(%arg0: i32) -> (i32, i32) {
    %c0_i32 = arith.constant 0 : i32
    %c0_i32_0 = arith.constant 0 : i32
    %c0_i32_1 = arith.constant 0 : i32
    return %c0_i32, %c0_i32_0 : i32, i32
  }
  func.func @transform_5(%arg0: i32) -> (i32, i32, i32) {
    %c0_i32 = arith.constant 0 : i32
    %c0_i32_0 = arith.constant 0 : i32
    %c0_i32_1 = arith.constant 0 : i32
    return %arg0, %c0_i32, %c0_i32_0 : i32, i32, i32
  }
}

module attributes {stable_mosaic.version = 11 : i64} {
  func.func @_dw_s1_kernel(%arg0: i32, %arg1: memref<1x16x128xbf16, #tpu.memory_space<vmem>>, %arg2: memref<9x1x128xf32, #tpu.memory_space<vmem>>, %arg3: memref<1x128xf32, #tpu.memory_space<vmem>>, %arg4: memref<128x128xbf16, #tpu.memory_space<vmem>>, %arg5: memref<1x128xf32, #tpu.memory_space<vmem>>, %arg6: memref<1x16x128xbf16, #tpu.memory_space<vmem>>, %arg7: memref<1x6x6x128xf32, #tpu.memory_space<vmem>>) attributes {dimension_semantics = [#tpu.dimension_semantics<parallel>], iteration_bounds = array<i64: 2>, scalar_prefetch = 0 : i64, scratch_operands = 1 : i64, tpu.core_type = #tpu.core_type<tc>, window_params = [{transform_indices = @transform_0, window_bounds = array<i64: 1, 16, 128>}, {pipeline_mode = #tpu.pipeline_mode<synchronous>, transform_indices = @transform_1, window_bounds = array<i64: 9, 1, 128>}, {pipeline_mode = #tpu.pipeline_mode<synchronous>, transform_indices = @transform_2, window_bounds = array<i64: 1, 128>}, {pipeline_mode = #tpu.pipeline_mode<synchronous>, transform_indices = @transform_3, window_bounds = array<i64: 128, 128>}, {pipeline_mode = #tpu.pipeline_mode<synchronous>, transform_indices = @transform_4, window_bounds = array<i64: 1, 128>}, {transform_indices = @transform_5, window_bounds = array<i64: 1, 16, 128>}]} {
    %cst = arith.constant 0.000000e+00 : f32
    %0 = vector.broadcast %cst : f32 to vector<1x6x6x128xf32>
    %c0 = arith.constant 0 : index
    %c0_0 = arith.constant 0 : index
    %c0_1 = arith.constant 0 : index
    %c0_2 = arith.constant 0 : index
    %1 = vector.load %arg7[%c0, %c0_0, %c0_1, %c0_2] : memref<1x6x6x128xf32, #tpu.memory_space<vmem>>, vector<1x6x6x128xf32>
    tpu.vector_store %arg7[%c0, %c0_0, %c0_1, %c0_2], %0 {strides = array<i32>} : memref<1x6x6x128xf32, #tpu.memory_space<vmem>>, vector<1x6x6x128xf32>,
    %c0_3 = arith.constant 0 : index
    %c0_4 = arith.constant 0 : index
    %c0_5 = arith.constant 0 : index
    %2 = vector.load %arg1[%c0_3, %c0_4, %c0_5] : memref<1x16x128xbf16, #tpu.memory_space<vmem>>, vector<1x4x128xbf16>
    %3 = arith.extf %2 : vector<1x4x128xbf16> to vector<1x4x128xf32>
    %c0_6 = arith.constant 0 : index
    %c1 = arith.constant 1 : index
    %c1_7 = arith.constant 1 : index
    %c0_8 = arith.constant 0 : index
    %4 = vector.load %arg7[%c0_6, %c1, %c1_7, %c0_8] : memref<1x6x6x128xf32, #tpu.memory_space<vmem>>, vector<1x1x4x128xf32>
    %5 = vector.shape_cast %4 : vector<1x1x4x128xf32> to vector<1x4x128xf32>
    %6 = vector.shape_cast %3 : vector<1x4x128xf32> to vector<1x1x4x128xf32>
    tpu.vector_store %arg7[%c0_6, %c1, %c1_7, %c0_8], %6 {strides = array<i32>} : memref<1x6x6x128xf32, #tpu.memory_space<vmem>>, vector<1x1x4x128xf32>,
    %c0_9 = arith.constant 0 : index
    %c4 = arith.constant 4 : index
    %c0_10 = arith.constant 0 : index
    %7 = vector.load %arg1[%c0_9, %c4, %c0_10] : memref<1x16x128xbf16, #tpu.memory_space<vmem>>, vector<1x4x128xbf16>
    %8 = arith.extf %7 : vector<1x4x128xbf16> to vector<1x4x128xf32>
    %c0_11 = arith.constant 0 : index
    %c2 = arith.constant 2 : index
    %c1_12 = arith.constant 1 : index
    %c0_13 = arith.constant 0 : index
    %9 = vector.load %arg7[%c0_11, %c2, %c1_12, %c0_13] : memref<1x6x6x128xf32, #tpu.memory_space<vmem>>, vector<1x1x4x128xf32>
    %10 = vector.shape_cast %9 : vector<1x1x4x128xf32> to vector<1x4x128xf32>
    %11 = vector.shape_cast %8 : vector<1x4x128xf32> to vector<1x1x4x128xf32>
    tpu.vector_store %arg7[%c0_11, %c2, %c1_12, %c0_13], %11 {strides = array<i32>} : memref<1x6x6x128xf32, #tpu.memory_space<vmem>>, vector<1x1x4x128xf32>,
    %c0_14 = arith.constant 0 : index
    %c8 = arith.constant 8 : index
    %c0_15 = arith.constant 0 : index
    %12 = vector.load %arg1[%c0_14, %c8, %c0_15] : memref<1x16x128xbf16, #tpu.memory_space<vmem>>, vector<1x4x128xbf16>
    %13 = arith.extf %12 : vector<1x4x128xbf16> to vector<1x4x128xf32>
    %c0_16 = arith.constant 0 : index
    %c3 = arith.constant 3 : index
    %c1_17 = arith.constant 1 : index
    %c0_18 = arith.constant 0 : index
    %14 = vector.load %arg7[%c0_16, %c3, %c1_17, %c0_18] : memref<1x6x6x128xf32, #tpu.memory_space<vmem>>, vector<1x1x4x128xf32>
    %15 = vector.shape_cast %14 : vector<1x1x4x128xf32> to vector<1x4x128xf32>
    %16 = vector.shape_cast %13 : vector<1x4x128xf32> to vector<1x1x4x128xf32>
    tpu.vector_store %arg7[%c0_16, %c3, %c1_17, %c0_18], %16 {strides = array<i32>} : memref<1x6x6x128xf32, #tpu.memory_space<vmem>>, vector<1x1x4x128xf32>,
    %c0_19 = arith.constant 0 : index
    %c12 = arith.constant 12 : index
    %c0_20 = arith.constant 0 : index
    %17 = vector.load %arg1[%c0_19, %c12, %c0_20] : memref<1x16x128xbf16, #tpu.memory_space<vmem>>, vector<1x4x128xbf16>
    %18 = arith.extf %17 : vector<1x4x128xbf16> to vector<1x4x128xf32>
    %c0_21 = arith.constant 0 : index
    %c4_22 = arith.constant 4 : index
    %c1_23 = arith.constant 1 : index
    %c0_24 = arith.constant 0 : index
    %19 = vector.load %arg7[%c0_21, %c4_22, %c1_23, %c0_24] : memref<1x6x6x128xf32, #tpu.memory_space<vmem>>, vector<1x1x4x128xf32>
    %20 = vector.shape_cast %19 : vector<1x1x4x128xf32> to vector<1x4x128xf32>
    %21 = vector.shape_cast %18 : vector<1x4x128xf32> to vector<1x1x4x128xf32>
    tpu.vector_store %arg7[%c0_21, %c4_22, %c1_23, %c0_24], %21 {strides = array<i32>} : memref<1x6x6x128xf32, #tpu.memory_space<vmem>>, vector<1x1x4x128xf32>,
    %c0_25 = arith.constant 0 : index
    %c0_26 = arith.constant 0 : index
    %c0_27 = arith.constant 0 : index
    %c0_28 = arith.constant 0 : index
    %22 = vector.load %arg7[%c0_25, %c0_26, %c0_27, %c0_28] : memref<1x6x6x128xf32, #tpu.memory_space<vmem>>, vector<1x4x4x128xf32>
    %c0_29 = arith.constant 0 : index
    %c0_30 = arith.constant 0 : index
    %c1_31 = arith.constant 1 : index
    %c0_32 = arith.constant 0 : index
    %23 = vector.load %arg7[%c0_29, %c0_30, %c1_31, %c0_32] : memref<1x6x6x128xf32, #tpu.memory_space<vmem>>, vector<1x4x4x128xf32>
    %c0_33 = arith.constant 0 : index
    %c0_34 = arith.constant 0 : index
    %c2_35 = arith.constant 2 : index
    %c0_36 = arith.constant 0 : index
    %24 = vector.load %arg7[%c0_33, %c0_34, %c2_35, %c0_36] : memref<1x6x6x128xf32, #tpu.memory_space<vmem>>, vector<1x4x4x128xf32>
    %c0_37 = arith.constant 0 : index
    %c1_38 = arith.constant 1 : index
    %c0_39 = arith.constant 0 : index
    %c0_40 = arith.constant 0 : index
    %25 = vector.load %arg7[%c0_37, %c1_38, %c0_39, %c0_40] : memref<1x6x6x128xf32, #tpu.memory_space<vmem>>, vector<1x4x4x128xf32>
    %c0_41 = arith.constant 0 : index
    %c1_42 = arith.constant 1 : index
    %c1_43 = arith.constant 1 : index
    %c0_44 = arith.constant 0 : index
    %26 = vector.load %arg7[%c0_41, %c1_42, %c1_43, %c0_44] : memref<1x6x6x128xf32, #tpu.memory_space<vmem>>, vector<1x4x4x128xf32>
    %c0_45 = arith.constant 0 : index
    %c1_46 = arith.constant 1 : index
    %c2_47 = arith.constant 2 : index
    %c0_48 = arith.constant 0 : index
    %27 = vector.load %arg7[%c0_45, %c1_46, %c2_47, %c0_48] : memref<1x6x6x128xf32, #tpu.memory_space<vmem>>, vector<1x4x4x128xf32>
    %c0_49 = arith.constant 0 : index
    %c2_50 = arith.constant 2 : index
    %c0_51 = arith.constant 0 : index
    %c0_52 = arith.constant 0 : index
    %28 = vector.load %arg7[%c0_49, %c2_50, %c0_51, %c0_52] : memref<1x6x6x128xf32, #tpu.memory_space<vmem>>, vector<1x4x4x128xf32>
    %c0_53 = arith.constant 0 : index
    %c2_54 = arith.constant 2 : index
    %c1_55 = arith.constant 1 : index
    %c0_56 = arith.constant 0 : index
    %29 = vector.load %arg7[%c0_53, %c2_54, %c1_55, %c0_56] : memref<1x6x6x128xf32, #tpu.memory_space<vmem>>, vector<1x4x4x128xf32>
    %c0_57 = arith.constant 0 : index
    %c2_58 = arith.constant 2 : index
    %c2_59 = arith.constant 2 : index
    %c0_60 = arith.constant 0 : index
    %30 = vector.load %arg7[%c0_57, %c2_58, %c2_59, %c0_60] : memref<1x6x6x128xf32, #tpu.memory_space<vmem>>, vector<1x4x4x128xf32>
    %cst_61 = arith.constant 0.000000e+00 : f32
    %31 = vector.broadcast %cst_61 : f32 to vector<1x4x4x128xf32>
    %c0_62 = arith.constant 0 : index
    %c0_63 = arith.constant 0 : index
    %c0_64 = arith.constant 0 : index
    %32 = vector.load %arg2[%c0_62, %c0_63, %c0_64] : memref<9x1x128xf32, #tpu.memory_space<vmem>>, vector<1x1x128xf32>
    %33 = vector.shape_cast %32 : vector<1x1x128xf32> to vector<1x128xf32>
    %34 = vector.shape_cast %33 : vector<1x128xf32> to vector<1x1x1x128xf32>
    %35 = vector.broadcast %34 : vector<1x1x1x128xf32> to vector<1x4x4x128xf32>
    %36 = arith.mulf %22, %35 : vector<1x4x4x128xf32>
    %37 = arith.addf %31, %36 : vector<1x4x4x128xf32>
    %c1_65 = arith.constant 1 : index
    %c0_66 = arith.constant 0 : index
    %c0_67 = arith.constant 0 : index
    %38 = vector.load %arg2[%c1_65, %c0_66, %c0_67] : memref<9x1x128xf32, #tpu.memory_space<vmem>>, vector<1x1x128xf32>
    %39 = vector.shape_cast %38 : vector<1x1x128xf32> to vector<1x128xf32>
    %40 = vector.shape_cast %39 : vector<1x128xf32> to vector<1x1x1x128xf32>
    %41 = vector.broadcast %40 : vector<1x1x1x128xf32> to vector<1x4x4x128xf32>
    %42 = arith.mulf %23, %41 : vector<1x4x4x128xf32>
    %43 = arith.addf %37, %42 : vector<1x4x4x128xf32>
    %c2_68 = arith.constant 2 : index
    %c0_69 = arith.constant 0 : index
    %c0_70 = arith.constant 0 : index
    %44 = vector.load %arg2[%c2_68, %c0_69, %c0_70] : memref<9x1x128xf32, #tpu.memory_space<vmem>>, vector<1x1x128xf32>
    %45 = vector.shape_cast %44 : vector<1x1x128xf32> to vector<1x128xf32>
    %46 = vector.shape_cast %45 : vector<1x128xf32> to vector<1x1x1x128xf32>
    %47 = vector.broadcast %46 : vector<1x1x1x128xf32> to vector<1x4x4x128xf32>
    %48 = arith.mulf %24, %47 : vector<1x4x4x128xf32>
    %49 = arith.addf %43, %48 : vector<1x4x4x128xf32>
    %c3_71 = arith.constant 3 : index
    %c0_72 = arith.constant 0 : index
    %c0_73 = arith.constant 0 : index
    %50 = vector.load %arg2[%c3_71, %c0_72, %c0_73] : memref<9x1x128xf32, #tpu.memory_space<vmem>>, vector<1x1x128xf32>
    %51 = vector.shape_cast %50 : vector<1x1x128xf32> to vector<1x128xf32>
    %52 = vector.shape_cast %51 : vector<1x128xf32> to vector<1x1x1x128xf32>
    %53 = vector.broadcast %52 : vector<1x1x1x128xf32> to vector<1x4x4x128xf32>
    %54 = arith.mulf %25, %53 : vector<1x4x4x128xf32>
    %55 = arith.addf %49, %54 : vector<1x4x4x128xf32>
    %c4_74 = arith.constant 4 : index
    %c0_75 = arith.constant 0 : index
    %c0_76 = arith.constant 0 : index
    %56 = vector.load %arg2[%c4_74, %c0_75, %c0_76] : memref<9x1x128xf32, #tpu.memory_space<vmem>>, vector<1x1x128xf32>
    %57 = vector.shape_cast %56 : vector<1x1x128xf32> to vector<1x128xf32>
    %58 = vector.shape_cast %57 : vector<1x128xf32> to vector<1x1x1x128xf32>
    %59 = vector.broadcast %58 : vector<1x1x1x128xf32> to vector<1x4x4x128xf32>
    %60 = arith.mulf %26, %59 : vector<1x4x4x128xf32>
    %61 = arith.addf %55, %60 : vector<1x4x4x128xf32>
    %c5 = arith.constant 5 : index
    %c0_77 = arith.constant 0 : index
    %c0_78 = arith.constant 0 : index
    %62 = vector.load %arg2[%c5, %c0_77, %c0_78] : memref<9x1x128xf32, #tpu.memory_space<vmem>>, vector<1x1x128xf32>
    %63 = vector.shape_cast %62 : vector<1x1x128xf32> to vector<1x128xf32>
    %64 = vector.shape_cast %63 : vector<1x128xf32> to vector<1x1x1x128xf32>
    %65 = vector.broadcast %64 : vector<1x1x1x128xf32> to vector<1x4x4x128xf32>
    %66 = arith.mulf %27, %65 : vector<1x4x4x128xf32>
    %67 = arith.addf %61, %66 : vector<1x4x4x128xf32>
    %c6 = arith.constant 6 : index
    %c0_79 = arith.constant 0 : index
    %c0_80 = arith.constant 0 : index
    %68 = vector.load %arg2[%c6, %c0_79, %c0_80] : memref<9x1x128xf32, #tpu.memory_space<vmem>>, vector<1x1x128xf32>
    %69 = vector.shape_cast %68 : vector<1x1x128xf32> to vector<1x128xf32>
    %70 = vector.shape_cast %69 : vector<1x128xf32> to vector<1x1x1x128xf32>
    %71 = vector.broadcast %70 : vector<1x1x1x128xf32> to vector<1x4x4x128xf32>
    %72 = arith.mulf %28, %71 : vector<1x4x4x128xf32>
    %73 = arith.addf %67, %72 : vector<1x4x4x128xf32>
    %c7 = arith.constant 7 : index
    %c0_81 = arith.constant 0 : index
    %c0_82 = arith.constant 0 : index
    %74 = vector.load %arg2[%c7, %c0_81, %c0_82] : memref<9x1x128xf32, #tpu.memory_space<vmem>>, vector<1x1x128xf32>
    %75 = vector.shape_cast %74 : vector<1x1x128xf32> to vector<1x128xf32>
    %76 = vector.shape_cast %75 : vector<1x128xf32> to vector<1x1x1x128xf32>
    %77 = vector.broadcast %76 : vector<1x1x1x128xf32> to vector<1x4x4x128xf32>
    %78 = arith.mulf %29, %77 : vector<1x4x4x128xf32>
    %79 = arith.addf %73, %78 : vector<1x4x4x128xf32>
    %c8_83 = arith.constant 8 : index
    %c0_84 = arith.constant 0 : index
    %c0_85 = arith.constant 0 : index
    %80 = vector.load %arg2[%c8_83, %c0_84, %c0_85] : memref<9x1x128xf32, #tpu.memory_space<vmem>>, vector<1x1x128xf32>
    %81 = vector.shape_cast %80 : vector<1x1x128xf32> to vector<1x128xf32>
    %82 = vector.shape_cast %81 : vector<1x128xf32> to vector<1x1x1x128xf32>
    %83 = vector.broadcast %82 : vector<1x1x1x128xf32> to vector<1x4x4x128xf32>
    %84 = arith.mulf %30, %83 : vector<1x4x4x128xf32>
    %85 = arith.addf %79, %84 : vector<1x4x4x128xf32>
    %c0_86 = arith.constant 0 : index
    %c0_87 = arith.constant 0 : index
    %86 = vector.load %arg3[%c0_86, %c0_87] : memref<1x128xf32, #tpu.memory_space<vmem>>, vector<1x128xf32>
    %87 = vector.shape_cast %86 : vector<1x128xf32> to vector<1x1x1x128xf32>
    %88 = vector.broadcast %87 : vector<1x1x1x128xf32> to vector<1x4x4x128xf32>
    %89 = arith.addf %85, %88 : vector<1x4x4x128xf32>
    %cst_88 = arith.constant 0.000000e+00 : f32
    %90 = vector.broadcast %cst_88 : f32 to vector<1x4x4x128xf32>
    %91 = arith.maximumf %89, %90 : vector<1x4x4x128xf32>
    %92 = vector.shape_cast %91 : vector<1x4x4x128xf32> to vector<16x128xf32>
    %93 = arith.truncf %92 : vector<16x128xf32> to vector<16x128xbf16>
    %c0_89 = arith.constant 0 : index
    %c0_90 = arith.constant 0 : index
    %94 = vector.load %arg4[%c0_89, %c0_90] : memref<128x128xbf16, #tpu.memory_space<vmem>>, vector<128x128xbf16>
    %cst_91 = arith.constant dense<0.000000e+00> : vector<16x128xf32>
    %95 = tpu.matmul %93, %94, %cst_91 {dimension_numbers = #tpu.dot_dimension_numbers<[1], [0], [0], [1], [0, 0, 1, 1], [], []>} : vector<16x128xbf16>, vector<128x128xbf16>, vector<16x128xf32> -> vector<16x128xf32>
    %c0_92 = arith.constant 0 : index
    %c0_93 = arith.constant 0 : index
    %96 = vector.load %arg5[%c0_92, %c0_93] : memref<1x128xf32, #tpu.memory_space<vmem>>, vector<1x128xf32>
    %97 = vector.broadcast %96 : vector<1x128xf32> to vector<16x128xf32>
    %98 = arith.addf %95, %97 : vector<16x128xf32>
    %cst_94 = arith.constant 0.000000e+00 : f32
    %99 = vector.broadcast %cst_94 : f32 to vector<16x128xf32>
    %100 = arith.maximumf %98, %99 : vector<16x128xf32>
    %101 = arith.truncf %100 : vector<16x128xf32> to vector<16x128xbf16>
    %c0_95 = arith.constant 0 : index
    %c0_96 = arith.constant 0 : index
    %c0_97 = arith.constant 0 : index
    %102 = vector.load %arg6[%c0_95, %c0_96, %c0_97] : memref<1x16x128xbf16, #tpu.memory_space<vmem>>, vector<1x16x128xbf16>
    %103 = vector.shape_cast %102 : vector<1x16x128xbf16> to vector<16x128xbf16>
    %104 = vector.shape_cast %101 : vector<16x128xbf16> to vector<1x16x128xbf16>
    tpu.vector_store %arg6[%c0_95, %c0_96, %c0_97], %104 {strides = array<i32>} : memref<1x16x128xbf16, #tpu.memory_space<vmem>>, vector<1x16x128xbf16>,
    return
  }
  func.func @transform_0(%arg0: i32) -> (i32, i32, i32) {
    %c0_i32 = arith.constant 0 : i32
    %c0_i32_0 = arith.constant 0 : i32
    %c0_i32_1 = arith.constant 0 : i32
    return %arg0, %c0_i32, %c0_i32_0 : i32, i32, i32
  }
  func.func @transform_1(%arg0: i32) -> (i32, i32, i32) {
    %c0_i32 = arith.constant 0 : i32
    %c0_i32_0 = arith.constant 0 : i32
    %c0_i32_1 = arith.constant 0 : i32
    %c0_i32_2 = arith.constant 0 : i32
    return %c0_i32, %c0_i32_0, %c0_i32_1 : i32, i32, i32
  }
  func.func @transform_2(%arg0: i32) -> (i32, i32) {
    %c0_i32 = arith.constant 0 : i32
    %c0_i32_0 = arith.constant 0 : i32
    %c0_i32_1 = arith.constant 0 : i32
    return %c0_i32, %c0_i32_0 : i32, i32
  }
  func.func @transform_3(%arg0: i32) -> (i32, i32) {
    %c0_i32 = arith.constant 0 : i32
    %c0_i32_0 = arith.constant 0 : i32
    %c0_i32_1 = arith.constant 0 : i32
    return %c0_i32, %c0_i32_0 : i32, i32
  }
  func.func @transform_4(%arg0: i32) -> (i32, i32) {
    %c0_i32 = arith.constant 0 : i32
    %c0_i32_0 = arith.constant 0 : i32
    %c0_i32_1 = arith.constant 0 : i32
    return %c0_i32, %c0_i32_0 : i32, i32
  }
  func.func @transform_5(%arg0: i32) -> (i32, i32, i32) {
    %c0_i32 = arith.constant 0 : i32
    %c0_i32_0 = arith.constant 0 : i32
    %c0_i32_1 = arith.constant 0 : i32
    return %arg0, %c0_i32, %c0_i32_0 : i32, i32, i32
  }
}

module attributes {stable_mosaic.version = 11 : i64} {
  func.func @_dw_ph_kernel(%arg0: i32, %arg1: memref<1x20x5x128xbf16, #tpu.memory_space<vmem>>, %arg2: memref<9x1x128xf32, #tpu.memory_space<vmem>>, %arg3: memref<1x128xf32, #tpu.memory_space<vmem>>, %arg4: memref<128x128xbf16, #tpu.memory_space<vmem>>, %arg5: memref<1x128xf32, #tpu.memory_space<vmem>>, %arg6: memref<1x16x128xbf16, #tpu.memory_space<vmem>>) attributes {dimension_semantics = [#tpu.dimension_semantics<parallel>], iteration_bounds = array<i64: 2>, scalar_prefetch = 0 : i64, scratch_operands = 0 : i64, tpu.core_type = #tpu.core_type<tc>, window_params = [{transform_indices = @transform_0, window_bounds = array<i64: 1, 20, 5, 128>}, {pipeline_mode = #tpu.pipeline_mode<synchronous>, transform_indices = @transform_1, window_bounds = array<i64: 9, 1, 128>}, {pipeline_mode = #tpu.pipeline_mode<synchronous>, transform_indices = @transform_2, window_bounds = array<i64: 1, 128>}, {pipeline_mode = #tpu.pipeline_mode<synchronous>, transform_indices = @transform_3, window_bounds = array<i64: 128, 128>}, {pipeline_mode = #tpu.pipeline_mode<synchronous>, transform_indices = @transform_4, window_bounds = array<i64: 1, 128>}, {transform_indices = @transform_5, window_bounds = array<i64: 1, 16, 128>}]} {
    %c0 = arith.constant 0 : index
    %c0_0 = arith.constant 0 : index
    %c0_1 = arith.constant 0 : index
    %c0_2 = arith.constant 0 : index
    %0 = vector.load %arg1[%c0, %c0_0, %c0_1, %c0_2] : memref<1x20x5x128xbf16, #tpu.memory_space<vmem>>, vector<1x20x5x128xbf16>
    %1 = arith.extf %0 : vector<1x20x5x128xbf16> to vector<1x20x5x128xf32>
    %2 = vector.extract_strided_slice %1 {offsets = [0, 0, 0, 0], sizes = [1, 4, 4, 128], strides = [1, 1, 1, 1]} : vector<1x20x5x128xf32> to vector<1x4x4x128xf32>
    %3 = vector.extract_strided_slice %1 {offsets = [0, 5, 0, 0], sizes = [1, 4, 4, 128], strides = [1, 1, 1, 1]} : vector<1x20x5x128xf32> to vector<1x4x4x128xf32>
    %4 = vector.extract_strided_slice %1 {offsets = [0, 0, 1, 0], sizes = [1, 4, 4, 128], strides = [1, 1, 1, 1]} : vector<1x20x5x128xf32> to vector<1x4x4x128xf32>
    %5 = vector.extract_strided_slice %1 {offsets = [0, 10, 0, 0], sizes = [1, 4, 4, 128], strides = [1, 1, 1, 1]} : vector<1x20x5x128xf32> to vector<1x4x4x128xf32>
    %6 = vector.extract_strided_slice %1 {offsets = [0, 15, 0, 0], sizes = [1, 4, 4, 128], strides = [1, 1, 1, 1]} : vector<1x20x5x128xf32> to vector<1x4x4x128xf32>
    %7 = vector.extract_strided_slice %1 {offsets = [0, 10, 1, 0], sizes = [1, 4, 4, 128], strides = [1, 1, 1, 1]} : vector<1x20x5x128xf32> to vector<1x4x4x128xf32>
    %8 = vector.extract_strided_slice %1 {offsets = [0, 1, 0, 0], sizes = [1, 4, 4, 128], strides = [1, 1, 1, 1]} : vector<1x20x5x128xf32> to vector<1x4x4x128xf32>
    %9 = vector.extract_strided_slice %1 {offsets = [0, 6, 0, 0], sizes = [1, 4, 4, 128], strides = [1, 1, 1, 1]} : vector<1x20x5x128xf32> to vector<1x4x4x128xf32>
    %10 = vector.extract_strided_slice %1 {offsets = [0, 1, 1, 0], sizes = [1, 4, 4, 128], strides = [1, 1, 1, 1]} : vector<1x20x5x128xf32> to vector<1x4x4x128xf32>
    %cst = arith.constant 0.000000e+00 : f32
    %11 = vector.broadcast %cst : f32 to vector<1x4x4x128xf32>
    %c0_3 = arith.constant 0 : index
    %c0_4 = arith.constant 0 : index
    %c0_5 = arith.constant 0 : index
    %12 = vector.load %arg2[%c0_3, %c0_4, %c0_5] : memref<9x1x128xf32, #tpu.memory_space<vmem>>, vector<1x1x128xf32>
    %13 = vector.shape_cast %12 : vector<1x1x128xf32> to vector<1x128xf32>
    %14 = vector.shape_cast %13 : vector<1x128xf32> to vector<1x1x1x128xf32>
    %15 = vector.broadcast %14 : vector<1x1x1x128xf32> to vector<1x4x4x128xf32>
    %16 = arith.mulf %2, %15 : vector<1x4x4x128xf32>
    %17 = arith.addf %11, %16 : vector<1x4x4x128xf32>
    %c1 = arith.constant 1 : index
    %c0_6 = arith.constant 0 : index
    %c0_7 = arith.constant 0 : index
    %18 = vector.load %arg2[%c1, %c0_6, %c0_7] : memref<9x1x128xf32, #tpu.memory_space<vmem>>, vector<1x1x128xf32>
    %19 = vector.shape_cast %18 : vector<1x1x128xf32> to vector<1x128xf32>
    %20 = vector.shape_cast %19 : vector<1x128xf32> to vector<1x1x1x128xf32>
    %21 = vector.broadcast %20 : vector<1x1x1x128xf32> to vector<1x4x4x128xf32>
    %22 = arith.mulf %3, %21 : vector<1x4x4x128xf32>
    %23 = arith.addf %17, %22 : vector<1x4x4x128xf32>
    %c2 = arith.constant 2 : index
    %c0_8 = arith.constant 0 : index
    %c0_9 = arith.constant 0 : index
    %24 = vector.load %arg2[%c2, %c0_8, %c0_9] : memref<9x1x128xf32, #tpu.memory_space<vmem>>, vector<1x1x128xf32>
    %25 = vector.shape_cast %24 : vector<1x1x128xf32> to vector<1x128xf32>
    %26 = vector.shape_cast %25 : vector<1x128xf32> to vector<1x1x1x128xf32>
    %27 = vector.broadcast %26 : vector<1x1x1x128xf32> to vector<1x4x4x128xf32>
    %28 = arith.mulf %4, %27 : vector<1x4x4x128xf32>
    %29 = arith.addf %23, %28 : vector<1x4x4x128xf32>
    %c3 = arith.constant 3 : index
    %c0_10 = arith.constant 0 : index
    %c0_11 = arith.constant 0 : index
    %30 = vector.load %arg2[%c3, %c0_10, %c0_11] : memref<9x1x128xf32, #tpu.memory_space<vmem>>, vector<1x1x128xf32>
    %31 = vector.shape_cast %30 : vector<1x1x128xf32> to vector<1x128xf32>
    %32 = vector.shape_cast %31 : vector<1x128xf32> to vector<1x1x1x128xf32>
    %33 = vector.broadcast %32 : vector<1x1x1x128xf32> to vector<1x4x4x128xf32>
    %34 = arith.mulf %5, %33 : vector<1x4x4x128xf32>
    %35 = arith.addf %29, %34 : vector<1x4x4x128xf32>
    %c4 = arith.constant 4 : index
    %c0_12 = arith.constant 0 : index
    %c0_13 = arith.constant 0 : index
    %36 = vector.load %arg2[%c4, %c0_12, %c0_13] : memref<9x1x128xf32, #tpu.memory_space<vmem>>, vector<1x1x128xf32>
    %37 = vector.shape_cast %36 : vector<1x1x128xf32> to vector<1x128xf32>
    %38 = vector.shape_cast %37 : vector<1x128xf32> to vector<1x1x1x128xf32>
    %39 = vector.broadcast %38 : vector<1x1x1x128xf32> to vector<1x4x4x128xf32>
    %40 = arith.mulf %6, %39 : vector<1x4x4x128xf32>
    %41 = arith.addf %35, %40 : vector<1x4x4x128xf32>
    %c5 = arith.constant 5 : index
    %c0_14 = arith.constant 0 : index
    %c0_15 = arith.constant 0 : index
    %42 = vector.load %arg2[%c5, %c0_14, %c0_15] : memref<9x1x128xf32, #tpu.memory_space<vmem>>, vector<1x1x128xf32>
    %43 = vector.shape_cast %42 : vector<1x1x128xf32> to vector<1x128xf32>
    %44 = vector.shape_cast %43 : vector<1x128xf32> to vector<1x1x1x128xf32>
    %45 = vector.broadcast %44 : vector<1x1x1x128xf32> to vector<1x4x4x128xf32>
    %46 = arith.mulf %7, %45 : vector<1x4x4x128xf32>
    %47 = arith.addf %41, %46 : vector<1x4x4x128xf32>
    %c6 = arith.constant 6 : index
    %c0_16 = arith.constant 0 : index
    %c0_17 = arith.constant 0 : index
    %48 = vector.load %arg2[%c6, %c0_16, %c0_17] : memref<9x1x128xf32, #tpu.memory_space<vmem>>, vector<1x1x128xf32>
    %49 = vector.shape_cast %48 : vector<1x1x128xf32> to vector<1x128xf32>
    %50 = vector.shape_cast %49 : vector<1x128xf32> to vector<1x1x1x128xf32>
    %51 = vector.broadcast %50 : vector<1x1x1x128xf32> to vector<1x4x4x128xf32>
    %52 = arith.mulf %8, %51 : vector<1x4x4x128xf32>
    %53 = arith.addf %47, %52 : vector<1x4x4x128xf32>
    %c7 = arith.constant 7 : index
    %c0_18 = arith.constant 0 : index
    %c0_19 = arith.constant 0 : index
    %54 = vector.load %arg2[%c7, %c0_18, %c0_19] : memref<9x1x128xf32, #tpu.memory_space<vmem>>, vector<1x1x128xf32>
    %55 = vector.shape_cast %54 : vector<1x1x128xf32> to vector<1x128xf32>
    %56 = vector.shape_cast %55 : vector<1x128xf32> to vector<1x1x1x128xf32>
    %57 = vector.broadcast %56 : vector<1x1x1x128xf32> to vector<1x4x4x128xf32>
    %58 = arith.mulf %9, %57 : vector<1x4x4x128xf32>
    %59 = arith.addf %53, %58 : vector<1x4x4x128xf32>
    %c8 = arith.constant 8 : index
    %c0_20 = arith.constant 0 : index
    %c0_21 = arith.constant 0 : index
    %60 = vector.load %arg2[%c8, %c0_20, %c0_21] : memref<9x1x128xf32, #tpu.memory_space<vmem>>, vector<1x1x128xf32>
    %61 = vector.shape_cast %60 : vector<1x1x128xf32> to vector<1x128xf32>
    %62 = vector.shape_cast %61 : vector<1x128xf32> to vector<1x1x1x128xf32>
    %63 = vector.broadcast %62 : vector<1x1x1x128xf32> to vector<1x4x4x128xf32>
    %64 = arith.mulf %10, %63 : vector<1x4x4x128xf32>
    %65 = arith.addf %59, %64 : vector<1x4x4x128xf32>
    %c0_22 = arith.constant 0 : index
    %c0_23 = arith.constant 0 : index
    %66 = vector.load %arg3[%c0_22, %c0_23] : memref<1x128xf32, #tpu.memory_space<vmem>>, vector<1x128xf32>
    %67 = vector.shape_cast %66 : vector<1x128xf32> to vector<1x1x1x128xf32>
    %68 = vector.broadcast %67 : vector<1x1x1x128xf32> to vector<1x4x4x128xf32>
    %69 = arith.addf %65, %68 : vector<1x4x4x128xf32>
    %cst_24 = arith.constant 0.000000e+00 : f32
    %70 = vector.broadcast %cst_24 : f32 to vector<1x4x4x128xf32>
    %71 = arith.maximumf %69, %70 : vector<1x4x4x128xf32>
    %72 = vector.shape_cast %71 : vector<1x4x4x128xf32> to vector<16x128xf32>
    %73 = arith.truncf %72 : vector<16x128xf32> to vector<16x128xbf16>
    %c0_25 = arith.constant 0 : index
    %c0_26 = arith.constant 0 : index
    %74 = vector.load %arg4[%c0_25, %c0_26] : memref<128x128xbf16, #tpu.memory_space<vmem>>, vector<128x128xbf16>
    %cst_27 = arith.constant dense<0.000000e+00> : vector<16x128xf32>
    %75 = tpu.matmul %73, %74, %cst_27 {dimension_numbers = #tpu.dot_dimension_numbers<[1], [0], [0], [1], [0, 0, 1, 1], [], []>} : vector<16x128xbf16>, vector<128x128xbf16>, vector<16x128xf32> -> vector<16x128xf32>
    %c0_28 = arith.constant 0 : index
    %c0_29 = arith.constant 0 : index
    %76 = vector.load %arg5[%c0_28, %c0_29] : memref<1x128xf32, #tpu.memory_space<vmem>>, vector<1x128xf32>
    %77 = vector.broadcast %76 : vector<1x128xf32> to vector<16x128xf32>
    %78 = arith.addf %75, %77 : vector<16x128xf32>
    %cst_30 = arith.constant 0.000000e+00 : f32
    %79 = vector.broadcast %cst_30 : f32 to vector<16x128xf32>
    %80 = arith.maximumf %78, %79 : vector<16x128xf32>
    %81 = arith.truncf %80 : vector<16x128xf32> to vector<16x128xbf16>
    %c0_31 = arith.constant 0 : index
    %c0_32 = arith.constant 0 : index
    %c0_33 = arith.constant 0 : index
    %82 = vector.load %arg6[%c0_31, %c0_32, %c0_33] : memref<1x16x128xbf16, #tpu.memory_space<vmem>>, vector<1x16x128xbf16>
    %83 = vector.shape_cast %82 : vector<1x16x128xbf16> to vector<16x128xbf16>
    %84 = vector.shape_cast %81 : vector<16x128xbf16> to vector<1x16x128xbf16>
    tpu.vector_store %arg6[%c0_31, %c0_32, %c0_33], %84 {strides = array<i32>} : memref<1x16x128xbf16, #tpu.memory_space<vmem>>, vector<1x16x128xbf16>,
    return
  }
  func.func @transform_0(%arg0: i32) -> (i32, i32, i32, i32) {
    %c0_i32 = arith.constant 0 : i32
    %c0_i32_0 = arith.constant 0 : i32
    %c0_i32_1 = arith.constant 0 : i32
    %c0_i32_2 = arith.constant 0 : i32
    return %arg0, %c0_i32, %c0_i32_0, %c0_i32_1 : i32, i32, i32, i32
  }
  func.func @transform_1(%arg0: i32) -> (i32, i32, i32) {
    %c0_i32 = arith.constant 0 : i32
    %c0_i32_0 = arith.constant 0 : i32
    %c0_i32_1 = arith.constant 0 : i32
    %c0_i32_2 = arith.constant 0 : i32
    return %c0_i32, %c0_i32_0, %c0_i32_1 : i32, i32, i32
  }
  func.func @transform_2(%arg0: i32) -> (i32, i32) {
    %c0_i32 = arith.constant 0 : i32
    %c0_i32_0 = arith.constant 0 : i32
    %c0_i32_1 = arith.constant 0 : i32
    return %c0_i32, %c0_i32_0 : i32, i32
  }
  func.func @transform_3(%arg0: i32) -> (i32, i32) {
    %c0_i32 = arith.constant 0 : i32
    %c0_i32_0 = arith.constant 0 : i32
    %c0_i32_1 = arith.constant 0 : i32
    return %c0_i32, %c0_i32_0 : i32, i32
  }
  func.func @transform_4(%arg0: i32) -> (i32, i32) {
    %c0_i32 = arith.constant 0 : i32
    %c0_i32_0 = arith.constant 0 : i32
    %c0_i32_1 = arith.constant 0 : i32
    return %c0_i32, %c0_i32_0 : i32, i32
  }
  func.func @transform_5(%arg0: i32) -> (i32, i32, i32) {
    %c0_i32 = arith.constant 0 : i32
    %c0_i32_0 = arith.constant 0 : i32
    %c0_i32_1 = arith.constant 0 : i32
    return %arg0, %c0_i32, %c0_i32_0 : i32, i32, i32
  }
}

module attributes {stable_mosaic.version = 11 : i64} {
  func.func @_pool_fc_kernel(%arg0: i32, %arg1: memref<1x16x128xbf16, #tpu.memory_space<vmem>>, %arg2: memref<128x128xbf16, #tpu.memory_space<vmem>>, %arg3: memref<1x128xf32, #tpu.memory_space<vmem>>, %arg4: memref<1x1x128xf32, #tpu.memory_space<vmem>>) attributes {dimension_semantics = [#tpu.dimension_semantics<parallel>], iteration_bounds = array<i64: 2>, scalar_prefetch = 0 : i64, scratch_operands = 0 : i64, tpu.core_type = #tpu.core_type<tc>, window_params = [{transform_indices = @transform_0, window_bounds = array<i64: 1, 16, 128>}, {pipeline_mode = #tpu.pipeline_mode<synchronous>, transform_indices = @transform_1, window_bounds = array<i64: 128, 128>}, {pipeline_mode = #tpu.pipeline_mode<synchronous>, transform_indices = @transform_2, window_bounds = array<i64: 1, 128>}, {transform_indices = @transform_3, window_bounds = array<i64: 1, 1, 128>}]} {
    %c0 = arith.constant 0 : index
    %c0_0 = arith.constant 0 : index
    %c0_1 = arith.constant 0 : index
    %0 = vector.load %arg1[%c0, %c0_0, %c0_1] : memref<1x16x128xbf16, #tpu.memory_space<vmem>>, vector<1x16x128xbf16>
    %1 = arith.extf %0 : vector<1x16x128xbf16> to vector<1x16x128xf32>
    %cst = arith.constant dense<0.000000e+00> : vector<1x128xf32>
    %2 = vector.multi_reduction <add>, %1, %cst [1] : vector<1x16x128xf32> to vector<1x128xf32>
    %cst_2 = arith.constant 1.600000e+01 : f32
    %3 = vector.broadcast %cst_2 : f32 to vector<1x128xf32>
    %4 = arith.divf %2, %3 : vector<1x128xf32>
    %5 = arith.truncf %4 : vector<1x128xf32> to vector<1x128xbf16>
    %c0_3 = arith.constant 0 : index
    %c0_4 = arith.constant 0 : index
    %6 = vector.load %arg2[%c0_3, %c0_4] : memref<128x128xbf16, #tpu.memory_space<vmem>>, vector<128x128xbf16>
    %cst_5 = arith.constant dense<0.000000e+00> : vector<1x128xf32>
    %7 = tpu.matmul %5, %6, %cst_5 {dimension_numbers = #tpu.dot_dimension_numbers<[1], [0], [0], [1], [0, 0, 1, 1], [], []>} : vector<1x128xbf16>, vector<128x128xbf16>, vector<1x128xf32> -> vector<1x128xf32>
    %c0_6 = arith.constant 0 : index
    %c0_7 = arith.constant 0 : index
    %8 = vector.load %arg3[%c0_6, %c0_7] : memref<1x128xf32, #tpu.memory_space<vmem>>, vector<1x128xf32>
    %9 = arith.addf %7, %8 : vector<1x128xf32>
    %c0_8 = arith.constant 0 : index
    %c0_9 = arith.constant 0 : index
    %c0_10 = arith.constant 0 : index
    %10 = vector.load %arg4[%c0_8, %c0_9, %c0_10] : memref<1x1x128xf32, #tpu.memory_space<vmem>>, vector<1x1x128xf32>
    %11 = vector.shape_cast %10 : vector<1x1x128xf32> to vector<1x128xf32>
    %12 = vector.shape_cast %9 : vector<1x128xf32> to vector<1x1x128xf32>
    tpu.vector_store %arg4[%c0_8, %c0_9, %c0_10], %12 {strides = array<i32>} : memref<1x1x128xf32, #tpu.memory_space<vmem>>, vector<1x1x128xf32>,
    return
  }
  func.func @transform_0(%arg0: i32) -> (i32, i32, i32) {
    %c0_i32 = arith.constant 0 : i32
    %c0_i32_0 = arith.constant 0 : i32
    %c0_i32_1 = arith.constant 0 : i32
    return %arg0, %c0_i32, %c0_i32_0 : i32, i32, i32
  }
  func.func @transform_1(%arg0: i32) -> (i32, i32) {
    %c0_i32 = arith.constant 0 : i32
    %c0_i32_0 = arith.constant 0 : i32
    %c0_i32_1 = arith.constant 0 : i32
    return %c0_i32, %c0_i32_0 : i32, i32
  }
  func.func @transform_2(%arg0: i32) -> (i32, i32) {
    %c0_i32 = arith.constant 0 : i32
    %c0_i32_0 = arith.constant 0 : i32
    %c0_i32_1 = arith.constant 0 : i32
    return %c0_i32, %c0_i32_0 : i32, i32
  }
  func.func @transform_3(%arg0: i32) -> (i32, i32, i32) {
    %c0_i32 = arith.constant 0 : i32
    %c0_i32_0 = arith.constant 0 : i32
    %c0_i32_1 = arith.constant 0 : i32
    return %arg0, %c0_i32, %c0_i32_0 : i32, i32, i32
  }
}

</mosaic_0001>

<llo_original>
// kernel: mobilenet_forward.6
$region0: #{mobilenet_forward.6}
  #allocation0 [shape = 'u32[]', space=smem, size = 0x4, offset = 0x4, fixed_abs, tag = 'smem constant byte address 0x4 - core index']
  #allocation1 [shape = 'u32[144,128]{1,0:T(1,128)}', space=vmem, size = 0x12000, scoped, tag = 'internal scratch']
  #allocation2 [shape = 'f32[1,10,10,128]{3,2,1,0:T(8,128)}', space=vmem, size = 0x14000, scoped, tag = 'scratch operand']
  %s0 = inlined_call_operand.vmem [shape: bf16[2,64,128], index: 0, kind: input, shape index: {}]
  %s1 = inlined_call_operand.vmem [shape: f32[9,1,128], index: 1, kind: input, shape index: {}]
  %s2 = inlined_call_operand.vmem [shape: f32[1,128], index: 2, kind: input, shape index: {}]
  %s3 = inlined_call_operand.vmem [shape: bf16[128,128], index: 3, kind: input, shape index: {}]
  %s4 = inlined_call_operand.vmem [shape: f32[1,128], index: 4, kind: input, shape index: {}]
  %s5 = inlined_call_operand.vmem [shape: bf16[2,64,128], index: 5, kind: output, shape index: {}]
  %s6 = sld [smem:[#allocation0]]
  $region53: #{mobilenet_forward.6} parent=0
    _
  %s8 = ssub.s32 1, %s6
  %s9 = scalar_select 0, %s8, %s6
  loop: start=0, step=1, limit=4
  $region2: #{mobilenet_forward.6} parent=0 // loop_pre_header
    _
  $region3: #{mobilenet_forward.6} parent=0 // loop_header
    %s11 = sphi 0, %s15
    %p12 = scmp.ge.s32.totalorder %s11, 4
    %s21 = sphi 0, %s23
    %s24 = sphi 0, %s21
    %s25 = sphi 0, %s24
    %s41 = sphi 0, %s25
    %s45 = sphi 0, %s45
    %s47 = sphi 0, %s45
    %s48 = sphi 0, %s47
    %s62 = sphi 0, %s48
    %s66 = sphi 0, %s66
    %s68 = sphi 0, %s66
    %s69 = sphi 0, %s68
    %s83 = sphi 0, %s69
    %s87 = sphi 0, %s87
    %s89 = sphi 0, %s87
    %s90 = sphi 0, %s89
    %s104 = sphi 0, %s90
    %s108 = sphi 0, %s108
    %s110 = sphi 0, %s108
    %s111 = sphi 0, %s110
    %s125 = sphi 0, %s111
    %s131 = sphi 0, %s133
    %s134 = sphi 0, %s131
    %s135 = sphi 0, %s134
    %s151 = sphi 0, %s135
  $region4: #{mobilenet_forward.6} parent=0 // loop_header_branch
    %14 = sbr.rel (%p12) target = $region8
  $region5: #{mobilenet_forward.6} parent=0 // loop_body
    %s16 = ssub.s32 %s11, 1
    %s17 = ssub.s32 %s11, 2
    %s18 = sadd.s32 %s11, 1
    %s19 = ssub.s32 %s11, %s18
    %p20 = scmp.eq.s32.totalorder %s19, 0
    %s22 = sadd.s32 %s21, 1
    %s23 = scalar_select %p20, %s21, %s22
    %p26 = pneg %p20
    %p27 = scmp.eq.s32.totalorder %s11, 1
    %p28 = por %p26, %p27
    %p29 = scmp.ne.s32.totalorder %s21, %s24
    %p30 = scmp.eq.s32.totalorder %s11, 0
    %p31 = por %p29, %p30
    %p32 = scmp.ne.s32.totalorder %s21, %s24
    %p33 = scmp.eq.s32.totalorder %s16, 1
    %p34 = por %p32, %p33
    %p35 = scmp.ne.s32.totalorder %s24, %s25
    %p36 = scmp.eq.s32.totalorder %s16, 0
    %p37 = por %p35, %p36
    %p38 = scmp.ne.s32.totalorder %s24, %s25
    %p39 = scmp.eq.s32.totalorder %s17, 1
    %p40 = por %p38, %p39
    %p42 = scmp.ne.s32.totalorder %s25, %s41
    %p43 = scmp.eq.s32.totalorder %s17, 0
    %p44 = por %p42, %p43
    %s46 = sadd.s32 %s45, 1
    %p49 = scmp.eq.s32.totalorder %s11, 1
    %p50 = scmp.ne.s32.totalorder %s45, %s47
    %p51 = scmp.eq.s32.totalorder %s11, 0
    %p52 = por %p50, %p51
    %p53 = scmp.ne.s32.totalorder %s45, %s47
    %p54 = scmp.eq.s32.totalorder %s16, 1
    %p55 = por %p53, %p54
    %p56 = scmp.ne.s32.totalorder %s47, %s48
    %p57 = scmp.eq.s32.totalorder %s16, 0
    %p58 = por %p56, %p57
    %p59 = scmp.ne.s32.totalorder %s47, %s48
    %p60 = scmp.eq.s32.totalorder %s17, 1
    %p61 = por %p59, %p60
    %p63 = scmp.ne.s32.totalorder %s48, %s62
    %p64 = scmp.eq.s32.totalorder %s17, 0
    %p65 = por %p63, %p64
    %s67 = sadd.s32 %s66, 1
    %p70 = scmp.eq.s32.totalorder %s11, 1
    %p71 = scmp.ne.s32.totalorder %s66, %s68
    %p72 = scmp.eq.s32.totalorder %s11, 0
    %p73 = por %p71, %p72
    %p74 = scmp.ne.s32.totalorder %s66, %s68
    %p75 = scmp.eq.s32.totalorder %s16, 1
    %p76 = por %p74, %p75
    %p77 = scmp.ne.s32.totalorder %s68, %s69
    %p78 = scmp.eq.s32.totalorder %s16, 0
    %p79 = por %p77, %p78
    %p80 = scmp.ne.s32.totalorder %s68, %s69
    %p81 = scmp.eq.s32.totalorder %s17, 1
    %p82 = por %p80, %p81
    %p84 = scmp.ne.s32.totalorder %s69, %s83
    %p85 = scmp.eq.s32.totalorder %s17, 0
    %p86 = por %p84, %p85
    %s88 = sadd.s32 %s87, 1
    %p91 = scmp.eq.s32.totalorder %s11, 1
    %p92 = scmp.ne.s32.totalorder %s87, %s89
    %p93 = scmp.eq.s32.totalorder %s11, 0
    %p94 = por %p92, %p93
    %p95 = scmp.ne.s32.totalorder %s87, %s89
    %p96 = scmp.eq.s32.totalorder %s16, 1
    %p97 = por %p95, %p96
    %p98 = scmp.ne.s32.totalorder %s89, %s90
    %p99 = scmp.eq.s32.totalorder %s16, 0
    %p100 = por %p98, %p99
    %p101 = scmp.ne.s32.totalorder %s89, %s90
    %p102 = scmp.eq.s32.totalorder %s17, 1
    %p103 = por %p101, %p102
    %p105 = scmp.ne.s32.totalorder %s90, %s104
    %p106 = scmp.eq.s32.totalorder %s17, 0
    %p107 = por %p105, %p106
    %s109 = sadd.s32 %s108, 1
    %p112 = scmp.eq.s32.totalorder %s11, 1
    %p113 = scmp.ne.s32.totalorder %s108, %s110
    %p114 = scmp.eq.s32.totalorder %s11, 0
    %p115 = por %p113, %p114
    %p116 = scmp.ne.s32.totalorder %s108, %s110
    %p117 = scmp.eq.s32.totalorder %s16, 1
    %p118 = por %p116, %p117
    %p119 = scmp.ne.s32.totalorder %s110, %s111
    %p120 = scmp.eq.s32.totalorder %s16, 0
    %p121 = por %p119, %p120
    %p122 = scmp.ne.s32.totalorder %s110, %s111
    %p123 = scmp.eq.s32.totalorder %s17, 1
    %p124 = por %p122, %p123
    %p126 = scmp.ne.s32.totalorder %s111, %s125
    %p127 = scmp.eq.s32.totalorder %s17, 0
    %p128 = por %p126, %p127
    %s129 = ssub.s32 %s11, %s18
    %p130 = scmp.eq.s32.totalorder %s129, 0
    %s132 = sadd.s32 %s131, 1
    %s133 = scalar_select %p130, %s131, %s132
    %p136 = pneg %p130
    %p137 = scmp.eq.s32.totalorder %s11, 1
    %p138 = por %p136, %p137
    %p139 = scmp.ne.s32.totalorder %s131, %s134
    %p140 = scmp.eq.s32.totalorder %s11, 0
    %p141 = por %p139, %p140
    %p142 = scmp.ne.s32.totalorder %s131, %s134
    %p143 = scmp.eq.s32.totalorder %s16, 1
    %p144 = por %p142, %p143
    %p145 = scmp.ne.s32.totalorder %s134, %s135
    %p146 = scmp.eq.s32.totalorder %s16, 0
    %p147 = por %p145, %p146
    %p148 = scmp.ne.s32.totalorder %s134, %s135
    %p149 = scmp.eq.s32.totalorder %s17, 1
    %p150 = por %p148, %p149
    %p152 = scmp.ne.s32.totalorder %s135, %s151
    %p153 = scmp.eq.s32.totalorder %s17, 0
    %p154 = por %p152, %p153
    %p155 = scmp.le.s32.totalorder 1, %s11
    %p156 = scmp.lt.s32.totalorder %s11, 3
    %p157 = pnand %p155, %p156
    %p158 = pneg %p157
    // Predicated region
    $region9: #{mobilenet_forward.6} parent=5 // pred_check
      _
    $region10: #{mobilenet_forward.6} parent=5 // pred_check_branch
      %160 = sbr.rel (%p157) target = $region12
    $region11: #{mobilenet_forward.6} parent=5 // pred_region
      %s161 = ssub.s32 %s11, 1
      // Predicated region
      $region13: #{mobilenet_forward.6} parent=11 // pred_check
        %p162 = pneg %p58
      $region14: #{mobilenet_forward.6} parent=11 // pred_check_branch
        %164 = sbr.rel (%p162) target = $region16
      $region15: #{mobilenet_forward.6} parent=11 // pred_region
        _
      $region16: #{mobilenet_forward.6} parent=11 // pred_fallthru
        _
      // Predicated region
      $region17: #{mobilenet_forward.6} parent=11 // pred_check
        %p165 = pneg %p79
      $region18: #{mobilenet_forward.6} parent=11 // pred_check_branch
        %167 = sbr.rel (%p165) target = $region20
      $region19: #{mobilenet_forward.6} parent=11 // pred_region
        _
      $region20: #{mobilenet_forward.6} parent=11 // pred_fallthru
        _
      // Predicated region
      $region21: #{mobilenet_forward.6} parent=11 // pred_check
        %p168 = pneg %p100
      $region22: #{mobilenet_forward.6} parent=11 // pred_check_branch
        %170 = sbr.rel (%p168) target = $region24
      $region23: #{mobilenet_forward.6} parent=11 // pred_region
        _
      $region24: #{mobilenet_forward.6} parent=11 // pred_fallthru
        _
      // Predicated region
      $region25: #{mobilenet_forward.6} parent=11 // pred_check
        %p171 = pneg %p121
      $region26: #{mobilenet_forward.6} parent=11 // pred_check_branch
        %173 = sbr.rel (%p171) target = $region28
      $region27: #{mobilenet_forward.6} parent=11 // pred_region
        _
      $region28: #{mobilenet_forward.6} parent=11 // pred_fallthru
        _
    $region12: #{mobilenet_forward.6} parent=5 // pred_fallthru
      _
    %p174 = scmp.lt.s32.totalorder %s11, 2
    // Predicated region
    $region29: #{mobilenet_forward.6} parent=5 // pred_check
      %p175 = pneg %p174
    $region30: #{mobilenet_forward.6} parent=5 // pred_check_branch
      %177 = sbr.rel (%p175) target = $region32
    $region31: #{mobilenet_forward.6} parent=5 // pred_region
      // Predicated region
      $region33: #{mobilenet_forward.6} parent=31 // pred_check
        %p178 = pneg %p31
      $region34: #{mobilenet_forward.6} parent=31 // pred_check_branch
        %180 = sbr.rel (%p178) target = $region36
      $region35: #{mobilenet_forward.6} parent=31 // pred_region
        %p181 = scmp.lt.s32.totalorder %s11, 1
        %s182 = scalar_select %p181, %s11, 1
        %s183 = smul.addr %s182, 8
        %s184 = smul.addr %s183, 4
        %s185 = scalar_lea.vmem %s0, %s184
      $region36: #{mobilenet_forward.6} parent=31 // pred_fallthru
        _
    $region32: #{mobilenet_forward.6} parent=5 // pred_fallthru
      _
    %p186 = scmp.le.s32.totalorder 1, %s11
    %p187 = scmp.lt.s32.totalorder %s11, 3
    %p188 = pnand %p186, %p187
    %p189 = pneg %p188
    // Predicated region
    $region37: #{mobilenet_forward.6} parent=5 // pred_check
      _
    $region38: #{mobilenet_forward.6} parent=5 // pred_check_branch
      %191 = sbr.rel (%p188) target = $region40
    $region39: #{mobilenet_forward.6} parent=5 // pred_region
      %s192 = ssub.s32 %s11, 1
      %p193 = scmp.lt.s32.totalorder %s16, 1
      %s194 = scalar_select %p193, %s16, 1
      %s195 = smul.addr %s194, 8
      %s196 = smul.addr %s195, 4
      %s197 = scalar_lea.vmem %s0, %s196
      %p198 = pneg %p37
      %p199 = pneg %p34
      %p200 = pneg %p58
      %p201 = pneg %p55
      %p202 = pneg %p79
      %p203 = pneg %p76
      %p204 = pneg %p100
      %p205 = pneg %p97
      %p206 = pneg %p121
      %p207 = pneg %p118
      %p208 = pneg %p147
      %p209 = pneg %p144
      %p210 = scmp.lt.s32.totalorder %s16, 1
      %s211 = scalar_select %p210, %s16, 1
      %s212 = smul.addr %s211, 8
      %s213 = smul.addr %s212, 4
      %s214 = scalar_lea.vmem %s5, %s213
      %p215 = scmp.lt.s32.totalorder %s16, 1
      %s216 = scalar_select %p215, %s16, 1
      %s217 = smul.addr %s216, 8
      %s218 = smul.addr %s217, 4
      %s219 = scalar_lea.vmem %s0, %s218
      %p220 = scmp.lt.s32.totalorder %s16, 1
      %s221 = scalar_select %p220, %s16, 1
      %s222 = smul.addr %s221, 8
      %s223 = smul.addr %s222, 4
      %s224 = scalar_lea.vmem %s5, %s223
      %226 = vst [vmem:[#allocation2] sm:$0xff] 0.0
      %227 = vst [vmem:[#allocation2 + $0x8] sm:$0x3] 0.0
      %228 = vst [vmem:[#allocation2 + $0x10] sm:$0xff] 0.0
      %229 = vst [vmem:[#allocation2 + $0x18] sm:$0x3] 0.0
      %230 = vst [vmem:[#allocation2 + $0x20] sm:$0xff] 0.0
      %231 = vst [vmem:[#allocation2 + $0x28] sm:$0x3] 0.0
      %232 = vst [vmem:[#allocation2 + $0x30] sm:$0xff] 0.0
      %233 = vst [vmem:[#allocation2 + $0x38] sm:$0x3] 0.0
      %234 = vst [vmem:[#allocation2 + $0x40] sm:$0xff] 0.0
      %235 = vst [vmem:[#allocation2 + $0x48] sm:$0x3] 0.0
      %236 = vst [vmem:[#allocation2 + $0x50] sm:$0xff] 0.0
      %237 = vst [vmem:[#allocation2 + $0x58] sm:$0x3] 0.0
      %238 = vst [vmem:[#allocation2 + $0x60] sm:$0xff] 0.0
      %239 = vst [vmem:[#allocation2 + $0x68] sm:$0x3] 0.0
      %240 = vst [vmem:[#allocation2 + $0x70] sm:$0xff] 0.0
      %241 = vst [vmem:[#allocation2 + $0x78] sm:$0x3] 0.0
      %242 = vst [vmem:[#allocation2 + $0x80] sm:$0xff] 0.0
      %243 = vst [vmem:[#allocation2 + $0x88] sm:$0x3] 0.0
      %244 = vst [vmem:[#allocation2 + $0x90] sm:$0xff] 0.0
      %245 = vst [vmem:[#allocation2 + $0x98] sm:$0x3] 0.0
      %v246 = vld [vmem:[%s219] sm:$0xf]
      %v247 = vunpack.c.l.bf16 %v246
      %s248 = scalar_lea.vmem [#allocation2], 16
      %249 = vst [vmem:[%s248 + $0x1] sm:$0xff] %v247
      %v250 = vld [vmem:[%s219 + $0x4] sm:$0xf]
      %v251 = vunpack.c.l.bf16 %v250
      %s252 = scalar_lea.vmem [#allocation2], 32
      %253 = vst [vmem:[%s252 + $0x1] sm:$0xff] %v251
      %v254 = vld [vmem:[%s219 + $0x8] sm:$0xf]
      %v255 = vunpack.c.l.bf16 %v254
      %s256 = scalar_lea.vmem [#allocation2], 48
      %257 = vst [vmem:[%s256 + $0x1] sm:$0xff] %v255
      %v258 = vld [vmem:[%s219 + $0xc] sm:$0xf]
      %v259 = vunpack.c.l.bf16 %v258
      %s260 = scalar_lea.vmem [#allocation2], 64
      %261 = vst [vmem:[%s260 + $0x1] sm:$0xff] %v259
      %v262 = vld [vmem:[%s219 + $0x10] sm:$0xf]
      %v263 = vunpack.c.l.bf16 %v262
      %s264 = scalar_lea.vmem [#allocation2], 80
      %265 = vst [vmem:[%s264 + $0x1] sm:$0xff] %v263
      %v266 = vld [vmem:[%s219 + $0x14] sm:$0xf]
      %v267 = vunpack.c.l.bf16 %v266
      %s268 = scalar_lea.vmem [#allocation2], 96
      %269 = vst [vmem:[%s268 + $0x1] sm:$0xff] %v267
      %v270 = vld [vmem:[%s219 + $0x18] sm:$0xf]
      %v271 = vunpack.c.l.bf16 %v270
      %s272 = scalar_lea.vmem [#allocation2], 112
      %273 = vst [vmem:[%s272 + $0x1] sm:$0xff] %v271
      %v274 = vld [vmem:[%s219 + $0x1c] sm:$0xf]
      %v275 = vunpack.c.l.bf16 %v274
      %s276 = scalar_lea.vmem [#allocation2], 128
      %277 = vst [vmem:[%s276 + $0x1] sm:$0xff] %v275
      %v278 = vld [vmem:[#allocation2] sm:$0xff]
      %v279 = vld [vmem:[#allocation2 + $0x10] sm:$0xff]
      %v280 = vld [vmem:[#allocation2 + $0x20] sm:$0xff]
      %v281 = vld [vmem:[#allocation2 + $0x30] sm:$0xff]
      %v282 = vld [vmem:[#allocation2 + $0x40] sm:$0xff]
      %v283 = vld [vmem:[#allocation2 + $0x50] sm:$0xff]
      %v284 = vld [vmem:[#allocation2 + $0x60] sm:$0xff]
      %v285 = vld [vmem:[#allocation2 + $0x70] sm:$0xff]
      %v286 = vld [vmem:[#allocation2 + $0x1] sm:$0xff]
      %v287 = vld [vmem:[#allocation2 + $0x11] sm:$0xff]
      %v288 = vld [vmem:[#allocation2 + $0x21] sm:$0xff]
      %v289 = vld [vmem:[#allocation2 + $0x31] sm:$0xff]
      %v290 = vld [vmem:[#allocation2 + $0x41] sm:$0xff]
      %v291 = vld [vmem:[#allocation2 + $0x51] sm:$0xff]
      %v292 = vld [vmem:[#allocation2 + $0x61] sm:$0xff]
      %v293 = vld [vmem:[#allocation2 + $0x71] sm:$0xff]
      %v294 = vld [vmem:[#allocation2 + $0x2] sm:$0xff]
      %v295 = vld [vmem:[#allocation2 + $0x12] sm:$0xff]
      %v296 = vld [vmem:[#allocation2 + $0x22] sm:$0xff]
      %v297 = vld [vmem:[#allocation2 + $0x32] sm:$0xff]
      %v298 = vld [vmem:[#allocation2 + $0x42] sm:$0xff]
      %v299 = vld [vmem:[#allocation2 + $0x52] sm:$0xff]
      %v300 = vld [vmem:[#allocation2 + $0x62] sm:$0xff]
      %v301 = vld [vmem:[#allocation2 + $0x72] sm:$0xff]
      %v302 = vld [vmem:[%s248] sm:$0xff]
      %v303 = vld [vmem:[%s248 + $0x10] sm:$0xff]
      %v304 = vld [vmem:[%s248 + $0x20] sm:$0xff]
      %v305 = vld [vmem:[%s248 + $0x30] sm:$0xff]
      %v306 = vld [vmem:[%s248 + $0x40] sm:$0xff]
      %v307 = vld [vmem:[%s248 + $0x50] sm:$0xff]
      %v308 = vld [vmem:[%s248 + $0x60] sm:$0xff]
      %v309 = vld [vmem:[%s248 + $0x70] sm:$0xff]
      %v310 = vld [vmem:[%s248 + $0x1] sm:$0xff]
      %v311 = vld [vmem:[%s248 + $0x11] sm:$0xff]
      %v312 = vld [vmem:[%s248 + $0x21] sm:$0xff]
      %v313 = vld [vmem:[%s248 + $0x31] sm:$0xff]
      %v314 = vld [vmem:[%s248 + $0x41] sm:$0xff]
      %v315 = vld [vmem:[%s248 + $0x51] sm:$0xff]
      %v316 = vld [vmem:[%s248 + $0x61] sm:$0xff]
      %v317 = vld [vmem:[%s248 + $0x71] sm:$0xff]
      %v318 = vld [vmem:[%s248 + $0x2] sm:$0xff]
      %v319 = vld [vmem:[%s248 + $0x12] sm:$0xff]
      %v320 = vld [vmem:[%s248 + $0x22] sm:$0xff]
      %v321 = vld [vmem:[%s248 + $0x32] sm:$0xff]
      %v322 = vld [vmem:[%s248 + $0x42] sm:$0xff]
      %v323 = vld [vmem:[%s248 + $0x52] sm:$0xff]
      %v324 = vld [vmem:[%s248 + $0x62] sm:$0xff]
      %v325 = vld [vmem:[%s248 + $0x72] sm:$0xff]
      %v326 = vld [vmem:[%s252] sm:$0xff]
      %v327 = vld [vmem:[%s252 + $0x10] sm:$0xff]
      %v328 = vld [vmem:[%s252 + $0x20] sm:$0xff]
      %v329 = vld [vmem:[%s252 + $0x30] sm:$0xff]
      %v330 = vld [vmem:[%s252 + $0x40] sm:$0xff]
      %v331 = vld [vmem:[%s252 + $0x50] sm:$0xff]
      %v332 = vld [vmem:[%s252 + $0x60] sm:$0xff]
      %v333 = vld [vmem:[%s252 + $0x70] sm:$0xff]
      %v334 = vld [vmem:[%s252 + $0x1] sm:$0xff]
      %v335 = vld [vmem:[%s252 + $0x11] sm:$0xff]
      %v336 = vld [vmem:[%s252 + $0x21] sm:$0xff]
      %v337 = vld [vmem:[%s252 + $0x31] sm:$0xff]
      %v338 = vld [vmem:[%s252 + $0x41] sm:$0xff]
      %v339 = vld [vmem:[%s252 + $0x51] sm:$0xff]
      %v340 = vld [vmem:[%s252 + $0x61] sm:$0xff]
      %v341 = vld [vmem:[%s252 + $0x71] sm:$0xff]
      %v342 = vld [vmem:[%s252 + $0x2] sm:$0xff]
      %v343 = vld [vmem:[%s252 + $0x12] sm:$0xff]
      %v344 = vld [vmem:[%s252 + $0x22] sm:$0xff]
      %v345 = vld [vmem:[%s252 + $0x32] sm:$0xff]
      %v346 = vld [vmem:[%s252 + $0x42] sm:$0xff]
      %v347 = vld [vmem:[%s252 + $0x52] sm:$0xff]
      %v348 = vld [vmem:[%s252 + $0x62] sm:$0xff]
      %v349 = vld [vmem:[%s252 + $0x72] sm:$0xff]
      %v350 = vld [vmem:[%s1] sm:$0x1]
      %v352 = vlaneseq
      %v353 = vshrl.u32 %v352, 7
      %v354 = vsub.s32 0, %v353
      %v355 = vrot.slane %v350, %v354
      %v357 = vmul.f32 %v278, %v355
      %v358 = vmul.f32 %v279, %v355
      %v359 = vmul.f32 %v280, %v355
      %v360 = vmul.f32 %v281, %v355
      %v361 = vmul.f32 %v282, %v355
      %v362 = vmul.f32 %v283, %v355
      %v363 = vmul.f32 %v284, %v355
      %v364 = vmul.f32 %v285, %v355
      %v365 = vadd.f32 %v357, 0.0
      %v366 = vadd.f32 %v358, 0.0
      %v367 = vadd.f32 %v359, 0.0
      %v368 = vadd.f32 %v360, 0.0
      %v369 = vadd.f32 %v361, 0.0
      %v370 = vadd.f32 %v362, 0.0
      %v371 = vadd.f32 %v363, 0.0
      %v372 = vadd.f32 %v364, 0.0
      %s373 = scalar_lea.vmem %s1, 1
      %v374 = vld [vmem:[%s373] sm:$0x1]
      %v376 = vlaneseq
      %v377 = vshrl.u32 %v376, 7
      %v378 = vsub.s32 0, %v377
      %v379 = vrot.slane %v374, %v378
      %v381 = vmul.f32 %v286, %v379
      %v382 = vmul.f32 %v287, %v379
      %v383 = vmul.f32 %v288, %v379
      %v384 = vmul.f32 %v289, %v379
      %v385 = vmul.f32 %v290, %v379
      %v386 = vmul.f32 %v291, %v379
      %v387 = vmul.f32 %v292, %v379
      %v388 = vmul.f32 %v293, %v379
      %v389 = vadd.f32 %v365, %v381
      %v390 = vadd.f32 %v366, %v382
      %v391 = vadd.f32 %v367, %v383
      %v392 = vadd.f32 %v368, %v384
      %v393 = vadd.f32 %v369, %v385
      %v394 = vadd.f32 %v370, %v386
      %v395 = vadd.f32 %v371, %v387
      %v396 = vadd.f32 %v372, %v388
      %s397 = scalar_lea.vmem %s1, 2
      %v398 = vld [vmem:[%s397] sm:$0x1]
      %v400 = vlaneseq
      %v401 = vshrl.u32 %v400, 7
      %v402 = vsub.s32 0, %v401
      %v403 = vrot.slane %v398, %v402
      %v405 = vmul.f32 %v294, %v403
      %v406 = vmul.f32 %v295, %v403
      %v407 = vmul.f32 %v296, %v403
      %v408 = vmul.f32 %v297, %v403
      %v409 = vmul.f32 %v298, %v403
      %v410 = vmul.f32 %v299, %v403
      %v411 = vmul.f32 %v300, %v403
      %v412 = vmul.f32 %v301, %v403
      %v413 = vadd.f32 %v389, %v405
      %v414 = vadd.f32 %v390, %v406
      %v415 = vadd.f32 %v391, %v407
      %v416 = vadd.f32 %v392, %v408
      %v417 = vadd.f32 %v393, %v409
      %v418 = vadd.f32 %v394, %v410
      %v419 = vadd.f32 %v395, %v411
      %v420 = vadd.f32 %v396, %v412
      %s421 = scalar_lea.vmem %s1, 3
      %v422 = vld [vmem:[%s421] sm:$0x1]
      %v424 = vlaneseq
      %v425 = vshrl.u32 %v424, 7
      %v426 = vsub.s32 0, %v425
      %v427 = vrot.slane %v422, %v426
      %v429 = vmul.f32 %v302, %v427
      %v430 = vmul.f32 %v303, %v427
      %v431 = vmul.f32 %v304, %v427
      %v432 = vmul.f32 %v305, %v427
      %v433 = vmul.f32 %v306, %v427
      %v434 = vmul.f32 %v307, %v427
      %v435 = vmul.f32 %v308, %v427
      %v436 = vmul.f32 %v309, %v427
      %v437 = vadd.f32 %v413, %v429
      %v438 = vadd.f32 %v414, %v430
      %v439 = vadd.f32 %v415, %v431
      %v440 = vadd.f32 %v416, %v432
      %v441 = vadd.f32 %v417, %v433
      %v442 = vadd.f32 %v418, %v434
      %v443 = vadd.f32 %v419, %v435
      %v444 = vadd.f32 %v420, %v436
      %s445 = scalar_lea.vmem %s1, 4
      %v446 = vld [vmem:[%s445] sm:$0x1]
      %v448 = vlaneseq
      %v449 = vshrl.u32 %v448, 7
      %v450 = vsub.s32 0, %v449
      %v451 = vrot.slane %v446, %v450
      %v453 = vmul.f32 %v310, %v451
      %v454 = vmul.f32 %v311, %v451
      %v455 = vmul.f32 %v312, %v451
      %v456 = vmul.f32 %v313, %v451
      %v457 = vmul.f32 %v314, %v451
      %v458 = vmul.f32 %v315, %v451
      %v459 = vmul.f32 %v316, %v451
      %v460 = vmul.f32 %v317, %v451
      %v461 = vadd.f32 %v437, %v453
      %v462 = vadd.f32 %v438, %v454
      %v463 = vadd.f32 %v439, %v455
      %v464 = vadd.f32 %v440, %v456
      %v465 = vadd.f32 %v441, %v457
      %v466 = vadd.f32 %v442, %v458
      %v467 = vadd.f32 %v443, %v459
      %v468 = vadd.f32 %v444, %v460
      %s469 = scalar_lea.vmem %s1, 5
      %v470 = vld [vmem:[%s469] sm:$0x1]
      %v472 = vlaneseq
      %v473 = vshrl.u32 %v472, 7
      %v474 = vsub.s32 0, %v473
      %v475 = vrot.slane %v470, %v474
      %v477 = vmul.f32 %v318, %v475
      %v478 = vmul.f32 %v319, %v475
      %v479 = vmul.f32 %v320, %v475
      %v480 = vmul.f32 %v321, %v475
      %v481 = vmul.f32 %v322, %v475
      %v482 = vmul.f32 %v323, %v475
      %v483 = vmul.f32 %v324, %v475
      %v484 = vmul.f32 %v325, %v475
      %v485 = vadd.f32 %v461, %v477
      %v486 = vadd.f32 %v462, %v478
      %v487 = vadd.f32 %v463, %v479
      %v488 = vadd.f32 %v464, %v480
      %v489 = vadd.f32 %v465, %v481
      %v490 = vadd.f32 %v466, %v482
      %v491 = vadd.f32 %v467, %v483
      %v492 = vadd.f32 %v468, %v484
      %s493 = scalar_lea.vmem %s1, 6
      %v494 = vld [vmem:[%s493] sm:$0x1]
      %v496 = vlaneseq
      %v497 = vshrl.u32 %v496, 7
      %v498 = vsub.s32 0, %v497
      %v499 = vrot.slane %v494, %v498
      %v501 = vmul.f32 %v326, %v499
      %v502 = vmul.f32 %v327, %v499
      %v503 = vmul.f32 %v328, %v499
      %v504 = vmul.f32 %v329, %v499
      %v505 = vmul.f32 %v330, %v499
      %v506 = vmul.f32 %v331, %v499
      %v507 = vmul.f32 %v332, %v499
      %v508 = vmul.f32 %v333, %v499
      %v509 = vadd.f32 %v485, %v501
      %v510 = vadd.f32 %v486, %v502
      %v511 = vadd.f32 %v487, %v503
      %v512 = vadd.f32 %v488, %v504
      %v513 = vadd.f32 %v489, %v505
      %v514 = vadd.f32 %v490, %v506
      %v515 = vadd.f32 %v491, %v507
      %v516 = vadd.f32 %v492, %v508
      %s517 = scalar_lea.vmem %s1, 7
      %v518 = vld [vmem:[%s517] sm:$0x1]
      %v520 = vlaneseq
      %v521 = vshrl.u32 %v520, 7
      %v522 = vsub.s32 0, %v521
      %v523 = vrot.slane %v518, %v522
      %v525 = vmul.f32 %v334, %v523
      %v526 = vmul.f32 %v335, %v523
      %v527 = vmul.f32 %v336, %v523
      %v528 = vmul.f32 %v337, %v523
      %v529 = vmul.f32 %v338, %v523
      %v530 = vmul.f32 %v339, %v523
      %v531 = vmul.f32 %v340, %v523
      %v532 = vmul.f32 %v341, %v523
      %v533 = vadd.f32 %v509, %v525
      %v534 = vadd.f32 %v510, %v526
      %v535 = vadd.f32 %v511, %v527
      %v536 = vadd.f32 %v512, %v528
      %v537 = vadd.f32 %v513, %v529
      %v538 = vadd.f32 %v514, %v530
      %v539 = vadd.f32 %v515, %v531
      %v540 = vadd.f32 %v516, %v532
      %s541 = scalar_lea.vmem %s1, 8
      %v542 = vld [vmem:[%s541] sm:$0x1]
      %v544 = vlaneseq
      %v545 = vshrl.u32 %v544, 7
      %v546 = vsub.s32 0, %v545
      %v547 = vrot.slane %v542, %v546
      %v549 = vmul.f32 %v342, %v547
      %v550 = vmul.f32 %v343, %v547
      %v551 = vmul.f32 %v344, %v547
      %v552 = vmul.f32 %v345, %v547
      %v553 = vmul.f32 %v346, %v547
      %v554 = vmul.f32 %v347, %v547
      %v555 = vmul.f32 %v348, %v547
      %v556 = vmul.f32 %v349, %v547
      %v557 = vadd.f32 %v533, %v549
      %v558 = vadd.f32 %v534, %v550
      %v559 = vadd.f32 %v535, %v551
      %v560 = vadd.f32 %v536, %v552
      %v561 = vadd.f32 %v537, %v553
      %v562 = vadd.f32 %v538, %v554
      %v563 = vadd.f32 %v539, %v555
      %v564 = vadd.f32 %v540, %v556
      %v565 = vld [vmem:[%s2] sm:$0x1]
      %v567 = vlaneseq
      %v568 = vshrl.u32 %v567, 7
      %v569 = vsub.s32 0, %v568
      %v570 = vrot.slane %v565, %v569
      %v572 = vadd.f32 %v557, %v570
      %v573 = vadd.f32 %v558, %v570
      %v574 = vadd.f32 %v559, %v570
      %v575 = vadd.f32 %v560, %v570
      %v576 = vadd.f32 %v561, %v570
      %v577 = vadd.f32 %v562, %v570
      %v578 = vadd.f32 %v563, %v570
      %v579 = vadd.f32 %v564, %v570
      %v580 = vmax.f32 %v572, 0.0
      %v581 = vmax.f32 %v573, 0.0
      %v582 = vmax.f32 %v574, 0.0
      %v583 = vmax.f32 %v575, 0.0
      %v584 = vmax.f32 %v576, 0.0
      %v585 = vmax.f32 %v577, 0.0
      %v586 = vmax.f32 %v578, 0.0
      %v587 = vmax.f32 %v579, 0.0
      %v588 = vpack.c.bf16 %v581, %v580
      %v589 = vpack.c.bf16 %v583, %v582
      %v590 = vpack.c.bf16 %v585, %v584
      %v591 = vpack.c.bf16 %v587, %v586
      %v592 = vld [vmem:[%s3] sm:$0xf]
      %v593 = vld [vmem:[%s3 + $0x4] sm:$0xf]
      %v594 = vld [vmem:[%s3 + $0x8] sm:$0xf]
      %v595 = vld [vmem:[%s3 + $0xc] sm:$0xf]
      %v596 = vld [vmem:[%s3 + $0x10] sm:$0xf]
      %v597 = vld [vmem:[%s3 + $0x14] sm:$0xf]
      %v598 = vld [vmem:[%s3 + $0x18] sm:$0xf]
      %v599 = vld [vmem:[%s3 + $0x1c] sm:$0xf]
      %v600 = vld [vmem:[%s3 + $0x20] sm:$0xf]
      %v601 = vld [vmem:[%s3 + $0x24] sm:$0xf]
      %v602 = vld [vmem:[%s3 + $0x28] sm:$0xf]
      %v603 = vld [vmem:[%s3 + $0x2c] sm:$0xf]
      %v604 = vld [vmem:[%s3 + $0x30] sm:$0xf]
      %v605 = vld [vmem:[%s3 + $0x34] sm:$0xf]
      %v606 = vld [vmem:[%s3 + $0x38] sm:$0xf]
      %v607 = vld [vmem:[%s3 + $0x3c] sm:$0xf]
      %v608 = vld [vmem:[%s4] sm:$0x1]
      %v610 = vlaneseq
      %v611 = vshrl.u32 %v610, 7
      %v612 = vsub.s32 0, %v611
      %v613 = vrot.slane %v608, %v612
      %v631 = vunpack.c.l.b16 %v592
      %v632 = vunpack.c.l.b16 %v593
      %v633 = vunpack.c.l.b16 %v594
      %v634 = vunpack.c.l.b16 %v595
      %v635 = vunpack.c.l.b16 %v596
      %v636 = vunpack.c.l.b16 %v597
      %v637 = vunpack.c.l.b16 %v598
      %v638 = vunpack.c.l.b16 %v599
      %v639 = vunpack.c.l.b16 %v600
      %v640 = vunpack.c.l.b16 %v601
      %v641 = vunpack.c.l.b16 %v602
      %v642 = vunpack.c.l.b16 %v603
      %v643 = vunpack.c.l.b16 %v604
      %v644 = vunpack.c.l.b16 %v605
      %v645 = vunpack.c.l.b16 %v606
      %v646 = vunpack.c.l.b16 %v607
      %v647 = vpack.c.b16 %v632, %v631
      %v648 = vpack.c.b16 %v634, %v633
      %v649 = vpack.c.b16 %v636, %v635
      %v650 = vpack.c.b16 %v638, %v637
      %v651 = vpack.c.b16 %v640, %v639
      %v652 = vpack.c.b16 %v642, %v641
      %v653 = vpack.c.b16 %v644, %v643
      %v654 = vpack.c.b16 %v646, %v645
      %663 = vmatprep.subr.bf16.mxu0 0
      %664 = vmatpush1.bf16.msra.mxu0 %v647
      %665 = vmatprep.subr.bf16.mxu0 0
      %666 = vmatpush1.bf16.msra.mxu0 %v648
      %667 = vmatprep.subr.bf16.mxu0 0
      %668 = vmatpush1.bf16.msra.mxu0 %v649
      %669 = vmatprep.subr.bf16.mxu0 0
      %670 = vmatpush1.bf16.msra.mxu0 %v650
      %671 = vmatprep.subr.bf16.mxu0 0
      %672 = vmatpush1.bf16.msra.mxu0 %v651
      %673 = vmatprep.subr.bf16.mxu0 0
      %674 = vmatpush1.bf16.msra.mxu0 %v652
      %675 = vmatprep.subr.bf16.mxu0 0
      %676 = vmatpush1.bf16.msra.mxu0 %v653
      %677 = vmatprep.subr.bf16.mxu0 0
      %678 = vmatpush1.bf16.msra.mxu0 %v654
      %679 = vmatprep.subr.bf16.mxu0 0
      %680 = vmatpush1.bf16.msra.mxu0 0
      %681 = vmatprep.subr.bf16.mxu0 0
      %682 = vmatpush1.bf16.msra.mxu0 0
      %683 = vmatprep.subr.bf16.mxu0 0
      %684 = vmatpush1.bf16.msra.mxu0 0
      %685 = vmatprep.subr.bf16.mxu0 0
      %686 = vmatpush1.bf16.msra.mxu0 0
      %687 = vmatprep.subr.bf16.mxu0 0
      %688 = vmatpush1.bf16.msra.mxu0 0
      %689 = vmatprep.subr.bf16.mxu0 0
      %690 = vmatpush1.bf16.msra.mxu0 0
      %691 = vmatprep.subr.bf16.mxu0 0
      %692 = vmatpush1.bf16.msra.mxu0 0
      %693 = vmatprep.subr.bf16.mxu0 0
      %694 = vmatpush1.bf16.msra.mxu0 0
      %695 = vmatprep.mubr.bf16.mxu0 0
      %696 = vmatmul.mubr.bf16.gmra.mrb[0].mxu0 %v588
      %v697 = vpop.f32.mrb[0].mxu0
      %v698 = vadd.f32 %v613, %v697
      %v699 = vpop.f32.mrb[0].mxu0
      %v700 = vpop.f32.mrb[0].mxu0
      %v701 = vadd.f32 %v613, %v700
      %v702 = vpop.f32.mrb[0].mxu0
      %703 = vmatprep.mubr.bf16.mxu0 0
      %704 = vmatmul.mubr.bf16.gmra.mrb[0].mxu0 %v589
      %v705 = vpop.f32.mrb[0].mxu0
      %v706 = vadd.f32 %v613, %v705
      %v707 = vpop.f32.mrb[0].mxu0
      %v708 = vpop.f32.mrb[0].mxu0
      %v709 = vadd.f32 %v613, %v708
      %v710 = vpop.f32.mrb[0].mxu0
      %711 = vmatprep.mubr.bf16.mxu0 0
      %712 = vmatmul.mubr.bf16.gmra.mrb[0].mxu0 %v590
      %v713 = vpop.f32.mrb[0].mxu0
      %v714 = vadd.f32 %v613, %v713
      %v715 = vpop.f32.mrb[0].mxu0
      %v716 = vpop.f32.mrb[0].mxu0
      %v717 = vadd.f32 %v613, %v716
      %v718 = vpop.f32.mrb[0].mxu0
      %719 = vmatprep.mubr.bf16.mxu0 0
      %720 = vmatmul.mubr.bf16.gmra.mrb[0].mxu0 %v591
      %v721 = vpop.f32.mrb[0].mxu0
      %v722 = vadd.f32 %v613, %v721
      %v723 = vpop.f32.mrb[0].mxu0
      %v724 = vpop.f32.mrb[0].mxu0
      %v725 = vadd.f32 %v613, %v724
      %v726 = vpop.f32.mrb[0].mxu0
      %727 = vdwg.mxu0
      %v728 = vmax.f32 %v698, 0.0
      %v729 = vmax.f32 %v701, 0.0
      %v730 = vmax.f32 %v706, 0.0
      %v731 = vmax.f32 %v709, 0.0
      %v732 = vmax.f32 %v714, 0.0
      %v733 = vmax.f32 %v717, 0.0
      %v734 = vmax.f32 %v722, 0.0
      %v735 = vmax.f32 %v725, 0.0
      %v736 = vpack.c.bf16 %v729, %v728
      %v737 = vpack.c.bf16 %v731, %v730
      %v738 = vpack.c.bf16 %v733, %v732
      %v739 = vpack.c.bf16 %v735, %v734
      %v744 = vunpack.c.l.b16 %v736
      %v745 = vunpack.c.h.b16 %v736
      %v746 = vunpack.c.l.b16 %v737
      %v747 = vunpack.c.h.b16 %v737
      %v748 = vunpack.c.l.b16 %v738
      %v749 = vunpack.c.h.b16 %v738
      %v750 = vunpack.c.l.b16 %v739
      %v751 = vunpack.c.h.b16 %v739
      %v752 = vpack.c.b16 %v744, %v744
      %v753 = vpack.c.b16 %v745, %v745
      %v754 = vpack.c.b16 %v746, %v746
      %v755 = vpack.c.b16 %v747, %v747
      %v756 = vpack.c.b16 %v748, %v748
      %v757 = vpack.c.b16 %v749, %v749
      %v758 = vpack.c.b16 %v750, %v750
      %v759 = vpack.c.b16 %v751, %v751
      %768 = vst [vmem:[%s224] sm:$0xf] %v752
      %769 = vst [vmem:[%s224 + $0x4] sm:$0xf] %v753
      %770 = vst [vmem:[%s224 + $0x8] sm:$0xf] %v754
      %771 = vst [vmem:[%s224 + $0xc] sm:$0xf] %v755
      %772 = vst [vmem:[%s224 + $0x10] sm:$0xf] %v756
      %773 = vst [vmem:[%s224 + $0x14] sm:$0xf] %v757
      %774 = vst [vmem:[%s224 + $0x18] sm:$0xf] %v758
      %775 = vst [vmem:[%s224 + $0x1c] sm:$0xf] %v759
      %p776 = scmp.lt.s32.totalorder %s16, 1
      %s777 = scalar_select %p776, %s16, 1
      %s778 = smul.addr %s777, 8
      %s779 = smul.addr %s778, 4
      %s780 = scalar_lea.vmem %s5, %s779
      // Predicated region
      $region41: #{mobilenet_forward.6} parent=39 // pred_check
        %p781 = pneg %p144
      $region42: #{mobilenet_forward.6} parent=39 // pred_check_branch
        %783 = sbr.rel (%p781) target = $region44
      $region43: #{mobilenet_forward.6} parent=39 // pred_region
        _
      $region44: #{mobilenet_forward.6} parent=39 // pred_fallthru
        _
    $region40: #{mobilenet_forward.6} parent=5 // pred_fallthru
      _
    %p784 = scmp.le.s32.totalorder 2, %s11
    // Predicated region
    $region45: #{mobilenet_forward.6} parent=5 // pred_check
      %p785 = pneg %p784
    $region46: #{mobilenet_forward.6} parent=5 // pred_check_branch
      %787 = sbr.rel (%p785) target = $region48
    $region47: #{mobilenet_forward.6} parent=5 // pred_region
      %s788 = ssub.s32 %s11, 2
      // Predicated region
      $region49: #{mobilenet_forward.6} parent=47 // pred_check
        %p789 = pneg %p150
      $region50: #{mobilenet_forward.6} parent=47 // pred_check_branch
        %791 = sbr.rel (%p789) target = $region52
      $region51: #{mobilenet_forward.6} parent=47 // pred_region
        %p792 = scmp.lt.s32.totalorder %s17, 1
        %s793 = scalar_select %p792, %s17, 1
        %s794 = smul.addr %s793, 8
        %s795 = smul.addr %s794, 4
        %s796 = scalar_lea.vmem %s5, %s795
      $region52: #{mobilenet_forward.6} parent=47 // pred_fallthru
        _
    $region48: #{mobilenet_forward.6} parent=5 // pred_fallthru
      _
  $region6: #{mobilenet_forward.6} parent=0 // loop_footer
    %s15 = sadd.s32 1, %s11
  $region7: #{mobilenet_forward.6} parent=0 // loop_footer_branch
    %10 = sbr.rel target = $region3
  $region8: #{mobilenet_forward.6} parent=0 // loop_exit
    _

// kernel: mobilenet_forward.5
$region0: #{mobilenet_forward.5}
  #allocation0 [shape = 'u32[]', space=smem, size = 0x4, offset = 0x4, fixed_abs, tag = 'smem constant byte address 0x4 - core index']
  #allocation1 [shape = 'u32[144,128]{1,0:T(1,128)}', space=vmem, size = 0x12000, scoped, tag = 'internal scratch']
  %s0 = inlined_call_operand.vmem [shape: bf16[2,36,9,128], index: 0, kind: input, shape index: {}]
  %s1 = inlined_call_operand.vmem [shape: bf16[1152,128], index: 1, kind: input, shape index: {}]
  %s2 = inlined_call_operand.vmem [shape: f32[1,128], index: 2, kind: input, shape index: {}]
  %s3 = inlined_call_operand.vmem [shape: bf16[2,64,128], index: 3, kind: output, shape index: {}]
  %s4 = sld [smem:[#allocation0]]
  $region45: #{mobilenet_forward.5} parent=0
    _
  %s6 = ssub.s32 1, %s4
  %s7 = scalar_select 0, %s6, %s4
  loop: start=0, step=1, limit=4
  $region2: #{mobilenet_forward.5} parent=0 // loop_pre_header
    _
  $region3: #{mobilenet_forward.5} parent=0 // loop_header
    %s9 = sphi 0, %s13
    %p10 = scmp.ge.s32.totalorder %s9, 4
    %s19 = sphi 0, %s21
    %s22 = sphi 0, %s19
    %s23 = sphi 0, %s22
    %s39 = sphi 0, %s23
    %s43 = sphi 0, %s43
    %s45 = sphi 0, %s43
    %s46 = sphi 0, %s45
    %s60 = sphi 0, %s46
    %s64 = sphi 0, %s64
    %s66 = sphi 0, %s64
    %s67 = sphi 0, %s66
    %s81 = sphi 0, %s67
    %s87 = sphi 0, %s89
    %s90 = sphi 0, %s87
    %s91 = sphi 0, %s90
    %s107 = sphi 0, %s91
  $region4: #{mobilenet_forward.5} parent=0 // loop_header_branch
    %12 = sbr.rel (%p10) target = $region8
  $region5: #{mobilenet_forward.5} parent=0 // loop_body
    %s14 = ssub.s32 %s9, 1
    %s15 = ssub.s32 %s9, 2
    %s16 = sadd.s32 %s9, 1
    %s17 = ssub.s32 %s9, %s16
    %p18 = scmp.eq.s32.totalorder %s17, 0
    %s20 = sadd.s32 %s19, 1
    %s21 = scalar_select %p18, %s19, %s20
    %p24 = pneg %p18
    %p25 = scmp.eq.s32.totalorder %s9, 1
    %p26 = por %p24, %p25
    %p27 = scmp.ne.s32.totalorder %s19, %s22
    %p28 = scmp.eq.s32.totalorder %s9, 0
    %p29 = por %p27, %p28
    %p30 = scmp.ne.s32.totalorder %s19, %s22
    %p31 = scmp.eq.s32.totalorder %s14, 1
    %p32 = por %p30, %p31
    %p33 = scmp.ne.s32.totalorder %s22, %s23
    %p34 = scmp.eq.s32.totalorder %s14, 0
    %p35 = por %p33, %p34
    %p36 = scmp.ne.s32.totalorder %s22, %s23
    %p37 = scmp.eq.s32.totalorder %s15, 1
    %p38 = por %p36, %p37
    %p40 = scmp.ne.s32.totalorder %s23, %s39
    %p41 = scmp.eq.s32.totalorder %s15, 0
    %p42 = por %p40, %p41
    %s44 = sadd.s32 %s43, 1
    %p47 = scmp.eq.s32.totalorder %s9, 1
    %p48 = scmp.ne.s32.totalorder %s43, %s45
    %p49 = scmp.eq.s32.totalorder %s9, 0
    %p50 = por %p48, %p49
    %p51 = scmp.ne.s32.totalorder %s43, %s45
    %p52 = scmp.eq.s32.totalorder %s14, 1
    %p53 = por %p51, %p52
    %p54 = scmp.ne.s32.totalorder %s45, %s46
    %p55 = scmp.eq.s32.totalorder %s14, 0
    %p56 = por %p54, %p55
    %p57 = scmp.ne.s32.totalorder %s45, %s46
    %p58 = scmp.eq.s32.totalorder %s15, 1
    %p59 = por %p57, %p58
    %p61 = scmp.ne.s32.totalorder %s46, %s60
    %p62 = scmp.eq.s32.totalorder %s15, 0
    %p63 = por %p61, %p62
    %s65 = sadd.s32 %s64, 1
    %p68 = scmp.eq.s32.totalorder %s9, 1
    %p69 = scmp.ne.s32.totalorder %s64, %s66
    %p70 = scmp.eq.s32.totalorder %s9, 0
    %p71 = por %p69, %p70
    %p72 = scmp.ne.s32.totalorder %s64, %s66
    %p73 = scmp.eq.s32.totalorder %s14, 1
    %p74 = por %p72, %p73
    %p75 = scmp.ne.s32.totalorder %s66, %s67
    %p76 = scmp.eq.s32.totalorder %s14, 0
    %p77 = por %p75, %p76
    %p78 = scmp.ne.s32.totalorder %s66, %s67
    %p79 = scmp.eq.s32.totalorder %s15, 1
    %p80 = por %p78, %p79
    %p82 = scmp.ne.s32.totalorder %s67, %s81
    %p83 = scmp.eq.s32.totalorder %s15, 0
    %p84 = por %p82, %p83
    %s85 = ssub.s32 %s9, %s16
    %p86 = scmp.eq.s32.totalorder %s85, 0
    %s88 = sadd.s32 %s87, 1
    %s89 = scalar_select %p86, %s87, %s88
    %p92 = pneg %p86
    %p93 = scmp.eq.s32.totalorder %s9, 1
    %p94 = por %p92, %p93
    %p95 = scmp.ne.s32.totalorder %s87, %s90
    %p96 = scmp.eq.s32.totalorder %s9, 0
    %p97 = por %p95, %p96
    %p98 = scmp.ne.s32.totalorder %s87, %s90
    %p99 = scmp.eq.s32.totalorder %s14, 1
    %p100 = por %p98, %p99
    %p101 = scmp.ne.s32.totalorder %s90, %s91
    %p102 = scmp.eq.s32.totalorder %s14, 0
    %p103 = por %p101, %p102
    %p104 = scmp.ne.s32.totalorder %s90, %s91
    %p105 = scmp.eq.s32.totalorder %s15, 1
    %p106 = por %p104, %p105
    %p108 = scmp.ne.s32.totalorder %s91, %s107
    %p109 = scmp.eq.s32.totalorder %s15, 0
    %p110 = por %p108, %p109
    %p111 = scmp.le.s32.totalorder 1, %s9
    %p112 = scmp.lt.s32.totalorder %s9, 3
    %p113 = pnand %p111, %p112
    %p114 = pneg %p113
    // Predicated region
    $region9: #{mobilenet_forward.5} parent=5 // pred_check
      _
    $region10: #{mobilenet_forward.5} parent=5 // pred_check_branch
      %116 = sbr.rel (%p113) target = $region12
    $region11: #{mobilenet_forward.5} parent=5 // pred_region
      %s117 = ssub.s32 %s9, 1
      // Predicated region
      $region13: #{mobilenet_forward.5} parent=11 // pred_check
        %p118 = pneg %p56
      $region14: #{mobilenet_forward.5} parent=11 // pred_check_branch
        %120 = sbr.rel (%p118) target = $region16
      $region15: #{mobilenet_forward.5} parent=11 // pred_region
        _
      $region16: #{mobilenet_forward.5} parent=11 // pred_fallthru
        _
      // Predicated region
      $region17: #{mobilenet_forward.5} parent=11 // pred_check
        %p121 = pneg %p77
      $region18: #{mobilenet_forward.5} parent=11 // pred_check_branch
        %123 = sbr.rel (%p121) target = $region20
      $region19: #{mobilenet_forward.5} parent=11 // pred_region
        _
      $region20: #{mobilenet_forward.5} parent=11 // pred_fallthru
        _
    $region12: #{mobilenet_forward.5} parent=5 // pred_fallthru
      _
    %p124 = scmp.lt.s32.totalorder %s9, 2
    // Predicated region
    $region21: #{mobilenet_forward.5} parent=5 // pred_check
      %p125 = pneg %p124
    $region22: #{mobilenet_forward.5} parent=5 // pred_check_branch
      %127 = sbr.rel (%p125) target = $region24
    $region23: #{mobilenet_forward.5} parent=5 // pred_region
      // Predicated region
      $region25: #{mobilenet_forward.5} parent=23 // pred_check
        %p128 = pneg %p29
      $region26: #{mobilenet_forward.5} parent=23 // pred_check_branch
        %130 = sbr.rel (%p128) target = $region28
      $region27: #{mobilenet_forward.5} parent=23 // pred_region
        %p131 = scmp.lt.s32.totalorder %s9, 1
        %s132 = scalar_select %p131, %s9, 1
        %s133 = smul.addr %s132, 72
        %s134 = smul.addr %s133, 4
        %s135 = scalar_lea.vmem %s0, %s134
      $region28: #{mobilenet_forward.5} parent=23 // pred_fallthru
        _
    $region24: #{mobilenet_forward.5} parent=5 // pred_fallthru
      _
    %p136 = scmp.le.s32.totalorder 1, %s9
    %p137 = scmp.lt.s32.totalorder %s9, 3
    %p138 = pnand %p136, %p137
    %p139 = pneg %p138
    // Predicated region
    $region29: #{mobilenet_forward.5} parent=5 // pred_check
      _
    $region30: #{mobilenet_forward.5} parent=5 // pred_check_branch
      %141 = sbr.rel (%p138) target = $region32
    $region31: #{mobilenet_forward.5} parent=5 // pred_region
      %s142 = ssub.s32 %s9, 1
      %p143 = scmp.lt.s32.totalorder %s14, 1
      %s144 = scalar_select %p143, %s14, 1
      %s145 = smul.addr %s144, 72
      %s146 = smul.addr %s145, 4
      %s147 = scalar_lea.vmem %s0, %s146
      %p148 = pneg %p35
      %p149 = pneg %p32
      %p150 = pneg %p56
      %p151 = pneg %p53
      %p152 = pneg %p77
      %p153 = pneg %p74
      %p154 = pneg %p103
      %p155 = pneg %p100
      %p156 = scmp.lt.s32.totalorder %s14, 1
      %s157 = scalar_select %p156, %s14, 1
      %s158 = smul.addr %s157, 8
      %s159 = smul.addr %s158, 4
      %s160 = scalar_lea.vmem %s3, %s159
      %p161 = scmp.lt.s32.totalorder %s14, 1
      %s162 = scalar_select %p161, %s14, 1
      %s163 = smul.addr %s162, 72
      %s164 = smul.addr %s163, 4
      %s165 = scalar_lea.vmem %s0, %s164
      %p166 = scmp.lt.s32.totalorder %s14, 1
      %s167 = scalar_select %p166, %s14, 1
      %s168 = smul.addr %s167, 8
      %s169 = smul.addr %s168, 4
      %s170 = scalar_lea.vmem %s3, %s169
      %v172 = vld [vmem:[%s165] sm:$0xf]
      %v173 = vld [vmem:[%s165 + $0x8] sm:$0xf]
      %v174 = vld [vmem:[%s165 + $0x10] sm:$0xf]
      %v175 = vld [vmem:[%s165 + $0x18] sm:$0xf]
      %v176 = vld [vmem:[%s165 + $0x20] sm:$0xf]
      %v177 = vld [vmem:[%s165 + $0x28] sm:$0xf]
      %v178 = vld [vmem:[%s165 + $0x30] sm:$0xf]
      %v179 = vld [vmem:[%s165 + $0x38] sm:$0xf]
      %s180 = scalar_lea.vmem %s165, 72
      %v181 = vld [vmem:[%s180] sm:$0xf]
      %v182 = vld [vmem:[%s180 + $0x8] sm:$0xf]
      %v183 = vld [vmem:[%s180 + $0x10] sm:$0xf]
      %v184 = vld [vmem:[%s180 + $0x18] sm:$0xf]
      %v185 = vld [vmem:[%s180 + $0x20] sm:$0xf]
      %v186 = vld [vmem:[%s180 + $0x28] sm:$0xf]
      %v187 = vld [vmem:[%s180 + $0x30] sm:$0xf]
      %v188 = vld [vmem:[%s180 + $0x38] sm:$0xf]
      %v189 = vld [vmem:[%s165 + $0x4] sm:$0x1]
      %v190 = vld [vmem:[%s165 + $0xc] sm:$0x1]
      %v191 = vld [vmem:[%s165 + $0x14] sm:$0x1]
      %v192 = vld [vmem:[%s165 + $0x1c] sm:$0x1]
      %v193 = vld [vmem:[%s165 + $0x24] sm:$0x1]
      %v194 = vld [vmem:[%s165 + $0x2c] sm:$0x1]
      %v195 = vld [vmem:[%s165 + $0x34] sm:$0x1]
      %v196 = vld [vmem:[%s165 + $0x3c] sm:$0x1]
      %s197 = scalar_lea.vmem %s165, 144
      %v198 = vld [vmem:[%s197] sm:$0xf]
      %v199 = vld [vmem:[%s197 + $0x8] sm:$0xf]
      %v200 = vld [vmem:[%s197 + $0x10] sm:$0xf]
      %v201 = vld [vmem:[%s197 + $0x18] sm:$0xf]
      %v202 = vld [vmem:[%s197 + $0x20] sm:$0xf]
      %v203 = vld [vmem:[%s197 + $0x28] sm:$0xf]
      %v204 = vld [vmem:[%s197 + $0x30] sm:$0xf]
      %v205 = vld [vmem:[%s197 + $0x38] sm:$0xf]
      %s206 = scalar_lea.vmem %s165, 216
      %v207 = vld [vmem:[%s206] sm:$0xf]
      %v208 = vld [vmem:[%s206 + $0x8] sm:$0xf]
      %v209 = vld [vmem:[%s206 + $0x10] sm:$0xf]
      %v210 = vld [vmem:[%s206 + $0x18] sm:$0xf]
      %v211 = vld [vmem:[%s206 + $0x20] sm:$0xf]
      %v212 = vld [vmem:[%s206 + $0x28] sm:$0xf]
      %v213 = vld [vmem:[%s206 + $0x30] sm:$0xf]
      %v214 = vld [vmem:[%s206 + $0x38] sm:$0xf]
      %v215 = vld [vmem:[%s197 + $0x4] sm:$0x1]
      %v216 = vld [vmem:[%s197 + $0xc] sm:$0x1]
      %v217 = vld [vmem:[%s197 + $0x14] sm:$0x1]
      %v218 = vld [vmem:[%s197 + $0x1c] sm:$0x1]
      %v219 = vld [vmem:[%s197 + $0x24] sm:$0x1]
      %v220 = vld [vmem:[%s197 + $0x2c] sm:$0x1]
      %v221 = vld [vmem:[%s197 + $0x34] sm:$0x1]
      %v222 = vld [vmem:[%s197 + $0x3c] sm:$0x1]
      %s223 = scalar_lea.vmem %s165, 8
      %v224 = vld [vmem:[%s223] sm:$0xf]
      %v225 = vld [vmem:[%s223 + $0x8] sm:$0xf]
      %v226 = vld [vmem:[%s223 + $0x10] sm:$0xf]
      %v227 = vld [vmem:[%s223 + $0x18] sm:$0xf]
      %v228 = vld [vmem:[%s223 + $0x20] sm:$0xf]
      %v229 = vld [vmem:[%s223 + $0x28] sm:$0xf]
      %v230 = vld [vmem:[%s223 + $0x30] sm:$0xf]
      %v231 = vld [vmem:[%s223 + $0x38] sm:$0xf]
      %s232 = scalar_lea.vmem %s165, 80
      %v233 = vld [vmem:[%s232] sm:$0xf]
      %v234 = vld [vmem:[%s232 + $0x8] sm:$0xf]
      %v235 = vld [vmem:[%s232 + $0x10] sm:$0xf]
      %v236 = vld [vmem:[%s232 + $0x18] sm:$0xf]
      %v237 = vld [vmem:[%s232 + $0x20] sm:$0xf]
      %v238 = vld [vmem:[%s232 + $0x28] sm:$0xf]
      %v239 = vld [vmem:[%s232 + $0x30] sm:$0xf]
      %v240 = vld [vmem:[%s232 + $0x38] sm:$0xf]
      %v241 = vld [vmem:[%s223 + $0x4] sm:$0x1]
      %v242 = vld [vmem:[%s223 + $0xc] sm:$0x1]
      %v243 = vld [vmem:[%s223 + $0x14] sm:$0x1]
      %v244 = vld [vmem:[%s223 + $0x1c] sm:$0x1]
      %v245 = vld [vmem:[%s223 + $0x24] sm:$0x1]
      %v246 = vld [vmem:[%s223 + $0x2c] sm:$0x1]
      %v247 = vld [vmem:[%s223 + $0x34] sm:$0x1]
      %v248 = vld [vmem:[%s223 + $0x3c] sm:$0x1]
      %v265 = vunpack.c.l.b16 %v172
      %v266 = vunpack.c.l.b16 %v189
      %v267 = vunpack.c.l.b16 %v173
      %v268 = vunpack.c.l.b16 %v190
      %v269 = vunpack.c.l.b16 %v174
      %v270 = vunpack.c.l.b16 %v191
      %v271 = vunpack.c.l.b16 %v175
      %v272 = vunpack.c.l.b16 %v192
      %v273 = vunpack.c.l.b16 %v176
      %v274 = vunpack.c.l.b16 %v193
      %v275 = vunpack.c.l.b16 %v177
      %v276 = vunpack.c.l.b16 %v194
      %v277 = vunpack.c.l.b16 %v178
      %v278 = vunpack.c.l.b16 %v195
      %v279 = vunpack.c.l.b16 %v179
      %v280 = vunpack.c.l.b16 %v196
      %v281 = vpack.c.b16 %v266, %v265
      %v282 = vpack.c.b16 %v268, %v267
      %v283 = vpack.c.b16 %v270, %v269
      %v284 = vpack.c.b16 %v272, %v271
      %v285 = vpack.c.b16 %v274, %v273
      %v286 = vpack.c.b16 %v276, %v275
      %v287 = vpack.c.b16 %v278, %v277
      %v288 = vpack.c.b16 %v280, %v279
      %v290 = vshrl.u32 %v281, 16
      %v292 = vshll.u32 %v281, 16
      %v294 = vrot.slane %v292, 1
      %v295 = vor.u32 %v290, %v294
      %v297 = vshrl.u32 %v282, 16
      %v299 = vshll.u32 %v282, 16
      %v301 = vrot.slane %v299, 1
      %v302 = vor.u32 %v297, %v301
      %v304 = vshrl.u32 %v283, 16
      %v306 = vshll.u32 %v283, 16
      %v308 = vrot.slane %v306, 1
      %v309 = vor.u32 %v304, %v308
      %v311 = vshrl.u32 %v284, 16
      %v313 = vshll.u32 %v284, 16
      %v315 = vrot.slane %v313, 1
      %v316 = vor.u32 %v311, %v315
      %v318 = vshrl.u32 %v285, 16
      %v320 = vshll.u32 %v285, 16
      %v322 = vrot.slane %v320, 1
      %v323 = vor.u32 %v318, %v322
      %v325 = vshrl.u32 %v286, 16
      %v327 = vshll.u32 %v286, 16
      %v329 = vrot.slane %v327, 1
      %v330 = vor.u32 %v325, %v329
      %v332 = vshrl.u32 %v287, 16
      %v334 = vshll.u32 %v287, 16
      %v336 = vrot.slane %v334, 1
      %v337 = vor.u32 %v332, %v336
      %v339 = vshrl.u32 %v288, 16
      %v341 = vshll.u32 %v288, 16
      %v343 = vrot.slane %v341, 1
      %v344 = vor.u32 %v339, %v343
      %v361 = vunpack.c.l.b16 %v198
      %v362 = vunpack.c.l.b16 %v215
      %v363 = vunpack.c.l.b16 %v199
      %v364 = vunpack.c.l.b16 %v216
      %v365 = vunpack.c.l.b16 %v200
      %v366 = vunpack.c.l.b16 %v217
      %v367 = vunpack.c.l.b16 %v201
      %v368 = vunpack.c.l.b16 %v218
      %v369 = vunpack.c.l.b16 %v202
      %v370 = vunpack.c.l.b16 %v219
      %v371 = vunpack.c.l.b16 %v203
      %v372 = vunpack.c.l.b16 %v220
      %v373 = vunpack.c.l.b16 %v204
      %v374 = vunpack.c.l.b16 %v221
      %v375 = vunpack.c.l.b16 %v205
      %v376 = vunpack.c.l.b16 %v222
      %v377 = vpack.c.b16 %v362, %v361
      %v378 = vpack.c.b16 %v364, %v363
      %v379 = vpack.c.b16 %v366, %v365
      %v380 = vpack.c.b16 %v368, %v367
      %v381 = vpack.c.b16 %v370, %v369
      %v382 = vpack.c.b16 %v372, %v371
      %v383 = vpack.c.b16 %v374, %v373
      %v384 = vpack.c.b16 %v376, %v375
      %v386 = vshrl.u32 %v377, 16
      %v388 = vshll.u32 %v377, 16
      %v390 = vrot.slane %v388, 1
      %v391 = vor.u32 %v386, %v390
      %v393 = vshrl.u32 %v378, 16
      %v395 = vshll.u32 %v378, 16
      %v397 = vrot.slane %v395, 1
      %v398 = vor.u32 %v393, %v397
      %v400 = vshrl.u32 %v379, 16
      %v402 = vshll.u32 %v379, 16
      %v404 = vrot.slane %v402, 1
      %v405 = vor.u32 %v400, %v404
      %v407 = vshrl.u32 %v380, 16
      %v409 = vshll.u32 %v380, 16
      %v411 = vrot.slane %v409, 1
      %v412 = vor.u32 %v407, %v411
      %v414 = vshrl.u32 %v381, 16
      %v416 = vshll.u32 %v381, 16
      %v418 = vrot.slane %v416, 1
      %v419 = vor.u32 %v414, %v418
      %v421 = vshrl.u32 %v382, 16
      %v423 = vshll.u32 %v382, 16
      %v425 = vrot.slane %v423, 1
      %v426 = vor.u32 %v421, %v425
      %v428 = vshrl.u32 %v383, 16
      %v430 = vshll.u32 %v383, 16
      %v432 = vrot.slane %v430, 1
      %v433 = vor.u32 %v428, %v432
      %v435 = vshrl.u32 %v384, 16
      %v437 = vshll.u32 %v384, 16
      %v439 = vrot.slane %v437, 1
      %v440 = vor.u32 %v435, %v439
      %v457 = vunpack.c.l.b16 %v224
      %v458 = vunpack.c.l.b16 %v241
      %v459 = vunpack.c.l.b16 %v225
      %v460 = vunpack.c.l.b16 %v242
      %v461 = vunpack.c.l.b16 %v226
      %v462 = vunpack.c.l.b16 %v243
      %v463 = vunpack.c.l.b16 %v227
      %v464 = vunpack.c.l.b16 %v244
      %v465 = vunpack.c.l.b16 %v228
      %v466 = vunpack.c.l.b16 %v245
      %v467 = vunpack.c.l.b16 %v229
      %v468 = vunpack.c.l.b16 %v246
      %v469 = vunpack.c.l.b16 %v230
      %v470 = vunpack.c.l.b16 %v247
      %v471 = vunpack.c.l.b16 %v231
      %v472 = vunpack.c.l.b16 %v248
      %v473 = vpack.c.b16 %v458, %v457
      %v474 = vpack.c.b16 %v460, %v459
      %v475 = vpack.c.b16 %v462, %v461
      %v476 = vpack.c.b16 %v464, %v463
      %v477 = vpack.c.b16 %v466, %v465
      %v478 = vpack.c.b16 %v468, %v467
      %v479 = vpack.c.b16 %v470, %v469
      %v480 = vpack.c.b16 %v472, %v471
      %v482 = vshrl.u32 %v473, 16
      %v484 = vshll.u32 %v473, 16
      %v486 = vrot.slane %v484, 1
      %v487 = vor.u32 %v482, %v486
      %v489 = vshrl.u32 %v474, 16
      %v491 = vshll.u32 %v474, 16
      %v493 = vrot.slane %v491, 1
      %v494 = vor.u32 %v489, %v493
      %v496 = vshrl.u32 %v475, 16
      %v498 = vshll.u32 %v475, 16
      %v500 = vrot.slane %v498, 1
      %v501 = vor.u32 %v496, %v500
      %v503 = vshrl.u32 %v476, 16
      %v505 = vshll.u32 %v476, 16
      %v507 = vrot.slane %v505, 1
      %v508 = vor.u32 %v503, %v507
      %v510 = vshrl.u32 %v477, 16
      %v512 = vshll.u32 %v477, 16
      %v514 = vrot.slane %v512, 1
      %v515 = vor.u32 %v510, %v514
      %v517 = vshrl.u32 %v478, 16
      %v519 = vshll.u32 %v478, 16
      %v521 = vrot.slane %v519, 1
      %v522 = vor.u32 %v517, %v521
      %v524 = vshrl.u32 %v479, 16
      %v526 = vshll.u32 %v479, 16
      %v528 = vrot.slane %v526, 1
      %v529 = vor.u32 %v524, %v528
      %v531 = vshrl.u32 %v480, 16
      %v533 = vshll.u32 %v480, 16
      %v535 = vrot.slane %v533, 1
      %v536 = vor.u32 %v531, %v535
      %v561 = vunpack.c.l.b16 %v181
      %v562 = vunpack.c.l.b16 %v295
      %v563 = vunpack.c.l.b16 %v207
      %v564 = vunpack.c.l.b16 %v391
      %v565 = vunpack.c.l.b16 %v233
      %v566 = vunpack.c.l.b16 %v487
      %v567 = vunpack.c.l.b16 %v182
      %v568 = vunpack.c.l.b16 %v302
      %v569 = vunpack.c.l.b16 %v208
      %v570 = vunpack.c.l.b16 %v398
      %v571 = vunpack.c.l.b16 %v234
      %v572 = vunpack.c.l.b16 %v494
      %v573 = vunpack.c.l.b16 %v183
      %v574 = vunpack.c.l.b16 %v309
      %v575 = vunpack.c.l.b16 %v209
      %v576 = vunpack.c.l.b16 %v405
      %v577 = vunpack.c.l.b16 %v235
      %v578 = vunpack.c.l.b16 %v501
      %v579 = vunpack.c.l.b16 %v184
      %v580 = vunpack.c.l.b16 %v316
      %v581 = vunpack.c.l.b16 %v210
      %v582 = vunpack.c.l.b16 %v412
      %v583 = vunpack.c.l.b16 %v236
      %v584 = vunpack.c.l.b16 %v508
      %v585 = vunpack.c.l.b16 %v185
      %v586 = vunpack.c.l.b16 %v323
      %v587 = vunpack.c.l.b16 %v211
      %v588 = vunpack.c.l.b16 %v419
      %v589 = vunpack.c.l.b16 %v237
      %v590 = vunpack.c.l.b16 %v515
      %v591 = vunpack.c.l.b16 %v186
      %v592 = vunpack.c.l.b16 %v330
      %v593 = vunpack.c.l.b16 %v212
      %v594 = vunpack.c.l.b16 %v426
      %v595 = vunpack.c.l.b16 %v238
      %v596 = vunpack.c.l.b16 %v522
      %v597 = vunpack.c.l.b16 %v187
      %v598 = vunpack.c.l.b16 %v337
      %v599 = vunpack.c.l.b16 %v213
      %v600 = vunpack.c.l.b16 %v433
      %v601 = vunpack.c.l.b16 %v239
      %v602 = vunpack.c.l.b16 %v529
      %v603 = vunpack.c.l.b16 %v188
      %v604 = vunpack.c.l.b16 %v344
      %v605 = vunpack.c.l.b16 %v214
      %v606 = vunpack.c.l.b16 %v440
      %v607 = vunpack.c.l.b16 %v240
      %v608 = vunpack.c.l.b16 %v536
      %v609 = vld [vmem:[%s1] sm:$0xf]
      %v610 = vld [vmem:[%s1 + $0x4] sm:$0xf]
      %v611 = vld [vmem:[%s1 + $0x8] sm:$0xf]
      %v612 = vld [vmem:[%s1 + $0xc] sm:$0xf]
      %v613 = vld [vmem:[%s1 + $0x10] sm:$0xf]
      %v614 = vld [vmem:[%s1 + $0x14] sm:$0xf]
      %v615 = vld [vmem:[%s1 + $0x18] sm:$0xf]
      %v616 = vld [vmem:[%s1 + $0x1c] sm:$0xf]
      %v617 = vld [vmem:[%s1 + $0x20] sm:$0xf]
      %v618 = vld [vmem:[%s1 + $0x24] sm:$0xf]
      %v619 = vld [vmem:[%s1 + $0x28] sm:$0xf]
      %v620 = vld [vmem:[%s1 + $0x2c] sm:$0xf]
      %v621 = vld [vmem:[%s1 + $0x30] sm:$0xf]
      %v622 = vld [vmem:[%s1 + $0x34] sm:$0xf]
      %v623 = vld [vmem:[%s1 + $0x38] sm:$0xf]
      %v624 = vld [vmem:[%s1 + $0x3c] sm:$0xf]
      %v625 = vld [vmem:[%s1 + $0x40] sm:$0xf]
      %v626 = vld [vmem:[%s1 + $0x44] sm:$0xf]
      %v627 = vld [vmem:[%s1 + $0x48] sm:$0xf]
      %v628 = vld [vmem:[%s1 + $0x4c] sm:$0xf]
      %v629 = vld [vmem:[%s1 + $0x50] sm:$0xf]
      %v630 = vld [vmem:[%s1 + $0x54] sm:$0xf]
      %v631 = vld [vmem:[%s1 + $0x58] sm:$0xf]
      %v632 = vld [vmem:[%s1 + $0x5c] sm:$0xf]
      %v633 = vld [vmem:[%s1 + $0x60] sm:$0xf]
      %v634 = vld [vmem:[%s1 + $0x64] sm:$0xf]
      %v635 = vld [vmem:[%s1 + $0x68] sm:$0xf]
      %v636 = vld [vmem:[%s1 + $0x6c] sm:$0xf]
      %v637 = vld [vmem:[%s1 + $0x70] sm:$0xf]
      %v638 = vld [vmem:[%s1 + $0x74] sm:$0xf]
      %v639 = vld [vmem:[%s1 + $0x78] sm:$0xf]
      %v640 = vld [vmem:[%s1 + $0x7c] sm:$0xf]
      %v641 = vld [vmem:[%s1 + $0x80] sm:$0xf]
      %v642 = vld [vmem:[%s1 + $0x84] sm:$0xf]
      %v643 = vld [vmem:[%s1 + $0x88] sm:$0xf]
      %v644 = vld [vmem:[%s1 + $0x8c] sm:$0xf]
      %v645 = vld [vmem:[%s1 + $0x90] sm:$0xf]
      %v646 = vld [vmem:[%s1 + $0x94] sm:$0xf]
      %v647 = vld [vmem:[%s1 + $0x98] sm:$0xf]
      %v648 = vld [vmem:[%s1 + $0x9c] sm:$0xf]
      %v649 = vld [vmem:[%s1 + $0xa0] sm:$0xf]
      %v650 = vld [vmem:[%s1 + $0xa4] sm:$0xf]
      %v651 = vld [vmem:[%s1 + $0xa8] sm:$0xf]
      %v652 = vld [vmem:[%s1 + $0xac] sm:$0xf]
      %v653 = vld [vmem:[%s1 + $0xb0] sm:$0xf]
      %v654 = vld [vmem:[%s1 + $0xb4] sm:$0xf]
      %v655 = vld [vmem:[%s1 + $0xb8] sm:$0xf]
      %v656 = vld [vmem:[%s1 + $0xbc] sm:$0xf]
      %v657 = vld [vmem:[%s1 + $0xc0] sm:$0xf]
      %v658 = vld [vmem:[%s1 + $0xc4] sm:$0xf]
      %v659 = vld [vmem:[%s1 + $0xc8] sm:$0xf]
      %v660 = vld [vmem:[%s1 + $0xcc] sm:$0xf]
      %v661 = vld [vmem:[%s1 + $0xd0] sm:$0xf]
      %v662 = vld [vmem:[%s1 + $0xd4] sm:$0xf]
      %v663 = vld [vmem:[%s1 + $0xd8] sm:$0xf]
      %v664 = vld [vmem:[%s1 + $0xdc] sm:$0xf]
      %v665 = vld [vmem:[%s1 + $0xe0] sm:$0xf]
      %v666 = vld [vmem:[%s1 + $0xe4] sm:$0xf]
      %v667 = vld [vmem:[%s1 + $0xe8] sm:$0xf]
      %v668 = vld [vmem:[%s1 + $0xec] sm:$0xf]
      %v669 = vld [vmem:[%s1 + $0xf0] sm:$0xf]
      %v670 = vld [vmem:[%s1 + $0xf4] sm:$0xf]
      %v671 = vld [vmem:[%s1 + $0xf8] sm:$0xf]
      %v672 = vld [vmem:[%s1 + $0xfc] sm:$0xf]
      %v673 = vld [vmem:[%s1 + $0x100] sm:$0xf]
      %v674 = vld [vmem:[%s1 + $0x104] sm:$0xf]
      %v675 = vld [vmem:[%s1 + $0x108] sm:$0xf]
      %v676 = vld [vmem:[%s1 + $0x10c] sm:$0xf]
      %v677 = vld [vmem:[%s1 + $0x110] sm:$0xf]
      %v678 = vld [vmem:[%s1 + $0x114] sm:$0xf]
      %v679 = vld [vmem:[%s1 + $0x118] sm:$0xf]
      %v680 = vld [vmem:[%s1 + $0x11c] sm:$0xf]
      %v681 = vld [vmem:[%s1 + $0x120] sm:$0xf]
      %v682 = vld [vmem:[%s1 + $0x124] sm:$0xf]
      %v683 = vld [vmem:[%s1 + $0x128] sm:$0xf]
      %v684 = vld [vmem:[%s1 + $0x12c] sm:$0xf]
      %v685 = vld [vmem:[%s1 + $0x130] sm:$0xf]
      %v686 = vld [vmem:[%s1 + $0x134] sm:$0xf]
      %v687 = vld [vmem:[%s1 + $0x138] sm:$0xf]
      %v688 = vld [vmem:[%s1 + $0x13c] sm:$0xf]
      %v689 = vld [vmem:[%s1 + $0x140] sm:$0xf]
      %v690 = vld [vmem:[%s1 + $0x144] sm:$0xf]
      %v691 = vld [vmem:[%s1 + $0x148] sm:$0xf]
      %v692 = vld [vmem:[%s1 + $0x14c] sm:$0xf]
      %v693 = vld [vmem:[%s1 + $0x150] sm:$0xf]
      %v694 = vld [vmem:[%s1 + $0x154] sm:$0xf]
      %v695 = vld [vmem:[%s1 + $0x158] sm:$0xf]
      %v696 = vld [vmem:[%s1 + $0x15c] sm:$0xf]
      %v697 = vld [vmem:[%s1 + $0x160] sm:$0xf]
      %v698 = vld [vmem:[%s1 + $0x164] sm:$0xf]
      %v699 = vld [vmem:[%s1 + $0x168] sm:$0xf]
      %v700 = vld [vmem:[%s1 + $0x16c] sm:$0xf]
      %v701 = vld [vmem:[%s1 + $0x170] sm:$0xf]
      %v702 = vld [vmem:[%s1 + $0x174] sm:$0xf]
      %v703 = vld [vmem:[%s1 + $0x178] sm:$0xf]
      %v704 = vld [vmem:[%s1 + $0x17c] sm:$0xf]
      %v705 = vld [vmem:[%s1 + $0x180] sm:$0xf]
      %v706 = vld [vmem:[%s1 + $0x184] sm:$0xf]
      %v707 = vld [vmem:[%s1 + $0x188] sm:$0xf]
      %v708 = vld [vmem:[%s1 + $0x18c] sm:$0xf]
      %v709 = vld [vmem:[%s1 + $0x190] sm:$0xf]
      %v710 = vld [vmem:[%s1 + $0x194] sm:$0xf]
      %v711 = vld [vmem:[%s1 + $0x198] sm:$0xf]
      %v712 = vld [vmem:[%s1 + $0x19c] sm:$0xf]
      %v713 = vld [vmem:[%s1 + $0x1a0] sm:$0xf]
      %v714 = vld [vmem:[%s1 + $0x1a4] sm:$0xf]
      %v715 = vld [vmem:[%s1 + $0x1a8] sm:$0xf]
      %v716 = vld [vmem:[%s1 + $0x1ac] sm:$0xf]
      %v717 = vld [vmem:[%s1 + $0x1b0] sm:$0xf]
      %v718 = vld [vmem:[%s1 + $0x1b4] sm:$0xf]
      %v719 = vld [vmem:[%s1 + $0x1b8] sm:$0xf]
      %v720 = vld [vmem:[%s1 + $0x1bc] sm:$0xf]
      %v721 = vld [vmem:[%s1 + $0x1c0] sm:$0xf]
      %v722 = vld [vmem:[%s1 + $0x1c4] sm:$0xf]
      %v723 = vld [vmem:[%s1 + $0x1c8] sm:$0xf]
      %v724 = vld [vmem:[%s1 + $0x1cc] sm:$0xf]
      %v725 = vld [vmem:[%s1 + $0x1d0] sm:$0xf]
      %v726 = vld [vmem:[%s1 + $0x1d4] sm:$0xf]
      %v727 = vld [vmem:[%s1 + $0x1d8] sm:$0xf]
      %v728 = vld [vmem:[%s1 + $0x1dc] sm:$0xf]
      %v729 = vld [vmem:[%s1 + $0x1e0] sm:$0xf]
      %v730 = vld [vmem:[%s1 + $0x1e4] sm:$0xf]
      %v731 = vld [vmem:[%s1 + $0x1e8] sm:$0xf]
      %v732 = vld [vmem:[%s1 + $0x1ec] sm:$0xf]
      %v733 = vld [vmem:[%s1 + $0x1f0] sm:$0xf]
      %v734 = vld [vmem:[%s1 + $0x1f4] sm:$0xf]
      %v735 = vld [vmem:[%s1 + $0x1f8] sm:$0xf]
      %v736 = vld [vmem:[%s1 + $0x1fc] sm:$0xf]
      %v737 = vld [vmem:[%s1 + $0x200] sm:$0xf]
      %v738 = vld [vmem:[%s1 + $0x204] sm:$0xf]
      %v739 = vld [vmem:[%s1 + $0x208] sm:$0xf]
      %v740 = vld [vmem:[%s1 + $0x20c] sm:$0xf]
      %v741 = vld [vmem:[%s1 + $0x210] sm:$0xf]
      %v742 = vld [vmem:[%s1 + $0x214] sm:$0xf]
      %v743 = vld [vmem:[%s1 + $0x218] sm:$0xf]
      %v744 = vld [vmem:[%s1 + $0x21c] sm:$0xf]
      %v745 = vld [vmem:[%s1 + $0x220] sm:$0xf]
      %v746 = vld [vmem:[%s1 + $0x224] sm:$0xf]
      %v747 = vld [vmem:[%s1 + $0x228] sm:$0xf]
      %v748 = vld [vmem:[%s1 + $0x22c] sm:$0xf]
      %v749 = vld [vmem:[%s1 + $0x230] sm:$0xf]
      %v750 = vld [vmem:[%s1 + $0x234] sm:$0xf]
      %v751 = vld [vmem:[%s1 + $0x238] sm:$0xf]
      %v752 = vld [vmem:[%s1 + $0x23c] sm:$0xf]
      %v753 = vld [vmem:[%s2] sm:$0x1]
      %v755 = vlaneseq
      %v756 = vshrl.u32 %v755, 7
      %v757 = vsub.s32 0, %v756
      %v758 = vrot.slane %v753, %v757
      %v760 = vpack.c.b16 %v267, %v265
      %v761 = vpack.c.b16 %v567, %v561
      %v762 = vpack.c.b16 %v568, %v562
      %v763 = vpack.c.b16 %v363, %v361
      %v764 = vpack.c.b16 %v569, %v563
      %v765 = vpack.c.b16 %v570, %v564
      %v766 = vpack.c.b16 %v459, %v457
      %v767 = vpack.c.b16 %v571, %v565
      %v768 = vpack.c.b16 %v572, %v566
      %v769 = vpack.c.b16 %v271, %v269
      %v770 = vpack.c.b16 %v579, %v573
      %v771 = vpack.c.b16 %v580, %v574
      %v772 = vpack.c.b16 %v367, %v365
      %v773 = vpack.c.b16 %v581, %v575
      %v774 = vpack.c.b16 %v582, %v576
      %v775 = vpack.c.b16 %v463, %v461
      %v776 = vpack.c.b16 %v583, %v577
      %v777 = vpack.c.b16 %v584, %v578
      %v778 = vpack.c.b16 %v275, %v273
      %v779 = vpack.c.b16 %v591, %v585
      %v780 = vpack.c.b16 %v592, %v586
      %v781 = vpack.c.b16 %v371, %v369
      %v782 = vpack.c.b16 %v593, %v587
      %v783 = vpack.c.b16 %v594, %v588
      %v784 = vpack.c.b16 %v467, %v465
      %v785 = vpack.c.b16 %v595, %v589
      %v786 = vpack.c.b16 %v596, %v590
      %v787 = vpack.c.b16 %v279, %v277
      %v788 = vpack.c.b16 %v603, %v597
      %v789 = vpack.c.b16 %v604, %v598
      %v790 = vpack.c.b16 %v375, %v373
      %v791 = vpack.c.b16 %v605, %v599
      %v792 = vpack.c.b16 %v606, %v600
      %v793 = vpack.c.b16 %v471, %v469
      %v794 = vpack.c.b16 %v607, %v601
      %v795 = vpack.c.b16 %v608, %v602
      %v976 = vunpack.c.l.b16 %v609
      %v977 = vunpack.c.l.b16 %v610
      %v978 = vunpack.c.l.b16 %v611
      %v979 = vunpack.c.l.b16 %v612
      %v980 = vunpack.c.l.b16 %v613
      %v981 = vunpack.c.l.b16 %v614
      %v982 = vunpack.c.l.b16 %v615
      %v983 = vunpack.c.l.b16 %v616
      %v984 = vunpack.c.l.b16 %v617
      %v985 = vunpack.c.l.b16 %v618
      %v986 = vunpack.c.l.b16 %v619
      %v987 = vunpack.c.l.b16 %v620
      %v988 = vunpack.c.l.b16 %v621
      %v989 = vunpack.c.l.b16 %v622
      %v990 = vunpack.c.l.b16 %v623
      %v991 = vunpack.c.l.b16 %v624
      %v992 = vunpack.c.l.b16 %v625
      %v993 = vunpack.c.l.b16 %v626
      %v994 = vunpack.c.l.b16 %v627
      %v995 = vunpack.c.l.b16 %v628
      %v996 = vunpack.c.l.b16 %v629
      %v997 = vunpack.c.l.b16 %v630
      %v998 = vunpack.c.l.b16 %v631
      %v999 = vunpack.c.l.b16 %v632
      %v1000 = vunpack.c.l.b16 %v633
      %v1001 = vunpack.c.l.b16 %v634
      %v1002 = vunpack.c.l.b16 %v635
      %v1003 = vunpack.c.l.b16 %v636
      %v1004 = vunpack.c.l.b16 %v637
      %v1005 = vunpack.c.l.b16 %v638
      %v1006 = vunpack.c.l.b16 %v639
      %v1007 = vunpack.c.l.b16 %v640
      %v1008 = vunpack.c.l.b16 %v641
      %v1009 = vunpack.c.l.b16 %v642
      %v1010 = vunpack.c.l.b16 %v643
      %v1011 = vunpack.c.l.b16 %v644
      %v1012 = vunpack.c.l.b16 %v645
      %v1013 = vunpack.c.l.b16 %v646
      %v1014 = vunpack.c.l.b16 %v647
      %v1015 = vunpack.c.l.b16 %v648
      %v1016 = vunpack.c.l.b16 %v649
      %v1017 = vunpack.c.l.b16 %v650
      %v1018 = vunpack.c.l.b16 %v651
      %v1019 = vunpack.c.l.b16 %v652
      %v1020 = vunpack.c.l.b16 %v653
      %v1021 = vunpack.c.l.b16 %v654
      %v1022 = vunpack.c.l.b16 %v655
      %v1023 = vunpack.c.l.b16 %v656
      %v1024 = vunpack.c.l.b16 %v657
      %v1025 = vunpack.c.l.b16 %v658
      %v1026 = vunpack.c.l.b16 %v659
      %v1027 = vunpack.c.l.b16 %v660
      %v1028 = vunpack.c.l.b16 %v661
      %v1029 = vunpack.c.l.b16 %v662
      %v1030 = vunpack.c.l.b16 %v663
      %v1031 = vunpack.c.l.b16 %v664
      %v1032 = vunpack.c.l.b16 %v665
      %v1033 = vunpack.c.l.b16 %v666
      %v1034 = vunpack.c.l.b16 %v667
      %v1035 = vunpack.c.l.b16 %v668
      %v1036 = vunpack.c.l.b16 %v669
      %v1037 = vunpack.c.l.b16 %v670
      %v1038 = vunpack.c.l.b16 %v671
      %v1039 = vunpack.c.l.b16 %v672
      %v1040 = vunpack.c.l.b16 %v673
      %v1041 = vunpack.c.l.b16 %v674
      %v1042 = vunpack.c.l.b16 %v675
      %v1043 = vunpack.c.l.b16 %v676
      %v1044 = vunpack.c.l.b16 %v677
      %v1045 = vunpack.c.l.b16 %v678
      %v1046 = vunpack.c.l.b16 %v679
      %v1047 = vunpack.c.l.b16 %v680
      %v1048 = vunpack.c.l.b16 %v681
      %v1049 = vunpack.c.l.b16 %v682
      %v1050 = vunpack.c.l.b16 %v683
      %v1051 = vunpack.c.l.b16 %v684
      %v1052 = vunpack.c.l.b16 %v685
      %v1053 = vunpack.c.l.b16 %v686
      %v1054 = vunpack.c.l.b16 %v687
      %v1055 = vunpack.c.l.b16 %v688
      %v1056 = vunpack.c.l.b16 %v689
      %v1057 = vunpack.c.l.b16 %v690
      %v1058 = vunpack.c.l.b16 %v691
      %v1059 = vunpack.c.l.b16 %v692
      %v1060 = vunpack.c.l.b16 %v693
      %v1061 = vunpack.c.l.b16 %v694
      %v1062 = vunpack.c.l.b16 %v695
      %v1063 = vunpack.c.l.b16 %v696
      %v1064 = vunpack.c.l.b16 %v697
      %v1065 = vunpack.c.l.b16 %v698
      %v1066 = vunpack.c.l.b16 %v699
      %v1067 = vunpack.c.l.b16 %v700
      %v1068 = vunpack.c.l.b16 %v701
      %v1069 = vunpack.c.l.b16 %v702
      %v1070 = vunpack.c.l.b16 %v703
      %v1071 = vunpack.c.l.b16 %v704
      %v1072 = vunpack.c.l.b16 %v705
      %v1073 = vunpack.c.l.b16 %v706
      %v1074 = vunpack.c.l.b16 %v707
      %v1075 = vunpack.c.l.b16 %v708
      %v1076 = vunpack.c.l.b16 %v709
      %v1077 = vunpack.c.l.b16 %v710
      %v1078 = vunpack.c.l.b16 %v711
      %v1079 = vunpack.c.l.b16 %v712
      %v1080 = vunpack.c.l.b16 %v713
      %v1081 = vunpack.c.l.b16 %v714
      %v1082 = vunpack.c.l.b16 %v715
      %v1083 = vunpack.c.l.b16 %v716
      %v1084 = vunpack.c.l.b16 %v717
      %v1085 = vunpack.c.l.b16 %v718
      %v1086 = vunpack.c.l.b16 %v719
      %v1087 = vunpack.c.l.b16 %v720
      %v1088 = vunpack.c.l.b16 %v721
      %v1089 = vunpack.c.l.b16 %v722
      %v1090 = vunpack.c.l.b16 %v723
      %v1091 = vunpack.c.l.b16 %v724
      %v1092 = vunpack.c.l.b16 %v725
      %v1093 = vunpack.c.l.b16 %v726
      %v1094 = vunpack.c.l.b16 %v727
      %v1095 = vunpack.c.l.b16 %v728
      %v1096 = vunpack.c.l.b16 %v729
      %v1097 = vunpack.c.l.b16 %v730
      %v1098 = vunpack.c.l.b16 %v731
      %v1099 = vunpack.c.l.b16 %v732
      %v1100 = vunpack.c.l.b16 %v733
      %v1101 = vunpack.c.l.b16 %v734
      %v1102 = vunpack.c.l.b16 %v735
      %v1103 = vunpack.c.l.b16 %v736
      %v1104 = vunpack.c.l.b16 %v737
      %v1105 = vunpack.c.l.b16 %v738
      %v1106 = vunpack.c.l.b16 %v739
      %v1107 = vunpack.c.l.b16 %v740
      %v1108 = vunpack.c.l.b16 %v741
      %v1109 = vunpack.c.l.b16 %v742
      %v1110 = vunpack.c.l.b16 %v743
      %v1111 = vunpack.c.l.b16 %v744
      %v1112 = vunpack.c.l.b16 %v745
      %v1113 = vunpack.c.l.b16 %v746
      %v1114 = vunpack.c.l.b16 %v747
      %v1115 = vunpack.c.l.b16 %v748
      %v1116 = vunpack.c.l.b16 %v749
      %v1117 = vunpack.c.l.b16 %v750
      %v1118 = vunpack.c.l.b16 %v751
      %v1119 = vunpack.c.l.b16 %v752
      %v1120 = vpack.c.b16 %v977, %v976
      %v1121 = vpack.c.b16 %v979, %v978
      %v1122 = vpack.c.b16 %v981, %v980
      %v1123 = vpack.c.b16 %v983, %v982
      %v1124 = vpack.c.b16 %v985, %v984
      %v1125 = vpack.c.b16 %v987, %v986
      %v1126 = vpack.c.b16 %v989, %v988
      %v1127 = vpack.c.b16 %v991, %v990
      %v1128 = vpack.c.b16 %v993, %v992
      %v1129 = vpack.c.b16 %v995, %v994
      %v1130 = vpack.c.b16 %v997, %v996
      %v1131 = vpack.c.b16 %v999, %v998
      %v1132 = vpack.c.b16 %v1001, %v1000
      %v1133 = vpack.c.b16 %v1003, %v1002
      %v1134 = vpack.c.b16 %v1005, %v1004
      %v1135 = vpack.c.b16 %v1007, %v1006
      %v1136 = vpack.c.b16 %v1009, %v1008
      %v1137 = vpack.c.b16 %v1011, %v1010
      %v1138 = vpack.c.b16 %v1013, %v1012
      %v1139 = vpack.c.b16 %v1015, %v1014
      %v1140 = vpack.c.b16 %v1017, %v1016
      %v1141 = vpack.c.b16 %v1019, %v1018
      %v1142 = vpack.c.b16 %v1021, %v1020
      %v1143 = vpack.c.b16 %v1023, %v1022
      %v1144 = vpack.c.b16 %v1025, %v1024
      %v1145 = vpack.c.b16 %v1027, %v1026
      %v1146 = vpack.c.b16 %v1029, %v1028
      %v1147 = vpack.c.b16 %v1031, %v1030
      %v1148 = vpack.c.b16 %v1033, %v1032
      %v1149 = vpack.c.b16 %v1035, %v1034
      %v1150 = vpack.c.b16 %v1037, %v1036
      %v1151 = vpack.c.b16 %v1039, %v1038
      %v1152 = vpack.c.b16 %v1041, %v1040
      %v1153 = vpack.c.b16 %v1043, %v1042
      %v1154 = vpack.c.b16 %v1045, %v1044
      %v1155 = vpack.c.b16 %v1047, %v1046
      %v1156 = vpack.c.b16 %v1049, %v1048
      %v1157 = vpack.c.b16 %v1051, %v1050
      %v1158 = vpack.c.b16 %v1053, %v1052
      %v1159 = vpack.c.b16 %v1055, %v1054
      %v1160 = vpack.c.b16 %v1057, %v1056
      %v1161 = vpack.c.b16 %v1059, %v1058
      %v1162 = vpack.c.b16 %v1061, %v1060
      %v1163 = vpack.c.b16 %v1063, %v1062
      %v1164 = vpack.c.b16 %v1065, %v1064
      %v1165 = vpack.c.b16 %v1067, %v1066
      %v1166 = vpack.c.b16 %v1069, %v1068
      %v1167 = vpack.c.b16 %v1071, %v1070
      %v1168 = vpack.c.b16 %v1073, %v1072
      %v1169 = vpack.c.b16 %v1075, %v1074
      %v1170 = vpack.c.b16 %v1077, %v1076
      %v1171 = vpack.c.b16 %v1079, %v1078
      %v1172 = vpack.c.b16 %v1081, %v1080
      %v1173 = vpack.c.b16 %v1083, %v1082
      %v1174 = vpack.c.b16 %v1085, %v1084
      %v1175 = vpack.c.b16 %v1087, %v1086
      %v1176 = vpack.c.b16 %v1089, %v1088
      %v1177 = vpack.c.b16 %v1091, %v1090
      %v1178 = vpack.c.b16 %v1093, %v1092
      %v1179 = vpack.c.b16 %v1095, %v1094
      %v1180 = vpack.c.b16 %v1097, %v1096
      %v1181 = vpack.c.b16 %v1099, %v1098
      %v1182 = vpack.c.b16 %v1101, %v1100
      %v1183 = vpack.c.b16 %v1103, %v1102
      %v1184 = vpack.c.b16 %v1105, %v1104
      %v1185 = vpack.c.b16 %v1107, %v1106
      %v1186 = vpack.c.b16 %v1109, %v1108
      %v1187 = vpack.c.b16 %v1111, %v1110
      %v1188 = vpack.c.b16 %v1113, %v1112
      %v1189 = vpack.c.b16 %v1115, %v1114
      %v1190 = vpack.c.b16 %v1117, %v1116
      %v1191 = vpack.c.b16 %v1119, %v1118
      %1264 = vmatprep.subr.bf16.mxu0 0
      %1265 = vmatpush1.bf16.msra.mxu0 %v1120
      %1266 = vmatprep.subr.bf16.mxu0 0
      %1267 = vmatpush1.bf16.msra.mxu0 %v1121
      %1268 = vmatprep.subr.bf16.mxu0 0
      %1269 = vmatpush1.bf16.msra.mxu0 %v1122
      %1270 = vmatprep.subr.bf16.mxu0 0
      %1271 = vmatpush1.bf16.msra.mxu0 %v1123
      %1272 = vmatprep.subr.bf16.mxu0 0
      %1273 = vmatpush1.bf16.msra.mxu0 %v1124
      %1274 = vmatprep.subr.bf16.mxu0 0
      %1275 = vmatpush1.bf16.msra.mxu0 %v1125
      %1276 = vmatprep.subr.bf16.mxu0 0
      %1277 = vmatpush1.bf16.msra.mxu0 %v1126
      %1278 = vmatprep.subr.bf16.mxu0 0
      %1279 = vmatpush1.bf16.msra.mxu0 %v1127
      %1280 = vmatprep.subr.bf16.mxu0 0
      %1281 = vmatpush1.bf16.msra.mxu0 %v1128
      %1282 = vmatprep.subr.bf16.mxu0 0
      %1283 = vmatpush1.bf16.msra.mxu0 %v1129
      %1284 = vmatprep.subr.bf16.mxu0 0
      %1285 = vmatpush1.bf16.msra.mxu0 %v1130
      %1286 = vmatprep.subr.bf16.mxu0 0
      %1287 = vmatpush1.bf16.msra.mxu0 %v1131
      %1288 = vmatprep.subr.bf16.mxu0 0
      %1289 = vmatpush1.bf16.msra.mxu0 %v1132
      %1290 = vmatprep.subr.bf16.mxu0 0
      %1291 = vmatpush1.bf16.msra.mxu0 %v1133
      %1292 = vmatprep.subr.bf16.mxu0 0
      %1293 = vmatpush1.bf16.msra.mxu0 %v1134
      %1294 = vmatprep.subr.bf16.mxu0 0
      %1295 = vmatpush1.bf16.msra.mxu0 %v1135
      %1296 = vmatprep.mubr.bf16.mxu0 %v761
      %1297 = vmatmul.mubr.bf16.gmra.mrb[0].mxu0 %v760
      %v1298 = vpop.f32.mrb[0].mxu0
      %v1299 = vadd.f32 %v758, %v1298
      %v1300 = vpop.f32.mrb[0].mxu0
      %v1301 = vpop.f32.mrb[0].mxu0
      %v1302 = vadd.f32 %v758, %v1301
      %v1303 = vpop.f32.mrb[0].mxu0
      %1304 = vmatprep.mubr.bf16.mxu0 %v770
      %1305 = vmatmul.mubr.bf16.gmra.mrb[0].mxu0 %v769
      %v1306 = vpop.f32.mrb[0].mxu0
      %v1307 = vadd.f32 %v758, %v1306
      %v1308 = vpop.f32.mrb[0].mxu0
      %v1309 = vpop.f32.mrb[0].mxu0
      %v1310 = vadd.f32 %v758, %v1309
      %v1311 = vpop.f32.mrb[0].mxu0
      %1312 = vmatprep.mubr.bf16.mxu0 %v779
      %1313 = vmatmul.mubr.bf16.gmra.mrb[0].mxu0 %v778
      %v1314 = vpop.f32.mrb[0].mxu0
      %v1315 = vadd.f32 %v758, %v1314
      %v1316 = vpop.f32.mrb[0].mxu0
      %v1317 = vpop.f32.mrb[0].mxu0
      %v1318 = vadd.f32 %v758, %v1317
      %v1319 = vpop.f32.mrb[0].mxu0
      %1320 = vmatprep.mubr.bf16.mxu0 %v788
      %1321 = vmatmul.mubr.bf16.gmra.mrb[0].mxu0 %v787
      %v1322 = vpop.f32.mrb[0].mxu0
      %v1323 = vadd.f32 %v758, %v1322
      %v1324 = vpop.f32.mrb[0].mxu0
      %v1325 = vpop.f32.mrb[0].mxu0
      %v1326 = vadd.f32 %v758, %v1325
      %v1327 = vpop.f32.mrb[0].mxu0
      %1328 = vdwg.mxu0
      %1329 = vmatprep.subr.bf16.mxu0 0
      %1330 = vmatpush1.bf16.msra.mxu0 %v1136
      %1331 = vmatprep.subr.bf16.mxu0 0
      %1332 = vmatpush1.bf16.msra.mxu0 %v1137
      %1333 = vmatprep.subr.bf16.mxu0 0
      %1334 = vmatpush1.bf16.msra.mxu0 %v1138
      %1335 = vmatprep.subr.bf16.mxu0 0
      %1336 = vmatpush1.bf16.msra.mxu0 %v1139
      %1337 = vmatprep.subr.bf16.mxu0 0
      %1338 = vmatpush1.bf16.msra.mxu0 %v1140
      %1339 = vmatprep.subr.bf16.mxu0 0
      %1340 = vmatpush1.bf16.msra.mxu0 %v1141
      %1341 = vmatprep.subr.bf16.mxu0 0
      %1342 = vmatpush1.bf16.msra.mxu0 %v1142
      %1343 = vmatprep.subr.bf16.mxu0 0
      %1344 = vmatpush1.bf16.msra.mxu0 %v1143
      %1345 = vmatprep.subr.bf16.mxu0 0
      %1346 = vmatpush1.bf16.msra.mxu0 %v1144
      %1347 = vmatprep.subr.bf16.mxu0 0
      %1348 = vmatpush1.bf16.msra.mxu0 %v1145
      %1349 = vmatprep.subr.bf16.mxu0 0
      %1350 = vmatpush1.bf16.msra.mxu0 %v1146
      %1351 = vmatprep.subr.bf16.mxu0 0
      %1352 = vmatpush1.bf16.msra.mxu0 %v1147
      %1353 = vmatprep.subr.bf16.mxu0 0
      %1354 = vmatpush1.bf16.msra.mxu0 %v1148
      %1355 = vmatprep.subr.bf16.mxu0 0
      %1356 = vmatpush1.bf16.msra.mxu0 %v1149
      %1357 = vmatprep.subr.bf16.mxu0 0
      %1358 = vmatpush1.bf16.msra.mxu0 %v1150
      %1359 = vmatprep.subr.bf16.mxu0 0
      %1360 = vmatpush1.bf16.msra.mxu0 %v1151
      %1361 = vmatprep.mubr.bf16.mxu0 %v763
      %1362 = vmatmul.mubr.bf16.gmra.mrb[0].mxu0 %v762
      %v1363 = vpop.f32.mrb[0].mxu0
      %v1364 = vadd.f32 %v1299, %v1363
      %v1365 = vpop.f32.mrb[0].mxu0
      %v1366 = vpop.f32.mrb[0].mxu0
      %v1367 = vadd.f32 %v1302, %v1366
      %v1368 = vpop.f32.mrb[0].mxu0
      %1369 = vmatprep.mubr.bf16.mxu0 %v772
      %1370 = vmatmul.mubr.bf16.gmra.mrb[0].mxu0 %v771
      %v1371 = vpop.f32.mrb[0].mxu0
      %v1372 = vadd.f32 %v1307, %v1371
      %v1373 = vpop.f32.mrb[0].mxu0
      %v1374 = vpop.f32.mrb[0].mxu0
      %v1375 = vadd.f32 %v1310, %v1374
      %v1376 = vpop.f32.mrb[0].mxu0
      %1377 = vmatprep.mubr.bf16.mxu0 %v781
      %1378 = vmatmul.mubr.bf16.gmra.mrb[0].mxu0 %v780
      %v1379 = vpop.f32.mrb[0].mxu0
      %v1380 = vadd.f32 %v1315, %v1379
      %v1381 = vpop.f32.mrb[0].mxu0
      %v1382 = vpop.f32.mrb[0].mxu0
      %v1383 = vadd.f32 %v1318, %v1382
      %v1384 = vpop.f32.mrb[0].mxu0
      %1385 = vmatprep.mubr.bf16.mxu0 %v790
      %1386 = vmatmul.mubr.bf16.gmra.mrb[0].mxu0 %v789
      %v1387 = vpop.f32.mrb[0].mxu0
      %v1388 = vadd.f32 %v1323, %v1387
      %v1389 = vpop.f32.mrb[0].mxu0
      %v1390 = vpop.f32.mrb[0].mxu0
      %v1391 = vadd.f32 %v1326, %v1390
      %v1392 = vpop.f32.mrb[0].mxu0
      %1393 = vdwg.mxu0
      %1394 = vmatprep.subr.bf16.mxu0 0
      %1395 = vmatpush1.bf16.msra.mxu0 %v1152
      %1396 = vmatprep.subr.bf16.mxu0 0
      %1397 = vmatpush1.bf16.msra.mxu0 %v1153
      %1398 = vmatprep.subr.bf16.mxu0 0
      %1399 = vmatpush1.bf16.msra.mxu0 %v1154
      %1400 = vmatprep.subr.bf16.mxu0 0
      %1401 = vmatpush1.bf16.msra.mxu0 %v1155
      %1402 = vmatprep.subr.bf16.mxu0 0
      %1403 = vmatpush1.bf16.msra.mxu0 %v1156
      %1404 = vmatprep.subr.bf16.mxu0 0
      %1405 = vmatpush1.bf16.msra.mxu0 %v1157
      %1406 = vmatprep.subr.bf16.mxu0 0
      %1407 = vmatpush1.bf16.msra.mxu0 %v1158
      %1408 = vmatprep.subr.bf16.mxu0 0
      %1409 = vmatpush1.bf16.msra.mxu0 %v1159
      %1410 = vmatprep.subr.bf16.mxu0 0
      %1411 = vmatpush1.bf16.msra.mxu0 %v1160
      %1412 = vmatprep.subr.bf16.mxu0 0
      %1413 = vmatpush1.bf16.msra.mxu0 %v1161
      %1414 = vmatprep.subr.bf16.mxu0 0
      %1415 = vmatpush1.bf16.msra.mxu0 %v1162
      %1416 = vmatprep.subr.bf16.mxu0 0
      %1417 = vmatpush1.bf16.msra.mxu0 %v1163
      %1418 = vmatprep.subr.bf16.mxu0 0
      %1419 = vmatpush1.bf16.msra.mxu0 %v1164
      %1420 = vmatprep.subr.bf16.mxu0 0
      %1421 = vmatpush1.bf16.msra.mxu0 %v1165
      %1422 = vmatprep.subr.bf16.mxu0 0
      %1423 = vmatpush1.bf16.msra.mxu0 %v1166
      %1424 = vmatprep.subr.bf16.mxu0 0
      %1425 = vmatpush1.bf16.msra.mxu0 %v1167
      %1426 = vmatprep.mubr.bf16.mxu0 %v765
      %1427 = vmatmul.mubr.bf16.gmra.mrb[0].mxu0 %v764
      %v1428 = vpop.f32.mrb[0].mxu0
      %v1429 = vadd.f32 %v1364, %v1428
      %v1430 = vpop.f32.mrb[0].mxu0
      %v1431 = vpop.f32.mrb[0].mxu0
      %v1432 = vadd.f32 %v1367, %v1431
      %v1433 = vpop.f32.mrb[0].mxu0
      %1434 = vmatprep.mubr.bf16.mxu0 %v774
      %1435 = vmatmul.mubr.bf16.gmra.mrb[0].mxu0 %v773
      %v1436 = vpop.f32.mrb[0].mxu0
      %v1437 = vadd.f32 %v1372, %v1436
      %v1438 = vpop.f32.mrb[0].mxu0
      %v1439 = vpop.f32.mrb[0].mxu0
      %v1440 = vadd.f32 %v1375, %v1439
      %v1441 = vpop.f32.mrb[0].mxu0
      %1442 = vmatprep.mubr.bf16.mxu0 %v783
      %1443 = vmatmul.mubr.bf16.gmra.mrb[0].mxu0 %v782
      %v1444 = vpop.f32.mrb[0].mxu0
      %v1445 = vadd.f32 %v1380, %v1444
      %v1446 = vpop.f32.mrb[0].mxu0
      %v1447 = vpop.f32.mrb[0].mxu0
      %v1448 = vadd.f32 %v1383, %v1447
      %v1449 = vpop.f32.mrb[0].mxu0
      %1450 = vmatprep.mubr.bf16.mxu0 %v792
      %1451 = vmatmul.mubr.bf16.gmra.mrb[0].mxu0 %v791
      %v1452 = vpop.f32.mrb[0].mxu0
      %v1453 = vadd.f32 %v1388, %v1452
      %v1454 = vpop.f32.mrb[0].mxu0
      %v1455 = vpop.f32.mrb[0].mxu0
      %v1456 = vadd.f32 %v1391, %v1455
      %v1457 = vpop.f32.mrb[0].mxu0
      %1458 = vdwg.mxu0
      %1459 = vmatprep.subr.bf16.mxu0 0
      %1460 = vmatpush1.bf16.msra.mxu0 %v1168
      %1461 = vmatprep.subr.bf16.mxu0 0
      %1462 = vmatpush1.bf16.msra.mxu0 %v1169
      %1463 = vmatprep.subr.bf16.mxu0 0
      %1464 = vmatpush1.bf16.msra.mxu0 %v1170
      %1465 = vmatprep.subr.bf16.mxu0 0
      %1466 = vmatpush1.bf16.msra.mxu0 %v1171
      %1467 = vmatprep.subr.bf16.mxu0 0
      %1468 = vmatpush1.bf16.msra.mxu0 %v1172
      %1469 = vmatprep.subr.bf16.mxu0 0
      %1470 = vmatpush1.bf16.msra.mxu0 %v1173
      %1471 = vmatprep.subr.bf16.mxu0 0
      %1472 = vmatpush1.bf16.msra.mxu0 %v1174
      %1473 = vmatprep.subr.bf16.mxu0 0
      %1474 = vmatpush1.bf16.msra.mxu0 %v1175
      %1475 = vmatprep.subr.bf16.mxu0 0
      %1476 = vmatpush1.bf16.msra.mxu0 %v1176
      %1477 = vmatprep.subr.bf16.mxu0 0
      %1478 = vmatpush1.bf16.msra.mxu0 %v1177
      %1479 = vmatprep.subr.bf16.mxu0 0
      %1480 = vmatpush1.bf16.msra.mxu0 %v1178
      %1481 = vmatprep.subr.bf16.mxu0 0
      %1482 = vmatpush1.bf16.msra.mxu0 %v1179
      %1483 = vmatprep.subr.bf16.mxu0 0
      %1484 = vmatpush1.bf16.msra.mxu0 %v1180
      %1485 = vmatprep.subr.bf16.mxu0 0
      %1486 = vmatpush1.bf16.msra.mxu0 %v1181
      %1487 = vmatprep.subr.bf16.mxu0 0
      %1488 = vmatpush1.bf16.msra.mxu0 %v1182
      %1489 = vmatprep.subr.bf16.mxu0 0
      %1490 = vmatpush1.bf16.msra.mxu0 %v1183
      %1491 = vmatprep.mubr.bf16.mxu0 %v767
      %1492 = vmatmul.mubr.bf16.gmra.mrb[0].mxu0 %v766
      %v1493 = vpop.f32.mrb[0].mxu0
      %v1494 = vadd.f32 %v1429, %v1493
      %v1495 = vpop.f32.mrb[0].mxu0
      %v1496 = vpop.f32.mrb[0].mxu0
      %v1497 = vadd.f32 %v1432, %v1496
      %v1498 = vpop.f32.mrb[0].mxu0
      %1499 = vmatprep.mubr.bf16.mxu0 %v776
      %1500 = vmatmul.mubr.bf16.gmra.mrb[0].mxu0 %v775
      %v1501 = vpop.f32.mrb[0].mxu0
      %v1502 = vadd.f32 %v1437, %v1501
      %v1503 = vpop.f32.mrb[0].mxu0
      %v1504 = vpop.f32.mrb[0].mxu0
      %v1505 = vadd.f32 %v1440, %v1504
      %v1506 = vpop.f32.mrb[0].mxu0
      %1507 = vmatprep.mubr.bf16.mxu0 %v785
      %1508 = vmatmul.mubr.bf16.gmra.mrb[0].mxu0 %v784
      %v1509 = vpop.f32.mrb[0].mxu0
      %v1510 = vadd.f32 %v1445, %v1509
      %v1511 = vpop.f32.mrb[0].mxu0
      %v1512 = vpop.f32.mrb[0].mxu0
      %v1513 = vadd.f32 %v1448, %v1512
      %v1514 = vpop.f32.mrb[0].mxu0
      %1515 = vmatprep.mubr.bf16.mxu0 %v794
      %1516 = vmatmul.mubr.bf16.gmra.mrb[0].mxu0 %v793
      %v1517 = vpop.f32.mrb[0].mxu0
      %v1518 = vadd.f32 %v1453, %v1517
      %v1519 = vpop.f32.mrb[0].mxu0
      %v1520 = vpop.f32.mrb[0].mxu0
      %v1521 = vadd.f32 %v1456, %v1520
      %v1522 = vpop.f32.mrb[0].mxu0
      %1523 = vdwg.mxu0
      %1524 = vmatprep.subr.bf16.mxu0 0
      %1525 = vmatpush1.bf16.msra.mxu0 %v1184
      %1526 = vmatprep.subr.bf16.mxu0 0
      %1527 = vmatpush1.bf16.msra.mxu0 %v1185
      %1528 = vmatprep.subr.bf16.mxu0 0
      %1529 = vmatpush1.bf16.msra.mxu0 %v1186
      %1530 = vmatprep.subr.bf16.mxu0 0
      %1531 = vmatpush1.bf16.msra.mxu0 %v1187
      %1532 = vmatprep.subr.bf16.mxu0 0
      %1533 = vmatpush1.bf16.msra.mxu0 %v1188
      %1534 = vmatprep.subr.bf16.mxu0 0
      %1535 = vmatpush1.bf16.msra.mxu0 %v1189
      %1536 = vmatprep.subr.bf16.mxu0 0
      %1537 = vmatpush1.bf16.msra.mxu0 %v1190
      %1538 = vmatprep.subr.bf16.mxu0 0
      %1539 = vmatpush1.bf16.msra.mxu0 %v1191
      %1540 = vmatprep.subr.bf16.mxu0 0
      %1541 = vmatpush1.bf16.msra.mxu0 0
      %1542 = vmatprep.subr.bf16.mxu0 0
      %1543 = vmatpush1.bf16.msra.mxu0 0
      %1544 = vmatprep.subr.bf16.mxu0 0
      %1545 = vmatpush1.bf16.msra.mxu0 0
      %1546 = vmatprep.subr.bf16.mxu0 0
      %1547 = vmatpush1.bf16.msra.mxu0 0
      %1548 = vmatprep.subr.bf16.mxu0 0
      %1549 = vmatpush1.bf16.msra.mxu0 0
      %1550 = vmatprep.subr.bf16.mxu0 0
      %1551 = vmatpush1.bf16.msra.mxu0 0
      %1552 = vmatprep.subr.bf16.mxu0 0
      %1553 = vmatpush1.bf16.msra.mxu0 0
      %1554 = vmatprep.subr.bf16.mxu0 0
      %1555 = vmatpush1.bf16.msra.mxu0 0
      %1556 = vmatprep.mubr.bf16.mxu0 0
      %1557 = vmatmul.mubr.bf16.gmra.mrb[0].mxu0 %v768
      %v1558 = vpop.f32.mrb[0].mxu0
      %v1559 = vadd.f32 %v1494, %v1558
      %v1560 = vpop.f32.mrb[0].mxu0
      %v1561 = vpop.f32.mrb[0].mxu0
      %v1562 = vadd.f32 %v1497, %v1561
      %v1563 = vpop.f32.mrb[0].mxu0
      %1564 = vmatprep.mubr.bf16.mxu0 0
      %1565 = vmatmul.mubr.bf16.gmra.mrb[0].mxu0 %v777
      %v1566 = vpop.f32.mrb[0].mxu0
      %v1567 = vadd.f32 %v1502, %v1566
      %v1568 = vpop.f32.mrb[0].mxu0
      %v1569 = vpop.f32.mrb[0].mxu0
      %v1570 = vadd.f32 %v1505, %v1569
      %v1571 = vpop.f32.mrb[0].mxu0
      %1572 = vmatprep.mubr.bf16.mxu0 0
      %1573 = vmatmul.mubr.bf16.gmra.mrb[0].mxu0 %v786
      %v1574 = vpop.f32.mrb[0].mxu0
      %v1575 = vadd.f32 %v1510, %v1574
      %v1576 = vpop.f32.mrb[0].mxu0
      %v1577 = vpop.f32.mrb[0].mxu0
      %v1578 = vadd.f32 %v1513, %v1577
      %v1579 = vpop.f32.mrb[0].mxu0
      %1580 = vmatprep.mubr.bf16.mxu0 0
      %1581 = vmatmul.mubr.bf16.gmra.mrb[0].mxu0 %v795
      %v1582 = vpop.f32.mrb[0].mxu0
      %v1583 = vadd.f32 %v1518, %v1582
      %v1584 = vpop.f32.mrb[0].mxu0
      %v1585 = vpop.f32.mrb[0].mxu0
      %v1586 = vadd.f32 %v1521, %v1585
      %v1587 = vpop.f32.mrb[0].mxu0
      %1588 = vdwg.mxu0
      %v1589 = vmax.f32 %v1559, 0.0
      %v1590 = vmax.f32 %v1562, 0.0
      %v1591 = vmax.f32 %v1567, 0.0
      %v1592 = vmax.f32 %v1570, 0.0
      %v1593 = vmax.f32 %v1575, 0.0
      %v1594 = vmax.f32 %v1578, 0.0
      %v1595 = vmax.f32 %v1583, 0.0
      %v1596 = vmax.f32 %v1586, 0.0
      %v1597 = vpack.c.bf16 %v1590, %v1589
      %v1598 = vpack.c.bf16 %v1592, %v1591
      %v1599 = vpack.c.bf16 %v1594, %v1593
      %v1600 = vpack.c.bf16 %v1596, %v1595
      %v1605 = vunpack.c.l.b16 %v1597
      %v1606 = vunpack.c.h.b16 %v1597
      %v1607 = vunpack.c.l.b16 %v1598
      %v1608 = vunpack.c.h.b16 %v1598
      %v1609 = vunpack.c.l.b16 %v1599
      %v1610 = vunpack.c.h.b16 %v1599
      %v1611 = vunpack.c.l.b16 %v1600
      %v1612 = vunpack.c.h.b16 %v1600
      %v1613 = vpack.c.b16 %v1605, %v1605
      %v1614 = vpack.c.b16 %v1606, %v1606
      %v1615 = vpack.c.b16 %v1607, %v1607
      %v1616 = vpack.c.b16 %v1608, %v1608
      %v1617 = vpack.c.b16 %v1609, %v1609
      %v1618 = vpack.c.b16 %v1610, %v1610
      %v1619 = vpack.c.b16 %v1611, %v1611
      %v1620 = vpack.c.b16 %v1612, %v1612
      %1629 = vst [vmem:[%s170] sm:$0xf] %v1613
      %1630 = vst [vmem:[%s170 + $0x4] sm:$0xf] %v1614
      %1631 = vst [vmem:[%s170 + $0x8] sm:$0xf] %v1615
      %1632 = vst [vmem:[%s170 + $0xc] sm:$0xf] %v1616
      %1633 = vst [vmem:[%s170 + $0x10] sm:$0xf] %v1617
      %1634 = vst [vmem:[%s170 + $0x14] sm:$0xf] %v1618
      %1635 = vst [vmem:[%s170 + $0x18] sm:$0xf] %v1619
      %1636 = vst [vmem:[%s170 + $0x1c] sm:$0xf] %v1620
      %p1637 = scmp.lt.s32.totalorder %s14, 1
      %s1638 = scalar_select %p1637, %s14, 1
      %s1639 = smul.addr %s1638, 8
      %s1640 = smul.addr %s1639, 4
      %s1641 = scalar_lea.vmem %s3, %s1640
      // Predicated region
      $region33: #{mobilenet_forward.5} parent=31 // pred_check
        %p1642 = pneg %p100
      $region34: #{mobilenet_forward.5} parent=31 // pred_check_branch
        %1644 = sbr.rel (%p1642) target = $region36
      $region35: #{mobilenet_forward.5} parent=31 // pred_region
        _
      $region36: #{mobilenet_forward.5} parent=31 // pred_fallthru
        _
    $region32: #{mobilenet_forward.5} parent=5 // pred_fallthru
      _
    %p1645 = scmp.le.s32.totalorder 2, %s9
    // Predicated region
    $region37: #{mobilenet_forward.5} parent=5 // pred_check
      %p1646 = pneg %p1645
    $region38: #{mobilenet_forward.5} parent=5 // pred_check_branch
      %1648 = sbr.rel (%p1646) target = $region40
    $region39: #{mobilenet_forward.5} parent=5 // pred_region
      %s1649 = ssub.s32 %s9, 2
      // Predicated region
      $region41: #{mobilenet_forward.5} parent=39 // pred_check
        %p1650 = pneg %p106
      $region42: #{mobilenet_forward.5} parent=39 // pred_check_branch
        %1652 = sbr.rel (%p1650) target = $region44
      $region43: #{mobilenet_forward.5} parent=39 // pred_region
        %p1653 = scmp.lt.s32.totalorder %s15, 1
        %s1654 = scalar_select %p1653, %s15, 1
        %s1655 = smul.addr %s1654, 8
        %s1656 = smul.addr %s1655, 4
        %s1657 = scalar_lea.vmem %s3, %s1656
      $region44: #{mobilenet_forward.5} parent=39 // pred_fallthru
        _
    $region40: #{mobilenet_forward.5} parent=5 // pred_fallthru
      _
  $region6: #{mobilenet_forward.5} parent=0 // loop_footer
    %s13 = sadd.s32 1, %s9
  $region7: #{mobilenet_forward.5} parent=0 // loop_footer_branch
    %8 = sbr.rel target = $region3
  $region8: #{mobilenet_forward.5} parent=0 // loop_exit
    _

// kernel: mobilenet_forward.8
$region0: #{mobilenet_forward.8}
  #allocation0 [shape = 'u32[]', space=smem, size = 0x4, offset = 0x4, fixed_abs, tag = 'smem constant byte address 0x4 - core index']
  #allocation1 [shape = 'u32[144,128]{1,0:T(1,128)}', space=vmem, size = 0x12000, scoped, tag = 'internal scratch']
  #allocation2 [shape = 'f32[1,6,6,128]{3,2,1,0:T(8,128)}', space=vmem, size = 0x6000, scoped, tag = 'scratch operand']
  %s0 = inlined_call_operand.vmem [shape: bf16[2,16,128], index: 0, kind: input, shape index: {}]
  %s1 = inlined_call_operand.vmem [shape: f32[9,1,128], index: 1, kind: input, shape index: {}]
  %s2 = inlined_call_operand.vmem [shape: f32[1,128], index: 2, kind: input, shape index: {}]
  %s3 = inlined_call_operand.vmem [shape: bf16[128,128], index: 3, kind: input, shape index: {}]
  %s4 = inlined_call_operand.vmem [shape: f32[1,128], index: 4, kind: input, shape index: {}]
  %s5 = inlined_call_operand.vmem [shape: bf16[2,16,128], index: 5, kind: output, shape index: {}]
  %s6 = sld [smem:[#allocation0]]
  $region53: #{mobilenet_forward.8} parent=0
    _
  %s8 = ssub.s32 1, %s6
  %s9 = scalar_select 0, %s8, %s6
  loop: start=0, step=1, limit=4
  $region2: #{mobilenet_forward.8} parent=0 // loop_pre_header
    _
  $region3: #{mobilenet_forward.8} parent=0 // loop_header
    %s11 = sphi 0, %s15
    %p12 = scmp.ge.s32.totalorder %s11, 4
    %s21 = sphi 0, %s23
    %s24 = sphi 0, %s21
    %s25 = sphi 0, %s24
    %s41 = sphi 0, %s25
    %s45 = sphi 0, %s45
    %s47 = sphi 0, %s45
    %s48 = sphi 0, %s47
    %s62 = sphi 0, %s48
    %s66 = sphi 0, %s66
    %s68 = sphi 0, %s66
    %s69 = sphi 0, %s68
    %s83 = sphi 0, %s69
    %s87 = sphi 0, %s87
    %s89 = sphi 0, %s87
    %s90 = sphi 0, %s89
    %s104 = sphi 0, %s90
    %s108 = sphi 0, %s108
    %s110 = sphi 0, %s108
    %s111 = sphi 0, %s110
    %s125 = sphi 0, %s111
    %s131 = sphi 0, %s133
    %s134 = sphi 0, %s131
    %s135 = sphi 0, %s134
    %s151 = sphi 0, %s135
  $region4: #{mobilenet_forward.8} parent=0 // loop_header_branch
    %14 = sbr.rel (%p12) target = $region8
  $region5: #{mobilenet_forward.8} parent=0 // loop_body
    %s16 = ssub.s32 %s11, 1
    %s17 = ssub.s32 %s11, 2
    %s18 = sadd.s32 %s11, 1
    %s19 = ssub.s32 %s11, %s18
    %p20 = scmp.eq.s32.totalorder %s19, 0
    %s22 = sadd.s32 %s21, 1
    %s23 = scalar_select %p20, %s21, %s22
    %p26 = pneg %p20
    %p27 = scmp.eq.s32.totalorder %s11, 1
    %p28 = por %p26, %p27
    %p29 = scmp.ne.s32.totalorder %s21, %s24
    %p30 = scmp.eq.s32.totalorder %s11, 0
    %p31 = por %p29, %p30
    %p32 = scmp.ne.s32.totalorder %s21, %s24
    %p33 = scmp.eq.s32.totalorder %s16, 1
    %p34 = por %p32, %p33
    %p35 = scmp.ne.s32.totalorder %s24, %s25
    %p36 = scmp.eq.s32.totalorder %s16, 0
    %p37 = por %p35, %p36
    %p38 = scmp.ne.s32.totalorder %s24, %s25
    %p39 = scmp.eq.s32.totalorder %s17, 1
    %p40 = por %p38, %p39
    %p42 = scmp.ne.s32.totalorder %s25, %s41
    %p43 = scmp.eq.s32.totalorder %s17, 0
    %p44 = por %p42, %p43
    %s46 = sadd.s32 %s45, 1
    %p49 = scmp.eq.s32.totalorder %s11, 1
    %p50 = scmp.ne.s32.totalorder %s45, %s47
    %p51 = scmp.eq.s32.totalorder %s11, 0
    %p52 = por %p50, %p51
    %p53 = scmp.ne.s32.totalorder %s45, %s47
    %p54 = scmp.eq.s32.totalorder %s16, 1
    %p55 = por %p53, %p54
    %p56 = scmp.ne.s32.totalorder %s47, %s48
    %p57 = scmp.eq.s32.totalorder %s16, 0
    %p58 = por %p56, %p57
    %p59 = scmp.ne.s32.totalorder %s47, %s48
    %p60 = scmp.eq.s32.totalorder %s17, 1
    %p61 = por %p59, %p60
    %p63 = scmp.ne.s32.totalorder %s48, %s62
    %p64 = scmp.eq.s32.totalorder %s17, 0
    %p65 = por %p63, %p64
    %s67 = sadd.s32 %s66, 1
    %p70 = scmp.eq.s32.totalorder %s11, 1
    %p71 = scmp.ne.s32.totalorder %s66, %s68
    %p72 = scmp.eq.s32.totalorder %s11, 0
    %p73 = por %p71, %p72
    %p74 = scmp.ne.s32.totalorder %s66, %s68
    %p75 = scmp.eq.s32.totalorder %s16, 1
    %p76 = por %p74, %p75
    %p77 = scmp.ne.s32.totalorder %s68, %s69
    %p78 = scmp.eq.s32.totalorder %s16, 0
    %p79 = por %p77, %p78
    %p80 = scmp.ne.s32.totalorder %s68, %s69
    %p81 = scmp.eq.s32.totalorder %s17, 1
    %p82 = por %p80, %p81
    %p84 = scmp.ne.s32.totalorder %s69, %s83
    %p85 = scmp.eq.s32.totalorder %s17, 0
    %p86 = por %p84, %p85
    %s88 = sadd.s32 %s87, 1
    %p91 = scmp.eq.s32.totalorder %s11, 1
    %p92 = scmp.ne.s32.totalorder %s87, %s89
    %p93 = scmp.eq.s32.totalorder %s11, 0
    %p94 = por %p92, %p93
    %p95 = scmp.ne.s32.totalorder %s87, %s89
    %p96 = scmp.eq.s32.totalorder %s16, 1
    %p97 = por %p95, %p96
    %p98 = scmp.ne.s32.totalorder %s89, %s90
    %p99 = scmp.eq.s32.totalorder %s16, 0
    %p100 = por %p98, %p99
    %p101 = scmp.ne.s32.totalorder %s89, %s90
    %p102 = scmp.eq.s32.totalorder %s17, 1
    %p103 = por %p101, %p102
    %p105 = scmp.ne.s32.totalorder %s90, %s104
    %p106 = scmp.eq.s32.totalorder %s17, 0
    %p107 = por %p105, %p106
    %s109 = sadd.s32 %s108, 1
    %p112 = scmp.eq.s32.totalorder %s11, 1
    %p113 = scmp.ne.s32.totalorder %s108, %s110
    %p114 = scmp.eq.s32.totalorder %s11, 0
    %p115 = por %p113, %p114
    %p116 = scmp.ne.s32.totalorder %s108, %s110
    %p117 = scmp.eq.s32.totalorder %s16, 1
    %p118 = por %p116, %p117
    %p119 = scmp.ne.s32.totalorder %s110, %s111
    %p120 = scmp.eq.s32.totalorder %s16, 0
    %p121 = por %p119, %p120
    %p122 = scmp.ne.s32.totalorder %s110, %s111
    %p123 = scmp.eq.s32.totalorder %s17, 1
    %p124 = por %p122, %p123
    %p126 = scmp.ne.s32.totalorder %s111, %s125
    %p127 = scmp.eq.s32.totalorder %s17, 0
    %p128 = por %p126, %p127
    %s129 = ssub.s32 %s11, %s18
    %p130 = scmp.eq.s32.totalorder %s129, 0
    %s132 = sadd.s32 %s131, 1
    %s133 = scalar_select %p130, %s131, %s132
    %p136 = pneg %p130
    %p137 = scmp.eq.s32.totalorder %s11, 1
    %p138 = por %p136, %p137
    %p139 = scmp.ne.s32.totalorder %s131, %s134
    %p140 = scmp.eq.s32.totalorder %s11, 0
    %p141 = por %p139, %p140
    %p142 = scmp.ne.s32.totalorder %s131, %s134
    %p143 = scmp.eq.s32.totalorder %s16, 1
    %p144 = por %p142, %p143
    %p145 = scmp.ne.s32.totalorder %s134, %s135
    %p146 = scmp.eq.s32.totalorder %s16, 0
    %p147 = por %p145, %p146
    %p148 = scmp.ne.s32.totalorder %s134, %s135
    %p149 = scmp.eq.s32.totalorder %s17, 1
    %p150 = por %p148, %p149
    %p152 = scmp.ne.s32.totalorder %s135, %s151
    %p153 = scmp.eq.s32.totalorder %s17, 0
    %p154 = por %p152, %p153
    %p155 = scmp.le.s32.totalorder 1, %s11
    %p156 = scmp.lt.s32.totalorder %s11, 3
    %p157 = pnand %p155, %p156
    %p158 = pneg %p157
    // Predicated region
    $region9: #{mobilenet_forward.8} parent=5 // pred_check
      _
    $region10: #{mobilenet_forward.8} parent=5 // pred_check_branch
      %160 = sbr.rel (%p157) target = $region12
    $region11: #{mobilenet_forward.8} parent=5 // pred_region
      %s161 = ssub.s32 %s11, 1
      // Predicated region
      $region13: #{mobilenet_forward.8} parent=11 // pred_check
        %p162 = pneg %p58
      $region14: #{mobilenet_forward.8} parent=11 // pred_check_branch
        %164 = sbr.rel (%p162) target = $region16
      $region15: #{mobilenet_forward.8} parent=11 // pred_region
        _
      $region16: #{mobilenet_forward.8} parent=11 // pred_fallthru
        _
      // Predicated region
      $region17: #{mobilenet_forward.8} parent=11 // pred_check
        %p165 = pneg %p79
      $region18: #{mobilenet_forward.8} parent=11 // pred_check_branch
        %167 = sbr.rel (%p165) target = $region20
      $region19: #{mobilenet_forward.8} parent=11 // pred_region
        _
      $region20: #{mobilenet_forward.8} parent=11 // pred_fallthru
        _
      // Predicated region
      $region21: #{mobilenet_forward.8} parent=11 // pred_check
        %p168 = pneg %p100
      $region22: #{mobilenet_forward.8} parent=11 // pred_check_branch
        %170 = sbr.rel (%p168) target = $region24
      $region23: #{mobilenet_forward.8} parent=11 // pred_region
        _
      $region24: #{mobilenet_forward.8} parent=11 // pred_fallthru
        _
      // Predicated region
      $region25: #{mobilenet_forward.8} parent=11 // pred_check
        %p171 = pneg %p121
      $region26: #{mobilenet_forward.8} parent=11 // pred_check_branch
        %173 = sbr.rel (%p171) target = $region28
      $region27: #{mobilenet_forward.8} parent=11 // pred_region
        _
      $region28: #{mobilenet_forward.8} parent=11 // pred_fallthru
        _
    $region12: #{mobilenet_forward.8} parent=5 // pred_fallthru
      _
    %p174 = scmp.lt.s32.totalorder %s11, 2
    // Predicated region
    $region29: #{mobilenet_forward.8} parent=5 // pred_check
      %p175 = pneg %p174
    $region30: #{mobilenet_forward.8} parent=5 // pred_check_branch
      %177 = sbr.rel (%p175) target = $region32
    $region31: #{mobilenet_forward.8} parent=5 // pred_region
      // Predicated region
      $region33: #{mobilenet_forward.8} parent=31 // pred_check
        %p178 = pneg %p31
      $region34: #{mobilenet_forward.8} parent=31 // pred_check_branch
        %180 = sbr.rel (%p178) target = $region36
      $region35: #{mobilenet_forward.8} parent=31 // pred_region
        %p181 = scmp.lt.s32.totalorder %s11, 1
        %s182 = scalar_select %p181, %s11, 1
        %s183 = smul.addr %s182, 2
        %s184 = smul.addr %s183, 4
        %s185 = scalar_lea.vmem %s0, %s184
      $region36: #{mobilenet_forward.8} parent=31 // pred_fallthru
        _
    $region32: #{mobilenet_forward.8} parent=5 // pred_fallthru
      _
    %p186 = scmp.le.s32.totalorder 1, %s11
    %p187 = scmp.lt.s32.totalorder %s11, 3
    %p188 = pnand %p186, %p187
    %p189 = pneg %p188
    // Predicated region
    $region37: #{mobilenet_forward.8} parent=5 // pred_check
      _
    $region38: #{mobilenet_forward.8} parent=5 // pred_check_branch
      %191 = sbr.rel (%p188) target = $region40
    $region39: #{mobilenet_forward.8} parent=5 // pred_region
      %s192 = ssub.s32 %s11, 1
      %p193 = scmp.lt.s32.totalorder %s16, 1
      %s194 = scalar_select %p193, %s16, 1
      %s195 = smul.addr %s194, 2
      %s196 = smul.addr %s195, 4
      %s197 = scalar_lea.vmem %s0, %s196
      %p198 = pneg %p37
      %p199 = pneg %p34
      %p200 = pneg %p58
      %p201 = pneg %p55
      %p202 = pneg %p79
      %p203 = pneg %p76
      %p204 = pneg %p100
      %p205 = pneg %p97
      %p206 = pneg %p121
      %p207 = pneg %p118
      %p208 = pneg %p147
      %p209 = pneg %p144
      %p210 = scmp.lt.s32.totalorder %s16, 1
      %s211 = scalar_select %p210, %s16, 1
      %s212 = smul.addr %s211, 2
      %s213 = smul.addr %s212, 4
      %s214 = scalar_lea.vmem %s5, %s213
      %p215 = scmp.lt.s32.totalorder %s16, 1
      %s216 = scalar_select %p215, %s16, 1
      %s217 = smul.addr %s216, 2
      %s218 = smul.addr %s217, 4
      %s219 = scalar_lea.vmem %s0, %s218
      %p220 = scmp.lt.s32.totalorder %s16, 1
      %s221 = scalar_select %p220, %s16, 1
      %s222 = smul.addr %s221, 2
      %s223 = smul.addr %s222, 4
      %s224 = scalar_lea.vmem %s5, %s223
      %226 = vst [vmem:[#allocation2] sm:$0x3f] 0.0
      %227 = vst [vmem:[#allocation2 + $0x8] sm:$0x3f] 0.0
      %228 = vst [vmem:[#allocation2 + $0x10] sm:$0x3f] 0.0
      %229 = vst [vmem:[#allocation2 + $0x18] sm:$0x3f] 0.0
      %230 = vst [vmem:[#allocation2 + $0x20] sm:$0x3f] 0.0
      %231 = vst [vmem:[#allocation2 + $0x28] sm:$0x3f] 0.0
      %v232 = vld [vmem:[%s219] sm:$0x3]
      %v233 = vunpack.c.l.bf16 %v232
      %s234 = scalar_lea.vmem [#allocation2], 8
      %235 = vst [vmem:[%s234 + $0x1] sm:$0xf] %v233
      %v236 = vld [vmem:[%s219] sm:$0xc]
      %v237 = vunpack.c.l.bf16 %v236
      %s238 = scalar_lea.vmem [#allocation2], 16
      %239 = vst [vmem:[%s238 - $0x3] sm:$0xf0] %v237
      %v240 = vld [vmem:[%s219 + $0x4] sm:$0x3]
      %v241 = vunpack.c.l.bf16 %v240
      %s242 = scalar_lea.vmem [#allocation2], 24
      %243 = vst [vmem:[%s242 + $0x1] sm:$0xf] %v241
      %v244 = vld [vmem:[%s219 + $0x4] sm:$0xc]
      %v245 = vunpack.c.l.bf16 %v244
      %s246 = scalar_lea.vmem [#allocation2], 32
      %247 = vst [vmem:[%s246 - $0x3] sm:$0xf0] %v245
      %v248 = vld [vmem:[#allocation2] sm:$0xf]
      %v249 = vld [vmem:[#allocation2 + $0x8] sm:$0xf]
      %v250 = vld [vmem:[#allocation2 + $0x10] sm:$0xf]
      %v251 = vld [vmem:[#allocation2 + $0x18] sm:$0xf]
      %v252 = vld [vmem:[#allocation2 + $0x1] sm:$0xf]
      %v253 = vld [vmem:[#allocation2 + $0x9] sm:$0xf]
      %v254 = vld [vmem:[#allocation2 + $0x11] sm:$0xf]
      %v255 = vld [vmem:[#allocation2 + $0x19] sm:$0xf]
      %v256 = vld [vmem:[#allocation2 + $0x2] sm:$0xf]
      %v257 = vld [vmem:[#allocation2 + $0xa] sm:$0xf]
      %v258 = vld [vmem:[#allocation2 + $0x12] sm:$0xf]
      %v259 = vld [vmem:[#allocation2 + $0x1a] sm:$0xf]
      %v260 = vld [vmem:[%s234] sm:$0xf]
      %v261 = vld [vmem:[%s234 + $0x8] sm:$0xf]
      %v262 = vld [vmem:[%s234 + $0x10] sm:$0xf]
      %v263 = vld [vmem:[%s234 + $0x18] sm:$0xf]
      %v264 = vld [vmem:[%s234 + $0x1] sm:$0xf]
      %v265 = vld [vmem:[%s234 + $0x9] sm:$0xf]
      %v266 = vld [vmem:[%s234 + $0x11] sm:$0xf]
      %v267 = vld [vmem:[%s234 + $0x19] sm:$0xf]
      %v268 = vld [vmem:[%s234 + $0x2] sm:$0xf]
      %v269 = vld [vmem:[%s234 + $0xa] sm:$0xf]
      %v270 = vld [vmem:[%s234 + $0x12] sm:$0xf]
      %v271 = vld [vmem:[%s234 + $0x1a] sm:$0xf]
      %v272 = vld [vmem:[%s238] sm:$0xf]
      %v273 = vld [vmem:[%s238 + $0x8] sm:$0xf]
      %v274 = vld [vmem:[%s238 + $0x10] sm:$0xf]
      %v275 = vld [vmem:[%s238 + $0x18] sm:$0xf]
      %v276 = vld [vmem:[%s238 + $0x1] sm:$0xf]
      %v277 = vld [vmem:[%s238 + $0x9] sm:$0xf]
      %v278 = vld [vmem:[%s238 + $0x11] sm:$0xf]
      %v279 = vld [vmem:[%s238 + $0x19] sm:$0xf]
      %v280 = vld [vmem:[%s238 + $0x2] sm:$0xf]
      %v281 = vld [vmem:[%s238 + $0xa] sm:$0xf]
      %v282 = vld [vmem:[%s238 + $0x12] sm:$0xf]
      %v283 = vld [vmem:[%s238 + $0x1a] sm:$0xf]
      %v284 = vld [vmem:[%s1] sm:$0x1]
      %v286 = vlaneseq
      %v287 = vshrl.u32 %v286, 7
      %v288 = vsub.s32 0, %v287
      %v289 = vrot.slane %v284, %v288
      %v291 = vmul.f32 %v248, %v289
      %v292 = vmul.f32 %v249, %v289
      %v293 = vmul.f32 %v250, %v289
      %v294 = vmul.f32 %v251, %v289
      %v295 = vadd.f32 %v291, 0.0
      %v296 = vadd.f32 %v292, 0.0
      %v297 = vadd.f32 %v293, 0.0
      %v298 = vadd.f32 %v294, 0.0
      %s299 = scalar_lea.vmem %s1, 1
      %v300 = vld [vmem:[%s299] sm:$0x1]
      %v302 = vlaneseq
      %v303 = vshrl.u32 %v302, 7
      %v304 = vsub.s32 0, %v303
      %v305 = vrot.slane %v300, %v304
      %v307 = vmul.f32 %v252, %v305
      %v308 = vmul.f32 %v253, %v305
      %v309 = vmul.f32 %v254, %v305
      %v310 = vmul.f32 %v255, %v305
      %v311 = vadd.f32 %v295, %v307
      %v312 = vadd.f32 %v296, %v308
      %v313 = vadd.f32 %v297, %v309
      %v314 = vadd.f32 %v298, %v310
      %s315 = scalar_lea.vmem %s1, 2
      %v316 = vld [vmem:[%s315] sm:$0x1]
      %v318 = vlaneseq
      %v319 = vshrl.u32 %v318, 7
      %v320 = vsub.s32 0, %v319
      %v321 = vrot.slane %v316, %v320
      %v323 = vmul.f32 %v256, %v321
      %v324 = vmul.f32 %v257, %v321
      %v325 = vmul.f32 %v258, %v321
      %v326 = vmul.f32 %v259, %v321
      %v327 = vadd.f32 %v311, %v323
      %v328 = vadd.f32 %v312, %v324
      %v329 = vadd.f32 %v313, %v325
      %v330 = vadd.f32 %v314, %v326
      %s331 = scalar_lea.vmem %s1, 3
      %v332 = vld [vmem:[%s331] sm:$0x1]
      %v334 = vlaneseq
      %v335 = vshrl.u32 %v334, 7
      %v336 = vsub.s32 0, %v335
      %v337 = vrot.slane %v332, %v336
      %v339 = vmul.f32 %v260, %v337
      %v340 = vmul.f32 %v261, %v337
      %v341 = vmul.f32 %v262, %v337
      %v342 = vmul.f32 %v263, %v337
      %v343 = vadd.f32 %v327, %v339
      %v344 = vadd.f32 %v328, %v340
      %v345 = vadd.f32 %v329, %v341
      %v346 = vadd.f32 %v330, %v342
      %s347 = scalar_lea.vmem %s1, 4
      %v348 = vld [vmem:[%s347] sm:$0x1]
      %v350 = vlaneseq
      %v351 = vshrl.u32 %v350, 7
      %v352 = vsub.s32 0, %v351
      %v353 = vrot.slane %v348, %v352
      %v355 = vmul.f32 %v264, %v353
      %v356 = vmul.f32 %v265, %v353
      %v357 = vmul.f32 %v266, %v353
      %v358 = vmul.f32 %v267, %v353
      %v359 = vadd.f32 %v343, %v355
      %v360 = vadd.f32 %v344, %v356
      %v361 = vadd.f32 %v345, %v357
      %v362 = vadd.f32 %v346, %v358
      %s363 = scalar_lea.vmem %s1, 5
      %v364 = vld [vmem:[%s363] sm:$0x1]
      %v366 = vlaneseq
      %v367 = vshrl.u32 %v366, 7
      %v368 = vsub.s32 0, %v367
      %v369 = vrot.slane %v364, %v368
      %v371 = vmul.f32 %v268, %v369
      %v372 = vmul.f32 %v269, %v369
      %v373 = vmul.f32 %v270, %v369
      %v374 = vmul.f32 %v271, %v369
      %v375 = vadd.f32 %v359, %v371
      %v376 = vadd.f32 %v360, %v372
      %v377 = vadd.f32 %v361, %v373
      %v378 = vadd.f32 %v362, %v374
      %s379 = scalar_lea.vmem %s1, 6
      %v380 = vld [vmem:[%s379] sm:$0x1]
      %v382 = vlaneseq
      %v383 = vshrl.u32 %v382, 7
      %v384 = vsub.s32 0, %v383
      %v385 = vrot.slane %v380, %v384
      %v387 = vmul.f32 %v272, %v385
      %v388 = vmul.f32 %v273, %v385
      %v389 = vmul.f32 %v274, %v385
      %v390 = vmul.f32 %v275, %v385
      %v391 = vadd.f32 %v375, %v387
      %v392 = vadd.f32 %v376, %v388
      %v393 = vadd.f32 %v377, %v389
      %v394 = vadd.f32 %v378, %v390
      %s395 = scalar_lea.vmem %s1, 7
      %v396 = vld [vmem:[%s395] sm:$0x1]
      %v398 = vlaneseq
      %v399 = vshrl.u32 %v398, 7
      %v400 = vsub.s32 0, %v399
      %v401 = vrot.slane %v396, %v400
      %v403 = vmul.f32 %v276, %v401
      %v404 = vmul.f32 %v277, %v401
      %v405 = vmul.f32 %v278, %v401
      %v406 = vmul.f32 %v279, %v401
      %v407 = vadd.f32 %v391, %v403
      %v408 = vadd.f32 %v392, %v404
      %v409 = vadd.f32 %v393, %v405
      %v410 = vadd.f32 %v394, %v406
      %s411 = scalar_lea.vmem %s1, 8
      %v412 = vld [vmem:[%s411] sm:$0x1]
      %v414 = vlaneseq
      %v415 = vshrl.u32 %v414, 7
      %v416 = vsub.s32 0, %v415
      %v417 = vrot.slane %v412, %v416
      %v419 = vmul.f32 %v280, %v417
      %v420 = vmul.f32 %v281, %v417
      %v421 = vmul.f32 %v282, %v417
      %v422 = vmul.f32 %v283, %v417
      %v423 = vadd.f32 %v407, %v419
      %v424 = vadd.f32 %v408, %v420
      %v425 = vadd.f32 %v409, %v421
      %v426 = vadd.f32 %v410, %v422
      %v427 = vld [vmem:[%s2] sm:$0x1]
      %v429 = vlaneseq
      %v430 = vshrl.u32 %v429, 7
      %v431 = vsub.s32 0, %v430
      %v432 = vrot.slane %v427, %v431
      %v434 = vadd.f32 %v423, %v432
      %v435 = vadd.f32 %v424, %v432
      %v436 = vadd.f32 %v425, %v432
      %v437 = vadd.f32 %v426, %v432
      %v438 = vmax.f32 %v434, 0.0
      %v439 = vmax.f32 %v435, 0.0
      %v440 = vmax.f32 %v436, 0.0
      %v441 = vmax.f32 %v437, 0.0
      %v446 = vcombine.low %v438, %v439
      %v447 = vcombine.low %v440, %v441
      %v450 = vpack.c.bf16 %v447, %v446
      %v451 = vld [vmem:[%s3] sm:$0xf]
      %v452 = vld [vmem:[%s3 + $0x4] sm:$0xf]
      %v453 = vld [vmem:[%s3 + $0x8] sm:$0xf]
      %v454 = vld [vmem:[%s3 + $0xc] sm:$0xf]
      %v455 = vld [vmem:[%s3 + $0x10] sm:$0xf]
      %v456 = vld [vmem:[%s3 + $0x14] sm:$0xf]
      %v457 = vld [vmem:[%s3 + $0x18] sm:$0xf]
      %v458 = vld [vmem:[%s3 + $0x1c] sm:$0xf]
      %v459 = vld [vmem:[%s3 + $0x20] sm:$0xf]
      %v460 = vld [vmem:[%s3 + $0x24] sm:$0xf]
      %v461 = vld [vmem:[%s3 + $0x28] sm:$0xf]
      %v462 = vld [vmem:[%s3 + $0x2c] sm:$0xf]
      %v463 = vld [vmem:[%s3 + $0x30] sm:$0xf]
      %v464 = vld [vmem:[%s3 + $0x34] sm:$0xf]
      %v465 = vld [vmem:[%s3 + $0x38] sm:$0xf]
      %v466 = vld [vmem:[%s3 + $0x3c] sm:$0xf]
      %v467 = vld [vmem:[%s4] sm:$0x1]
      %v469 = vlaneseq
      %v470 = vshrl.u32 %v469, 7
      %v471 = vsub.s32 0, %v470
      %v472 = vrot.slane %v467, %v471
      %v490 = vunpack.c.l.b16 %v451
      %v491 = vunpack.c.l.b16 %v452
      %v492 = vunpack.c.l.b16 %v453
      %v493 = vunpack.c.l.b16 %v454
      %v494 = vunpack.c.l.b16 %v455
      %v495 = vunpack.c.l.b16 %v456
      %v496 = vunpack.c.l.b16 %v457
      %v497 = vunpack.c.l.b16 %v458
      %v498 = vunpack.c.l.b16 %v459
      %v499 = vunpack.c.l.b16 %v460
      %v500 = vunpack.c.l.b16 %v461
      %v501 = vunpack.c.l.b16 %v462
      %v502 = vunpack.c.l.b16 %v463
      %v503 = vunpack.c.l.b16 %v464
      %v504 = vunpack.c.l.b16 %v465
      %v505 = vunpack.c.l.b16 %v466
      %v506 = vpack.c.b16 %v491, %v490
      %v507 = vpack.c.b16 %v493, %v492
      %v508 = vpack.c.b16 %v495, %v494
      %v509 = vpack.c.b16 %v497, %v496
      %v510 = vpack.c.b16 %v499, %v498
      %v511 = vpack.c.b16 %v501, %v500
      %v512 = vpack.c.b16 %v503, %v502
      %v513 = vpack.c.b16 %v505, %v504
      %522 = vmatprep.subr.bf16.mxu0 0
      %523 = vmatpush1.bf16.msra.mxu0 %v506
      %524 = vmatprep.subr.bf16.mxu0 0
      %525 = vmatpush1.bf16.msra.mxu0 %v507
      %526 = vmatprep.subr.bf16.mxu0 0
      %527 = vmatpush1.bf16.msra.mxu0 %v508
      %528 = vmatprep.subr.bf16.mxu0 0
      %529 = vmatpush1.bf16.msra.mxu0 %v509
      %530 = vmatprep.subr.bf16.mxu0 0
      %531 = vmatpush1.bf16.msra.mxu0 %v510
      %532 = vmatprep.subr.bf16.mxu0 0
      %533 = vmatpush1.bf16.msra.mxu0 %v511
      %534 = vmatprep.subr.bf16.mxu0 0
      %535 = vmatpush1.bf16.msra.mxu0 %v512
      %536 = vmatprep.subr.bf16.mxu0 0
      %537 = vmatpush1.bf16.msra.mxu0 %v513
      %538 = vmatprep.subr.bf16.mxu0 0
      %539 = vmatpush1.bf16.msra.mxu0 0
      %540 = vmatprep.subr.bf16.mxu0 0
      %541 = vmatpush1.bf16.msra.mxu0 0
      %542 = vmatprep.subr.bf16.mxu0 0
      %543 = vmatpush1.bf16.msra.mxu0 0
      %544 = vmatprep.subr.bf16.mxu0 0
      %545 = vmatpush1.bf16.msra.mxu0 0
      %546 = vmatprep.subr.bf16.mxu0 0
      %547 = vmatpush1.bf16.msra.mxu0 0
      %548 = vmatprep.subr.bf16.mxu0 0
      %549 = vmatpush1.bf16.msra.mxu0 0
      %550 = vmatprep.subr.bf16.mxu0 0
      %551 = vmatpush1.bf16.msra.mxu0 0
      %552 = vmatprep.subr.bf16.mxu0 0
      %553 = vmatpush1.bf16.msra.mxu0 0
      %554 = vmatprep.mubr.bf16.mxu0 0
      %555 = vmatmul.mubr.bf16.gmra.mrb[0].mxu0 %v450
      %v556 = vpop.f32.mrb[0].mxu0
      %v557 = vadd.f32 %v472, %v556
      %v558 = vpop.f32.mrb[0].mxu0
      %v559 = vpop.f32.mrb[0].mxu0
      %v560 = vadd.f32 %v472, %v559
      %v561 = vpop.f32.mrb[0].mxu0
      %562 = vdwg.mxu0
      %v563 = vmax.f32 %v557, 0.0
      %v564 = vmax.f32 %v560, 0.0
      %v565 = vpack.c.bf16 %v564, %v563
      %v567 = vunpack.c.l.b16 %v565
      %v568 = vunpack.c.h.b16 %v565
      %v569 = vpack.c.b16 %v567, %v567
      %v570 = vpack.c.b16 %v568, %v568
      %573 = vst [vmem:[%s224] sm:$0xf] %v569
      %574 = vst [vmem:[%s224 + $0x4] sm:$0xf] %v570
      %p575 = scmp.lt.s32.totalorder %s16, 1
      %s576 = scalar_select %p575, %s16, 1
      %s577 = smul.addr %s576, 2
      %s578 = smul.addr %s577, 4
      %s579 = scalar_lea.vmem %s5, %s578
      // Predicated region
      $region41: #{mobilenet_forward.8} parent=39 // pred_check
        %p580 = pneg %p144
      $region42: #{mobilenet_forward.8} parent=39 // pred_check_branch
        %582 = sbr.rel (%p580) target = $region44
      $region43: #{mobilenet_forward.8} parent=39 // pred_region
        _
      $region44: #{mobilenet_forward.8} parent=39 // pred_fallthru
        _
    $region40: #{mobilenet_forward.8} parent=5 // pred_fallthru
      _
    %p583 = scmp.le.s32.totalorder 2, %s11
    // Predicated region
    $region45: #{mobilenet_forward.8} parent=5 // pred_check
      %p584 = pneg %p583
    $region46: #{mobilenet_forward.8} parent=5 // pred_check_branch
      %586 = sbr.rel (%p584) target = $region48
    $region47: #{mobilenet_forward.8} parent=5 // pred_region
      %s587 = ssub.s32 %s11, 2
      // Predicated region
      $region49: #{mobilenet_forward.8} parent=47 // pred_check
        %p588 = pneg %p150
      $region50: #{mobilenet_forward.8} parent=47 // pred_check_branch
        %590 = sbr.rel (%p588) target = $region52
      $region51: #{mobilenet_forward.8} parent=47 // pred_region
        %p591 = scmp.lt.s32.totalorder %s17, 1
        %s592 = scalar_select %p591, %s17, 1
        %s593 = smul.addr %s592, 2
        %s594 = smul.addr %s593, 4
        %s595 = scalar_lea.vmem %s5, %s594
      $region52: #{mobilenet_forward.8} parent=47 // pred_fallthru
        _
    $region48: #{mobilenet_forward.8} parent=5 // pred_fallthru
      _
  $region6: #{mobilenet_forward.8} parent=0 // loop_footer
    %s15 = sadd.s32 1, %s11
  $region7: #{mobilenet_forward.8} parent=0 // loop_footer_branch
    %10 = sbr.rel target = $region3
  $region8: #{mobilenet_forward.8} parent=0 // loop_exit
    _

// kernel: mobilenet_forward.7
$region0: #{mobilenet_forward.7}
  #allocation0 [shape = 'u32[]', space=smem, size = 0x4, offset = 0x4, fixed_abs, tag = 'smem constant byte address 0x4 - core index']
  #allocation1 [shape = 'u32[144,128]{1,0:T(1,128)}', space=vmem, size = 0x12000, scoped, tag = 'internal scratch']
  %s0 = inlined_call_operand.vmem [shape: bf16[2,20,5,128], index: 0, kind: input, shape index: {}]
  %s1 = inlined_call_operand.vmem [shape: f32[9,1,128], index: 1, kind: input, shape index: {}]
  %s2 = inlined_call_operand.vmem [shape: f32[1,128], index: 2, kind: input, shape index: {}]
  %s3 = inlined_call_operand.vmem [shape: bf16[128,128], index: 3, kind: input, shape index: {}]
  %s4 = inlined_call_operand.vmem [shape: f32[1,128], index: 4, kind: input, shape index: {}]
  %s5 = inlined_call_operand.vmem [shape: bf16[2,16,128], index: 5, kind: output, shape index: {}]
  %s6 = sld [smem:[#allocation0]]
  $region53: #{mobilenet_forward.7} parent=0
    _
  %s8 = ssub.s32 1, %s6
  %s9 = scalar_select 0, %s8, %s6
  loop: start=0, step=1, limit=4
  $region2: #{mobilenet_forward.7} parent=0 // loop_pre_header
    _
  $region3: #{mobilenet_forward.7} parent=0 // loop_header
    %s11 = sphi 0, %s15
    %p12 = scmp.ge.s32.totalorder %s11, 4
    %s21 = sphi 0, %s23
    %s24 = sphi 0, %s21
    %s25 = sphi 0, %s24
    %s41 = sphi 0, %s25
    %s45 = sphi 0, %s45
    %s47 = sphi 0, %s45
    %s48 = sphi 0, %s47
    %s62 = sphi 0, %s48
    %s66 = sphi 0, %s66
    %s68 = sphi 0, %s66
    %s69 = sphi 0, %s68
    %s83 = sphi 0, %s69
    %s87 = sphi 0, %s87
    %s89 = sphi 0, %s87
    %s90 = sphi 0, %s89
    %s104 = sphi 0, %s90
    %s108 = sphi 0, %s108
    %s110 = sphi 0, %s108
    %s111 = sphi 0, %s110
    %s125 = sphi 0, %s111
    %s131 = sphi 0, %s133
    %s134 = sphi 0, %s131
    %s135 = sphi 0, %s134
    %s151 = sphi 0, %s135
  $region4: #{mobilenet_forward.7} parent=0 // loop_header_branch
    %14 = sbr.rel (%p12) target = $region8
  $region5: #{mobilenet_forward.7} parent=0 // loop_body
    %s16 = ssub.s32 %s11, 1
    %s17 = ssub.s32 %s11, 2
    %s18 = sadd.s32 %s11, 1
    %s19 = ssub.s32 %s11, %s18
    %p20 = scmp.eq.s32.totalorder %s19, 0
    %s22 = sadd.s32 %s21, 1
    %s23 = scalar_select %p20, %s21, %s22
    %p26 = pneg %p20
    %p27 = scmp.eq.s32.totalorder %s11, 1
    %p28 = por %p26, %p27
    %p29 = scmp.ne.s32.totalorder %s21, %s24
    %p30 = scmp.eq.s32.totalorder %s11, 0
    %p31 = por %p29, %p30
    %p32 = scmp.ne.s32.totalorder %s21, %s24
    %p33 = scmp.eq.s32.totalorder %s16, 1
    %p34 = por %p32, %p33
    %p35 = scmp.ne.s32.totalorder %s24, %s25
    %p36 = scmp.eq.s32.totalorder %s16, 0
    %p37 = por %p35, %p36
    %p38 = scmp.ne.s32.totalorder %s24, %s25
    %p39 = scmp.eq.s32.totalorder %s17, 1
    %p40 = por %p38, %p39
    %p42 = scmp.ne.s32.totalorder %s25, %s41
    %p43 = scmp.eq.s32.totalorder %s17, 0
    %p44 = por %p42, %p43
    %s46 = sadd.s32 %s45, 1
    %p49 = scmp.eq.s32.totalorder %s11, 1
    %p50 = scmp.ne.s32.totalorder %s45, %s47
    %p51 = scmp.eq.s32.totalorder %s11, 0
    %p52 = por %p50, %p51
    %p53 = scmp.ne.s32.totalorder %s45, %s47
    %p54 = scmp.eq.s32.totalorder %s16, 1
    %p55 = por %p53, %p54
    %p56 = scmp.ne.s32.totalorder %s47, %s48
    %p57 = scmp.eq.s32.totalorder %s16, 0
    %p58 = por %p56, %p57
    %p59 = scmp.ne.s32.totalorder %s47, %s48
    %p60 = scmp.eq.s32.totalorder %s17, 1
    %p61 = por %p59, %p60
    %p63 = scmp.ne.s32.totalorder %s48, %s62
    %p64 = scmp.eq.s32.totalorder %s17, 0
    %p65 = por %p63, %p64
    %s67 = sadd.s32 %s66, 1
    %p70 = scmp.eq.s32.totalorder %s11, 1
    %p71 = scmp.ne.s32.totalorder %s66, %s68
    %p72 = scmp.eq.s32.totalorder %s11, 0
    %p73 = por %p71, %p72
    %p74 = scmp.ne.s32.totalorder %s66, %s68
    %p75 = scmp.eq.s32.totalorder %s16, 1
    %p76 = por %p74, %p75
    %p77 = scmp.ne.s32.totalorder %s68, %s69
    %p78 = scmp.eq.s32.totalorder %s16, 0
    %p79 = por %p77, %p78
    %p80 = scmp.ne.s32.totalorder %s68, %s69
    %p81 = scmp.eq.s32.totalorder %s17, 1
    %p82 = por %p80, %p81
    %p84 = scmp.ne.s32.totalorder %s69, %s83
    %p85 = scmp.eq.s32.totalorder %s17, 0
    %p86 = por %p84, %p85
    %s88 = sadd.s32 %s87, 1
    %p91 = scmp.eq.s32.totalorder %s11, 1
    %p92 = scmp.ne.s32.totalorder %s87, %s89
    %p93 = scmp.eq.s32.totalorder %s11, 0
    %p94 = por %p92, %p93
    %p95 = scmp.ne.s32.totalorder %s87, %s89
    %p96 = scmp.eq.s32.totalorder %s16, 1
    %p97 = por %p95, %p96
    %p98 = scmp.ne.s32.totalorder %s89, %s90
    %p99 = scmp.eq.s32.totalorder %s16, 0
    %p100 = por %p98, %p99
    %p101 = scmp.ne.s32.totalorder %s89, %s90
    %p102 = scmp.eq.s32.totalorder %s17, 1
    %p103 = por %p101, %p102
    %p105 = scmp.ne.s32.totalorder %s90, %s104
    %p106 = scmp.eq.s32.totalorder %s17, 0
    %p107 = por %p105, %p106
    %s109 = sadd.s32 %s108, 1
    %p112 = scmp.eq.s32.totalorder %s11, 1
    %p113 = scmp.ne.s32.totalorder %s108, %s110
    %p114 = scmp.eq.s32.totalorder %s11, 0
    %p115 = por %p113, %p114
    %p116 = scmp.ne.s32.totalorder %s108, %s110
    %p117 = scmp.eq.s32.totalorder %s16, 1
    %p118 = por %p116, %p117
    %p119 = scmp.ne.s32.totalorder %s110, %s111
    %p120 = scmp.eq.s32.totalorder %s16, 0
    %p121 = por %p119, %p120
    %p122 = scmp.ne.s32.totalorder %s110, %s111
    %p123 = scmp.eq.s32.totalorder %s17, 1
    %p124 = por %p122, %p123
    %p126 = scmp.ne.s32.totalorder %s111, %s125
    %p127 = scmp.eq.s32.totalorder %s17, 0
    %p128 = por %p126, %p127
    %s129 = ssub.s32 %s11, %s18
    %p130 = scmp.eq.s32.totalorder %s129, 0
    %s132 = sadd.s32 %s131, 1
    %s133 = scalar_select %p130, %s131, %s132
    %p136 = pneg %p130
    %p137 = scmp.eq.s32.totalorder %s11, 1
    %p138 = por %p136, %p137
    %p139 = scmp.ne.s32.totalorder %s131, %s134
    %p140 = scmp.eq.s32.totalorder %s11, 0
    %p141 = por %p139, %p140
    %p142 = scmp.ne.s32.totalorder %s131, %s134
    %p143 = scmp.eq.s32.totalorder %s16, 1
    %p144 = por %p142, %p143
    %p145 = scmp.ne.s32.totalorder %s134, %s135
    %p146 = scmp.eq.s32.totalorder %s16, 0
    %p147 = por %p145, %p146
    %p148 = scmp.ne.s32.totalorder %s134, %s135
    %p149 = scmp.eq.s32.totalorder %s17, 1
    %p150 = por %p148, %p149
    %p152 = scmp.ne.s32.totalorder %s135, %s151
    %p153 = scmp.eq.s32.totalorder %s17, 0
    %p154 = por %p152, %p153
    %p155 = scmp.le.s32.totalorder 1, %s11
    %p156 = scmp.lt.s32.totalorder %s11, 3
    %p157 = pnand %p155, %p156
    %p158 = pneg %p157
    // Predicated region
    $region9: #{mobilenet_forward.7} parent=5 // pred_check
      _
    $region10: #{mobilenet_forward.7} parent=5 // pred_check_branch
      %160 = sbr.rel (%p157) target = $region12
    $region11: #{mobilenet_forward.7} parent=5 // pred_region
      %s161 = ssub.s32 %s11, 1
      // Predicated region
      $region13: #{mobilenet_forward.7} parent=11 // pred_check
        %p162 = pneg %p58
      $region14: #{mobilenet_forward.7} parent=11 // pred_check_branch
        %164 = sbr.rel (%p162) target = $region16
      $region15: #{mobilenet_forward.7} parent=11 // pred_region
        _
      $region16: #{mobilenet_forward.7} parent=11 // pred_fallthru
        _
      // Predicated region
      $region17: #{mobilenet_forward.7} parent=11 // pred_check
        %p165 = pneg %p79
      $region18: #{mobilenet_forward.7} parent=11 // pred_check_branch
        %167 = sbr.rel (%p165) target = $region20
      $region19: #{mobilenet_forward.7} parent=11 // pred_region
        _
      $region20: #{mobilenet_forward.7} parent=11 // pred_fallthru
        _
      // Predicated region
      $region21: #{mobilenet_forward.7} parent=11 // pred_check
        %p168 = pneg %p100
      $region22: #{mobilenet_forward.7} parent=11 // pred_check_branch
        %170 = sbr.rel (%p168) target = $region24
      $region23: #{mobilenet_forward.7} parent=11 // pred_region
        _
      $region24: #{mobilenet_forward.7} parent=11 // pred_fallthru
        _
      // Predicated region
      $region25: #{mobilenet_forward.7} parent=11 // pred_check
        %p171 = pneg %p121
      $region26: #{mobilenet_forward.7} parent=11 // pred_check_branch
        %173 = sbr.rel (%p171) target = $region28
      $region27: #{mobilenet_forward.7} parent=11 // pred_region
        _
      $region28: #{mobilenet_forward.7} parent=11 // pred_fallthru
        _
    $region12: #{mobilenet_forward.7} parent=5 // pred_fallthru
      _
    %p174 = scmp.lt.s32.totalorder %s11, 2
    // Predicated region
    $region29: #{mobilenet_forward.7} parent=5 // pred_check
      %p175 = pneg %p174
    $region30: #{mobilenet_forward.7} parent=5 // pred_check_branch
      %177 = sbr.rel (%p175) target = $region32
    $region31: #{mobilenet_forward.7} parent=5 // pred_region
      // Predicated region
      $region33: #{mobilenet_forward.7} parent=31 // pred_check
        %p178 = pneg %p31
      $region34: #{mobilenet_forward.7} parent=31 // pred_check_branch
        %180 = sbr.rel (%p178) target = $region36
      $region35: #{mobilenet_forward.7} parent=31 // pred_region
        %p181 = scmp.lt.s32.totalorder %s11, 1
        %s182 = scalar_select %p181, %s11, 1
        %s183 = smul.addr %s182, 20
        %s184 = smul.addr %s183, 4
        %s185 = scalar_lea.vmem %s0, %s184
      $region36: #{mobilenet_forward.7} parent=31 // pred_fallthru
        _
    $region32: #{mobilenet_forward.7} parent=5 // pred_fallthru
      _
    %p186 = scmp.le.s32.totalorder 1, %s11
    %p187 = scmp.lt.s32.totalorder %s11, 3
    %p188 = pnand %p186, %p187
    %p189 = pneg %p188
    // Predicated region
    $region37: #{mobilenet_forward.7} parent=5 // pred_check
      _
    $region38: #{mobilenet_forward.7} parent=5 // pred_check_branch
      %191 = sbr.rel (%p188) target = $region40
    $region39: #{mobilenet_forward.7} parent=5 // pred_region
      %s192 = ssub.s32 %s11, 1
      %p193 = scmp.lt.s32.totalorder %s16, 1
      %s194 = scalar_select %p193, %s16, 1
      %s195 = smul.addr %s194, 20
      %s196 = smul.addr %s195, 4
      %s197 = scalar_lea.vmem %s0, %s196
      %p198 = pneg %p37
      %p199 = pneg %p34
      %p200 = pneg %p58
      %p201 = pneg %p55
      %p202 = pneg %p79
      %p203 = pneg %p76
      %p204 = pneg %p100
      %p205 = pneg %p97
      %p206 = pneg %p121
      %p207 = pneg %p118
      %p208 = pneg %p147
      %p209 = pneg %p144
      %p210 = scmp.lt.s32.totalorder %s16, 1
      %s211 = scalar_select %p210, %s16, 1
      %s212 = smul.addr %s211, 2
      %s213 = smul.addr %s212, 4
      %s214 = scalar_lea.vmem %s5, %s213
      %p215 = scmp.lt.s32.totalorder %s16, 1
      %s216 = scalar_select %p215, %s16, 1
      %s217 = smul.addr %s216, 20
      %s218 = smul.addr %s217, 4
      %s219 = scalar_lea.vmem %s0, %s218
      %p220 = scmp.lt.s32.totalorder %s16, 1
      %s221 = scalar_select %p220, %s16, 1
      %s222 = smul.addr %s221, 2
      %s223 = smul.addr %s222, 4
      %s224 = scalar_lea.vmem %s5, %s223
      %v226 = vld [vmem:[%s219] sm:$0x7]
      %v227 = vld [vmem:[%s219 + $0x4] sm:$0x7]
      %v228 = vld [vmem:[%s219 + $0x8] sm:$0x7]
      %v229 = vld [vmem:[%s219 + $0xc] sm:$0x7]
      %v230 = vld [vmem:[%s219 + $0x10] sm:$0x7]
      %v231 = vld [vmem:[%s219 + $0x14] sm:$0x7]
      %v232 = vld [vmem:[%s219 + $0x18] sm:$0x7]
      %v233 = vld [vmem:[%s219 + $0x1c] sm:$0x7]
      %v234 = vld [vmem:[%s219 + $0x20] sm:$0x7]
      %v235 = vld [vmem:[%s219 + $0x24] sm:$0x7]
      %v236 = vld [vmem:[%s219 + $0x28] sm:$0x7]
      %v237 = vld [vmem:[%s219 + $0x2c] sm:$0x7]
      %v238 = vld [vmem:[%s219 + $0x30] sm:$0x7]
      %v239 = vld [vmem:[%s219 + $0x34] sm:$0x7]
      %v240 = vld [vmem:[%s219 + $0x3c] sm:$0x7]
      %v241 = vld [vmem:[%s219 + $0x40] sm:$0x7]
      %v242 = vld [vmem:[%s219 + $0x44] sm:$0x7]
      %v243 = vld [vmem:[%s219 + $0x48] sm:$0x7]
      %v244 = vunpack.c.l.bf16 %v226
      %v245 = vunpack.c.l.bf16 %v227
      %v246 = vunpack.c.l.bf16 %v228
      %v247 = vunpack.c.l.bf16 %v229
      %v248 = vunpack.c.l.bf16 %v230
      %v249 = vunpack.c.l.bf16 %v231
      %v250 = vunpack.c.l.bf16 %v232
      %v251 = vunpack.c.l.bf16 %v233
      %v252 = vunpack.c.l.bf16 %v234
      %v253 = vunpack.c.l.bf16 %v235
      %v254 = vunpack.c.l.bf16 %v236
      %v255 = vunpack.c.l.bf16 %v237
      %v256 = vunpack.c.l.bf16 %v238
      %v257 = vunpack.c.l.bf16 %v239
      %v258 = vunpack.c.l.bf16 %v240
      %v259 = vunpack.c.l.bf16 %v241
      %v260 = vunpack.c.l.bf16 %v242
      %v261 = vunpack.c.l.bf16 %v243
      %v262 = vld [vmem:[%s1] sm:$0x1]
      %v264 = vlaneseq
      %v265 = vshrl.u32 %v264, 7
      %v266 = vsub.s32 0, %v265
      %v267 = vrot.slane %v262, %v266
      %v269 = vmul.f32 %v244, %v267
      %v270 = vmul.f32 %v245, %v267
      %v271 = vmul.f32 %v246, %v267
      %v272 = vmul.f32 %v247, %v267
      %v273 = vadd.f32 %v269, 0.0
      %v274 = vadd.f32 %v270, 0.0
      %v275 = vadd.f32 %v271, 0.0
      %v276 = vadd.f32 %v272, 0.0
      %s277 = scalar_lea.vmem %s1, 1
      %v278 = vld [vmem:[%s277] sm:$0x1]
      %v280 = vlaneseq
      %v281 = vshrl.u32 %v280, 7
      %v282 = vsub.s32 0, %v281
      %v283 = vrot.slane %v278, %v282
      %v285 = vmul.f32 %v249, %v283
      %v286 = vmul.f32 %v250, %v283
      %v287 = vmul.f32 %v251, %v283
      %v288 = vmul.f32 %v252, %v283
      %v289 = vadd.f32 %v273, %v285
      %v290 = vadd.f32 %v274, %v286
      %v291 = vadd.f32 %v275, %v287
      %v292 = vadd.f32 %v276, %v288
      %s293 = scalar_lea.vmem %s1, 2
      %v294 = vld [vmem:[%s293] sm:$0x1]
      %v296 = vlaneseq
      %v297 = vshrl.u32 %v296, 7
      %v298 = vsub.s32 0, %v297
      %v299 = vrot.slane %v294, %v298
      %v301 = vmul.f32 %v244, %v299
      %v302 = vmul.f32 %v245, %v299
      %v303 = vmul.f32 %v246, %v299
      %v304 = vmul.f32 %v247, %v299
      %v309 = vrot.slane %v301, 1
      %v310 = vrot.slane %v302, 1
      %v311 = vrot.slane %v303, 1
      %v312 = vrot.slane %v304, 1
      %v317 = vadd.f32 %v289, %v309
      %v318 = vadd.f32 %v290, %v310
      %v319 = vadd.f32 %v291, %v311
      %v320 = vadd.f32 %v292, %v312
      %s321 = scalar_lea.vmem %s1, 3
      %v322 = vld [vmem:[%s321] sm:$0x1]
      %v324 = vlaneseq
      %v325 = vshrl.u32 %v324, 7
      %v326 = vsub.s32 0, %v325
      %v327 = vrot.slane %v322, %v326
      %v329 = vmul.f32 %v254, %v327
      %v330 = vmul.f32 %v255, %v327
      %v331 = vmul.f32 %v256, %v327
      %v332 = vmul.f32 %v257, %v327
      %v333 = vadd.f32 %v317, %v329
      %v334 = vadd.f32 %v318, %v330
      %v335 = vadd.f32 %v319, %v331
      %v336 = vadd.f32 %v320, %v332
      %s337 = scalar_lea.vmem %s1, 4
      %v338 = vld [vmem:[%s337] sm:$0x1]
      %v340 = vlaneseq
      %v341 = vshrl.u32 %v340, 7
      %v342 = vsub.s32 0, %v341
      %v343 = vrot.slane %v338, %v342
      %v345 = vmul.f32 %v258, %v343
      %v346 = vmul.f32 %v259, %v343
      %v347 = vmul.f32 %v260, %v343
      %v348 = vmul.f32 %v261, %v343
      %v349 = vadd.f32 %v333, %v345
      %v350 = vadd.f32 %v334, %v346
      %v351 = vadd.f32 %v335, %v347
      %v352 = vadd.f32 %v336, %v348
      %s353 = scalar_lea.vmem %s1, 5
      %v354 = vld [vmem:[%s353] sm:$0x1]
      %v356 = vlaneseq
      %v357 = vshrl.u32 %v356, 7
      %v358 = vsub.s32 0, %v357
      %v359 = vrot.slane %v354, %v358
      %v361 = vmul.f32 %v254, %v359
      %v362 = vmul.f32 %v255, %v359
      %v363 = vmul.f32 %v256, %v359
      %v364 = vmul.f32 %v257, %v359
      %v369 = vrot.slane %v361, 1
      %v370 = vrot.slane %v362, 1
      %v371 = vrot.slane %v363, 1
      %v372 = vrot.slane %v364, 1
      %v377 = vadd.f32 %v349, %v369
      %v378 = vadd.f32 %v350, %v370
      %v379 = vadd.f32 %v351, %v371
      %v380 = vadd.f32 %v352, %v372
      %s381 = scalar_lea.vmem %s1, 6
      %v382 = vld [vmem:[%s381] sm:$0x1]
      %v384 = vlaneseq
      %v385 = vshrl.u32 %v384, 7
      %v386 = vsub.s32 0, %v385
      %v387 = vrot.slane %v382, %v386
      %v389 = vmul.f32 %v245, %v387
      %v390 = vmul.f32 %v246, %v387
      %v391 = vmul.f32 %v247, %v387
      %v392 = vmul.f32 %v248, %v387
      %v393 = vadd.f32 %v377, %v389
      %v394 = vadd.f32 %v378, %v390
      %v395 = vadd.f32 %v379, %v391
      %v396 = vadd.f32 %v380, %v392
      %s397 = scalar_lea.vmem %s1, 7
      %v398 = vld [vmem:[%s397] sm:$0x1]
      %v400 = vlaneseq
      %v401 = vshrl.u32 %v400, 7
      %v402 = vsub.s32 0, %v401
      %v403 = vrot.slane %v398, %v402
      %v405 = vmul.f32 %v250, %v403
      %v406 = vmul.f32 %v251, %v403
      %v407 = vmul.f32 %v252, %v403
      %v408 = vmul.f32 %v253, %v403
      %v409 = vadd.f32 %v393, %v405
      %v410 = vadd.f32 %v394, %v406
      %v411 = vadd.f32 %v395, %v407
      %v412 = vadd.f32 %v396, %v408
      %s413 = scalar_lea.vmem %s1, 8
      %v414 = vld [vmem:[%s413] sm:$0x1]
      %v416 = vlaneseq
      %v417 = vshrl.u32 %v416, 7
      %v418 = vsub.s32 0, %v417
      %v419 = vrot.slane %v414, %v418
      %v421 = vmul.f32 %v245, %v419
      %v422 = vmul.f32 %v246, %v419
      %v423 = vmul.f32 %v247, %v419
      %v424 = vmul.f32 %v248, %v419
      %v429 = vrot.slane %v421, 1
      %v430 = vrot.slane %v422, 1
      %v431 = vrot.slane %v423, 1
      %v432 = vrot.slane %v424, 1
      %v437 = vadd.f32 %v409, %v429
      %v438 = vadd.f32 %v410, %v430
      %v439 = vadd.f32 %v411, %v431
      %v440 = vadd.f32 %v412, %v432
      %v441 = vld [vmem:[%s2] sm:$0x1]
      %v443 = vlaneseq
      %v444 = vshrl.u32 %v443, 7
      %v445 = vsub.s32 0, %v444
      %v446 = vrot.slane %v441, %v445
      %v448 = vadd.f32 %v437, %v446
      %v449 = vadd.f32 %v438, %v446
      %v450 = vadd.f32 %v439, %v446
      %v451 = vadd.f32 %v440, %v446
      %v452 = vmax.f32 %v448, 0.0
      %v453 = vmax.f32 %v449, 0.0
      %v454 = vmax.f32 %v450, 0.0
      %v455 = vmax.f32 %v451, 0.0
      %v460 = vcombine.low %v452, %v453
      %v461 = vcombine.low %v454, %v455
      %v464 = vpack.c.bf16 %v461, %v460
      %v465 = vld [vmem:[%s3] sm:$0xf]
      %v466 = vld [vmem:[%s3 + $0x4] sm:$0xf]
      %v467 = vld [vmem:[%s3 + $0x8] sm:$0xf]
      %v468 = vld [vmem:[%s3 + $0xc] sm:$0xf]
      %v469 = vld [vmem:[%s3 + $0x10] sm:$0xf]
      %v470 = vld [vmem:[%s3 + $0x14] sm:$0xf]
      %v471 = vld [vmem:[%s3 + $0x18] sm:$0xf]
      %v472 = vld [vmem:[%s3 + $0x1c] sm:$0xf]
      %v473 = vld [vmem:[%s3 + $0x20] sm:$0xf]
      %v474 = vld [vmem:[%s3 + $0x24] sm:$0xf]
      %v475 = vld [vmem:[%s3 + $0x28] sm:$0xf]
      %v476 = vld [vmem:[%s3 + $0x2c] sm:$0xf]
      %v477 = vld [vmem:[%s3 + $0x30] sm:$0xf]
      %v478 = vld [vmem:[%s3 + $0x34] sm:$0xf]
      %v479 = vld [vmem:[%s3 + $0x38] sm:$0xf]
      %v480 = vld [vmem:[%s3 + $0x3c] sm:$0xf]
      %v481 = vld [vmem:[%s4] sm:$0x1]
      %v483 = vlaneseq
      %v484 = vshrl.u32 %v483, 7
      %v485 = vsub.s32 0, %v484
      %v486 = vrot.slane %v481, %v485
      %v504 = vunpack.c.l.b16 %v465
      %v505 = vunpack.c.l.b16 %v466
      %v506 = vunpack.c.l.b16 %v467
      %v507 = vunpack.c.l.b16 %v468
      %v508 = vunpack.c.l.b16 %v469
      %v509 = vunpack.c.l.b16 %v470
      %v510 = vunpack.c.l.b16 %v471
      %v511 = vunpack.c.l.b16 %v472
      %v512 = vunpack.c.l.b16 %v473
      %v513 = vunpack.c.l.b16 %v474
      %v514 = vunpack.c.l.b16 %v475
      %v515 = vunpack.c.l.b16 %v476
      %v516 = vunpack.c.l.b16 %v477
      %v517 = vunpack.c.l.b16 %v478
      %v518 = vunpack.c.l.b16 %v479
      %v519 = vunpack.c.l.b16 %v480
      %v520 = vpack.c.b16 %v505, %v504
      %v521 = vpack.c.b16 %v507, %v506
      %v522 = vpack.c.b16 %v509, %v508
      %v523 = vpack.c.b16 %v511, %v510
      %v524 = vpack.c.b16 %v513, %v512
      %v525 = vpack.c.b16 %v515, %v514
      %v526 = vpack.c.b16 %v517, %v516
      %v527 = vpack.c.b16 %v519, %v518
      %536 = vmatprep.subr.bf16.mxu0 0
      %537 = vmatpush1.bf16.msra.mxu0 %v520
      %538 = vmatprep.subr.bf16.mxu0 0
      %539 = vmatpush1.bf16.msra.mxu0 %v521
      %540 = vmatprep.subr.bf16.mxu0 0
      %541 = vmatpush1.bf16.msra.mxu0 %v522
      %542 = vmatprep.subr.bf16.mxu0 0
      %543 = vmatpush1.bf16.msra.mxu0 %v523
      %544 = vmatprep.subr.bf16.mxu0 0
      %545 = vmatpush1.bf16.msra.mxu0 %v524
      %546 = vmatprep.subr.bf16.mxu0 0
      %547 = vmatpush1.bf16.msra.mxu0 %v525
      %548 = vmatprep.subr.bf16.mxu0 0
      %549 = vmatpush1.bf16.msra.mxu0 %v526
      %550 = vmatprep.subr.bf16.mxu0 0
      %551 = vmatpush1.bf16.msra.mxu0 %v527
      %552 = vmatprep.subr.bf16.mxu0 0
      %553 = vmatpush1.bf16.msra.mxu0 0
      %554 = vmatprep.subr.bf16.mxu0 0
      %555 = vmatpush1.bf16.msra.mxu0 0
      %556 = vmatprep.subr.bf16.mxu0 0
      %557 = vmatpush1.bf16.msra.mxu0 0
      %558 = vmatprep.subr.bf16.mxu0 0
      %559 = vmatpush1.bf16.msra.mxu0 0
      %560 = vmatprep.subr.bf16.mxu0 0
      %561 = vmatpush1.bf16.msra.mxu0 0
      %562 = vmatprep.subr.bf16.mxu0 0
      %563 = vmatpush1.bf16.msra.mxu0 0
      %564 = vmatprep.subr.bf16.mxu0 0
      %565 = vmatpush1.bf16.msra.mxu0 0
      %566 = vmatprep.subr.bf16.mxu0 0
      %567 = vmatpush1.bf16.msra.mxu0 0
      %568 = vmatprep.mubr.bf16.mxu0 0
      %569 = vmatmul.mubr.bf16.gmra.mrb[0].mxu0 %v464
      %v570 = vpop.f32.mrb[0].mxu0
      %v571 = vadd.f32 %v486, %v570
      %v572 = vpop.f32.mrb[0].mxu0
      %v573 = vpop.f32.mrb[0].mxu0
      %v574 = vadd.f32 %v486, %v573
      %v575 = vpop.f32.mrb[0].mxu0
      %576 = vdwg.mxu0
      %v577 = vmax.f32 %v571, 0.0
      %v578 = vmax.f32 %v574, 0.0
      %v579 = vpack.c.bf16 %v578, %v577
      %v581 = vunpack.c.l.b16 %v579
      %v582 = vunpack.c.h.b16 %v579
      %v583 = vpack.c.b16 %v581, %v581
      %v584 = vpack.c.b16 %v582, %v582
      %587 = vst [vmem:[%s224] sm:$0xf] %v583
      %588 = vst [vmem:[%s224 + $0x4] sm:$0xf] %v584
      %p589 = scmp.lt.s32.totalorder %s16, 1
      %s590 = scalar_select %p589, %s16, 1
      %s591 = smul.addr %s590, 2
      %s592 = smul.addr %s591, 4
      %s593 = scalar_lea.vmem %s5, %s592
      // Predicated region
      $region41: #{mobilenet_forward.7} parent=39 // pred_check
        %p594 = pneg %p144
      $region42: #{mobilenet_forward.7} parent=39 // pred_check_branch
        %596 = sbr.rel (%p594) target = $region44
      $region43: #{mobilenet_forward.7} parent=39 // pred_region
        _
      $region44: #{mobilenet_forward.7} parent=39 // pred_fallthru
        _
    $region40: #{mobilenet_forward.7} parent=5 // pred_fallthru
      _
    %p597 = scmp.le.s32.totalorder 2, %s11
    // Predicated region
    $region45: #{mobilenet_forward.7} parent=5 // pred_check
      %p598 = pneg %p597
    $region46: #{mobilenet_forward.7} parent=5 // pred_check_branch
      %600 = sbr.rel (%p598) target = $region48
    $region47: #{mobilenet_forward.7} parent=5 // pred_region
      %s601 = ssub.s32 %s11, 2
      // Predicated region
      $region49: #{mobilenet_forward.7} parent=47 // pred_check
        %p602 = pneg %p150
      $region50: #{mobilenet_forward.7} parent=47 // pred_check_branch
        %604 = sbr.rel (%p602) target = $region52
      $region51: #{mobilenet_forward.7} parent=47 // pred_region
        %p605 = scmp.lt.s32.totalorder %s17, 1
        %s606 = scalar_select %p605, %s17, 1
        %s607 = smul.addr %s606, 2
        %s608 = smul.addr %s607, 4
        %s609 = scalar_lea.vmem %s5, %s608
      $region52: #{mobilenet_forward.7} parent=47 // pred_fallthru
        _
    $region48: #{mobilenet_forward.7} parent=5 // pred_fallthru
      _
  $region6: #{mobilenet_forward.7} parent=0 // loop_footer
    %s15 = sadd.s32 1, %s11
  $region7: #{mobilenet_forward.7} parent=0 // loop_footer_branch
    %10 = sbr.rel target = $region3
  $region8: #{mobilenet_forward.7} parent=0 // loop_exit
    _

// kernel: mobilenet_forward.9
$region0: #{mobilenet_forward.9}
  #allocation0 [shape = 'u32[]', space=smem, size = 0x4, offset = 0x4, fixed_abs, tag = 'smem constant byte address 0x4 - core index']
  #allocation1 [shape = 'u32[144,128]{1,0:T(1,128)}', space=vmem, size = 0x12000, scoped, tag = 'internal scratch']
  %s0 = inlined_call_operand.vmem [shape: bf16[2,16,128], index: 0, kind: input, shape index: {}]
  %s1 = inlined_call_operand.vmem [shape: bf16[128,128], index: 1, kind: input, shape index: {}]
  %s2 = inlined_call_operand.vmem [shape: f32[1,128], index: 2, kind: input, shape index: {}]
  %s3 = inlined_call_operand.hbm [shape: f32[2,1,128], index: 3, kind: output, shape index: {}]
  %s4 = sld [smem:[#allocation0]]
  $region45: #{mobilenet_forward.9} parent=0
    _
  %s6 = ssub.s32 1, %s4
  %s7 = scalar_select 0, %s6, %s4
  $region1: #{mobilenet_forward.9} parent=0
    #allocation2 [shape = 'u8[1024]{0}', space=vmem, size = 0x400, scoped, tag = 'output window, operand 0']
    #allocation3 [shape = 's32[2]{0}', space=sflag, size = 0x8, scoped, tag = 'scoped memory for mobilenet_forward.9']
    %8 = vsyncpa [#allocation3], 0
    %s9 = scalar_lea.sflag [#allocation3], 1
    %10 = vsyncpa %s9, 0
    loop: start=0, step=1, limit=4
    $region2: #{mobilenet_forward.9} parent=1 // loop_pre_header
      _
    $region3: #{mobilenet_forward.9} parent=1 // loop_header
      %s12 = sphi 0, %s16
      %p13 = scmp.ge.s32.totalorder %s12, 4
      %s22 = sphi 0, %s24
      %s25 = sphi 0, %s22
      %s26 = sphi 0, %s25
      %s42 = sphi 0, %s26
      %s46 = sphi 0, %s46
      %s48 = sphi 0, %s46
      %s49 = sphi 0, %s48
      %s63 = sphi 0, %s49
      %s67 = sphi 0, %s67
      %s69 = sphi 0, %s67
      %s70 = sphi 0, %s69
      %s84 = sphi 0, %s70
      %s90 = sphi 0, %s92
      %s93 = sphi 0, %s90
      %s94 = sphi 0, %s93
      %s110 = sphi 0, %s94
    $region4: #{mobilenet_forward.9} parent=1 // loop_header_branch
      %15 = sbr.rel (%p13) target = $region8
    $region5: #{mobilenet_forward.9} parent=1 // loop_body
      %s17 = ssub.s32 %s12, 1
      %s18 = ssub.s32 %s12, 2
      %s19 = sadd.s32 %s12, 1
      %s20 = ssub.s32 %s12, %s19
      %p21 = scmp.eq.s32.totalorder %s20, 0
      %s23 = sadd.s32 %s22, 1
      %s24 = scalar_select %p21, %s22, %s23
      %p27 = pneg %p21
      %p28 = scmp.eq.s32.totalorder %s12, 1
      %p29 = por %p27, %p28
      %p30 = scmp.ne.s32.totalorder %s22, %s25
      %p31 = scmp.eq.s32.totalorder %s12, 0
      %p32 = por %p30, %p31
      %p33 = scmp.ne.s32.totalorder %s22, %s25
      %p34 = scmp.eq.s32.totalorder %s17, 1
      %p35 = por %p33, %p34
      %p36 = scmp.ne.s32.totalorder %s25, %s26
      %p37 = scmp.eq.s32.totalorder %s17, 0
      %p38 = por %p36, %p37
      %p39 = scmp.ne.s32.totalorder %s25, %s26
      %p40 = scmp.eq.s32.totalorder %s18, 1
      %p41 = por %p39, %p40
      %p43 = scmp.ne.s32.totalorder %s26, %s42
      %p44 = scmp.eq.s32.totalorder %s18, 0
      %p45 = por %p43, %p44
      %s47 = sadd.s32 %s46, 1
      %p50 = scmp.eq.s32.totalorder %s12, 1
      %p51 = scmp.ne.s32.totalorder %s46, %s48
      %p52 = scmp.eq.s32.totalorder %s12, 0
      %p53 = por %p51, %p52
      %p54 = scmp.ne.s32.totalorder %s46, %s48
      %p55 = scmp.eq.s32.totalorder %s17, 1
      %p56 = por %p54, %p55
      %p57 = scmp.ne.s32.totalorder %s48, %s49
      %p58 = scmp.eq.s32.totalorder %s17, 0
      %p59 = por %p57, %p58
      %p60 = scmp.ne.s32.totalorder %s48, %s49
      %p61 = scmp.eq.s32.totalorder %s18, 1
      %p62 = por %p60, %p61
      %p64 = scmp.ne.s32.totalorder %s49, %s63
      %p65 = scmp.eq.s32.totalorder %s18, 0
      %p66 = por %p64, %p65
      %s68 = sadd.s32 %s67, 1
      %p71 = scmp.eq.s32.totalorder %s12, 1
      %p72 = scmp.ne.s32.totalorder %s67, %s69
      %p73 = scmp.eq.s32.totalorder %s12, 0
      %p74 = por %p72, %p73
      %p75 = scmp.ne.s32.totalorder %s67, %s69
      %p76 = scmp.eq.s32.totalorder %s17, 1
      %p77 = por %p75, %p76
      %p78 = scmp.ne.s32.totalorder %s69, %s70
      %p79 = scmp.eq.s32.totalorder %s17, 0
      %p80 = por %p78, %p79
      %p81 = scmp.ne.s32.totalorder %s69, %s70
      %p82 = scmp.eq.s32.totalorder %s18, 1
      %p83 = por %p81, %p82
      %p85 = scmp.ne.s32.totalorder %s70, %s84
      %p86 = scmp.eq.s32.totalorder %s18, 0
      %p87 = por %p85, %p86
      %s88 = ssub.s32 %s12, %s19
      %p89 = scmp.eq.s32.totalorder %s88, 0
      %s91 = sadd.s32 %s90, 1
      %s92 = scalar_select %p89, %s90, %s91
      %p95 = pneg %p89
      %p96 = scmp.eq.s32.totalorder %s12, 1
      %p97 = por %p95, %p96
      %p98 = scmp.ne.s32.totalorder %s90, %s93
      %p99 = scmp.eq.s32.totalorder %s12, 0
      %p100 = por %p98, %p99
      %p101 = scmp.ne.s32.totalorder %s90, %s93
      %p102 = scmp.eq.s32.totalorder %s17, 1
      %p103 = por %p101, %p102
      %p104 = scmp.ne.s32.totalorder %s93, %s94
      %p105 = scmp.eq.s32.totalorder %s17, 0
      %p106 = por %p104, %p105
      %p107 = scmp.ne.s32.totalorder %s93, %s94
      %p108 = scmp.eq.s32.totalorder %s18, 1
      %p109 = por %p107, %p108
      %p111 = scmp.ne.s32.totalorder %s94, %s110
      %p112 = scmp.eq.s32.totalorder %s18, 0
      %p113 = por %p111, %p112
      %p114 = scmp.le.s32.totalorder 1, %s12
      %p115 = scmp.lt.s32.totalorder %s12, 3
      %p116 = pnand %p114, %p115
      %p117 = pneg %p116
      // Predicated region
      $region9: #{mobilenet_forward.9} parent=5 // pred_check
        _
      $region10: #{mobilenet_forward.9} parent=5 // pred_check_branch
        %119 = sbr.rel (%p116) target = $region12
      $region11: #{mobilenet_forward.9} parent=5 // pred_region
        %s120 = ssub.s32 %s12, 1
        // Predicated region
        $region13: #{mobilenet_forward.9} parent=11 // pred_check
          %p121 = pneg %p59
        $region14: #{mobilenet_forward.9} parent=11 // pred_check_branch
          %123 = sbr.rel (%p121) target = $region16
        $region15: #{mobilenet_forward.9} parent=11 // pred_region
          _
        $region16: #{mobilenet_forward.9} parent=11 // pred_fallthru
          _
        // Predicated region
        $region17: #{mobilenet_forward.9} parent=11 // pred_check
          %p124 = pneg %p80
        $region18: #{mobilenet_forward.9} parent=11 // pred_check_branch
          %126 = sbr.rel (%p124) target = $region20
        $region19: #{mobilenet_forward.9} parent=11 // pred_region
          _
        $region20: #{mobilenet_forward.9} parent=11 // pred_fallthru
          _
      $region12: #{mobilenet_forward.9} parent=5 // pred_fallthru
        _
      %p127 = scmp.lt.s32.totalorder %s12, 2
      // Predicated region
      $region21: #{mobilenet_forward.9} parent=5 // pred_check
        %p128 = pneg %p127
      $region22: #{mobilenet_forward.9} parent=5 // pred_check_branch
        %130 = sbr.rel (%p128) target = $region24
      $region23: #{mobilenet_forward.9} parent=5 // pred_region
        // Predicated region
        $region25: #{mobilenet_forward.9} parent=23 // pred_check
          %p131 = pneg %p32
        $region26: #{mobilenet_forward.9} parent=23 // pred_check_branch
          %133 = sbr.rel (%p131) target = $region28
        $region27: #{mobilenet_forward.9} parent=23 // pred_region
          %p134 = scmp.lt.s32.totalorder %s12, 1
          %s135 = scalar_select %p134, %s12, 1
          %s136 = smul.addr %s135, 2
          %s137 = smul.addr %s136, 4
          %s138 = scalar_lea.vmem %s0, %s137
        $region28: #{mobilenet_forward.9} parent=23 // pred_fallthru
          _
      $region24: #{mobilenet_forward.9} parent=5 // pred_fallthru
        _
      %p139 = scmp.le.s32.totalorder 1, %s12
      %p140 = scmp.lt.s32.totalorder %s12, 3
      %p141 = pnand %p139, %p140
      %p142 = pneg %p141
      // Predicated region
      $region29: #{mobilenet_forward.9} parent=5 // pred_check
        _
      $region30: #{mobilenet_forward.9} parent=5 // pred_check_branch
        %144 = sbr.rel (%p141) target = $region32
      $region31: #{mobilenet_forward.9} parent=5 // pred_region
        %s145 = ssub.s32 %s12, 1
        %p146 = scmp.lt.s32.totalorder %s17, 1
        %s147 = scalar_select %p146, %s17, 1
        %s148 = smul.addr %s147, 2
        %s149 = smul.addr %s148, 4
        %s150 = scalar_lea.vmem %s0, %s149
        %p151 = pneg %p38
        %p152 = pneg %p35
        %p153 = pneg %p59
        %p154 = pneg %p56
        %p155 = pneg %p80
        %p156 = pneg %p77
        %p157 = pneg %p106
        %p158 = pneg %p103
        %s159 = sand.u32 %s93, 1
        %s160 = scalar_lea.sflag [#allocation3], %s159
        %s161 = sand.u32 %s93, 1
        %s162 = scalar_lea.vmem [#allocation2], %s161
        %p163 = scmp.lt.s32.totalorder %s17, 1
        %s164 = scalar_select %p163, %s17, 1
        %s165 = smul.addr %s164, 2
        %s166 = smul.addr %s165, 4
        %s167 = scalar_lea.vmem %s0, %s166
        %v169 = vld [vmem:[%s167] sm:$0xf]
        %v170 = vld [vmem:[%s167 + $0x4] sm:$0xf]
        %v171 = vunpack.c.l.bf16 %v169
        %v172 = vunpack.c.l.bf16 %v170
        %v173 = vadd.f32 %v171, %v172
        %v174 = vrot.slane %v173, 4
        %v175 = vadd.f32 %v173, %v174
        %v176 = vrot.slane %v175, 2
        %v177 = vadd.f32 %v175, %v176
        %v178 = vrot.slane %v177, 1
        %v179 = vadd.f32 %v177, %v178
        %v180 = vrcp.pop 16.0
        %v181 = vmul.f32 %v179, %v180
        %v182 = vpack.c.bf16 %v181, %v181
        %v183 = vld [vmem:[%s1] sm:$0xf]
        %v184 = vld [vmem:[%s1 + $0x4] sm:$0xf]
        %v185 = vld [vmem:[%s1 + $0x8] sm:$0xf]
        %v186 = vld [vmem:[%s1 + $0xc] sm:$0xf]
        %v187 = vld [vmem:[%s1 + $0x10] sm:$0xf]
        %v188 = vld [vmem:[%s1 + $0x14] sm:$0xf]
        %v189 = vld [vmem:[%s1 + $0x18] sm:$0xf]
        %v190 = vld [vmem:[%s1 + $0x1c] sm:$0xf]
        %v191 = vld [vmem:[%s1 + $0x20] sm:$0xf]
        %v192 = vld [vmem:[%s1 + $0x24] sm:$0xf]
        %v193 = vld [vmem:[%s1 + $0x28] sm:$0xf]
        %v194 = vld [vmem:[%s1 + $0x2c] sm:$0xf]
        %v195 = vld [vmem:[%s1 + $0x30] sm:$0xf]
        %v196 = vld [vmem:[%s1 + $0x34] sm:$0xf]
        %v197 = vld [vmem:[%s1 + $0x38] sm:$0xf]
        %v198 = vld [vmem:[%s1 + $0x3c] sm:$0xf]
        %v199 = vld [vmem:[%s2] sm:$0x1]
        %v216 = vunpack.c.l.b16 %v183
        %v217 = vunpack.c.l.b16 %v184
        %v218 = vunpack.c.l.b16 %v185
        %v219 = vunpack.c.l.b16 %v186
        %v220 = vunpack.c.l.b16 %v187
        %v221 = vunpack.c.l.b16 %v188
        %v222 = vunpack.c.l.b16 %v189
        %v223 = vunpack.c.l.b16 %v190
        %v224 = vunpack.c.l.b16 %v191
        %v225 = vunpack.c.l.b16 %v192
        %v226 = vunpack.c.l.b16 %v193
        %v227 = vunpack.c.l.b16 %v194
        %v228 = vunpack.c.l.b16 %v195
        %v229 = vunpack.c.l.b16 %v196
        %v230 = vunpack.c.l.b16 %v197
        %v231 = vunpack.c.l.b16 %v198
        %v232 = vpack.c.b16 %v217, %v216
        %v233 = vpack.c.b16 %v219, %v218
        %v234 = vpack.c.b16 %v221, %v220
        %v235 = vpack.c.b16 %v223, %v222
        %v236 = vpack.c.b16 %v225, %v224
        %v237 = vpack.c.b16 %v227, %v226
        %v238 = vpack.c.b16 %v229, %v228
        %v239 = vpack.c.b16 %v231, %v230
        %248 = vmatprep.subr.bf16.mxu0 0
        %249 = vmatpush1.bf16.msra.mxu0 %v232
        %250 = vmatprep.subr.bf16.mxu0 0
        %251 = vmatpush1.bf16.msra.mxu0 %v233
        %252 = vmatprep.subr.bf16.mxu0 0
        %253 = vmatpush1.bf16.msra.mxu0 %v234
        %254 = vmatprep.subr.bf16.mxu0 0
        %255 = vmatpush1.bf16.msra.mxu0 %v235
        %256 = vmatprep.subr.bf16.mxu0 0
        %257 = vmatpush1.bf16.msra.mxu0 %v236
        %258 = vmatprep.subr.bf16.mxu0 0
        %259 = vmatpush1.bf16.msra.mxu0 %v237
        %260 = vmatprep.subr.bf16.mxu0 0
        %261 = vmatpush1.bf16.msra.mxu0 %v238
        %262 = vmatprep.subr.bf16.mxu0 0
        %263 = vmatpush1.bf16.msra.mxu0 %v239
        %264 = vmatprep.subr.bf16.mxu0 0
        %265 = vmatpush1.bf16.msra.mxu0 0
        %266 = vmatprep.subr.bf16.mxu0 0
        %267 = vmatpush1.bf16.msra.mxu0 0
        %268 = vmatprep.subr.bf16.mxu0 0
        %269 = vmatpush1.bf16.msra.mxu0 0
        %270 = vmatprep.subr.bf16.mxu0 0
        %271 = vmatpush1.bf16.msra.mxu0 0
        %272 = vmatprep.subr.bf16.mxu0 0
        %273 = vmatpush1.bf16.msra.mxu0 0
        %274 = vmatprep.subr.bf16.mxu0 0
        %275 = vmatpush1.bf16.msra.mxu0 0
        %276 = vmatprep.subr.bf16.mxu0 0
        %277 = vmatpush1.bf16.msra.mxu0 0
        %278 = vmatprep.subr.bf16.mxu0 0
        %279 = vmatpush1.bf16.msra.mxu0 0
        %280 = vmatprep.mubr.bf16.mxu0 0
        %281 = vmatmul.mubr.bf16.gmra.mrb[0].mxu0 %v182
        %v282 = vpop.f32.mrb[0].mxu0
        %v283 = vadd.f32 %v199, %v282
        %v284 = vpop.f32.mrb[0].mxu0
        %v285 = vpop.f32.mrb[0].mxu0
        %v286 = vpop.f32.mrb[0].mxu0
        %287 = vdwg.mxu0
        %288 = vst [vmem:[%s162] sm:$0x1] %v283
        %s289 = sand.u32 %s93, 1
        %s290 = scalar_lea.sflag [#allocation3], %s289
        %s291 = sand.u32 %s93, 1
        %s292 = scalar_lea.vmem [#allocation2], %s291
        // Predicated region
        $region33: #{mobilenet_forward.9} parent=31 // pred_check
          %p293 = pneg %p103
        $region34: #{mobilenet_forward.9} parent=31 // pred_check_branch
          %295 = sbr.rel (%p293) target = $region36
        $region35: #{mobilenet_forward.9} parent=31 // pred_region
          %s297 = ssub.s32 16, 16
          %298 = vsyncadd %s290, %s297
          %s299 = smul.addr %s17, 16
          %s300 = scalar_lea.hbm %s3, %s299
          %s302 = sshll.u32 %s292, 4
          %s303 = int_to_ptr.vmem [resolvable:$true] %s302
          %305 = dma.vmem_to_hbm [thread:$0]  %s303, 16, %s300, %s290
        $region36: #{mobilenet_forward.9} parent=31 // pred_fallthru
          _
      $region32: #{mobilenet_forward.9} parent=5 // pred_fallthru
        _
      %p306 = scmp.le.s32.totalorder 2, %s12
      // Predicated region
      $region37: #{mobilenet_forward.9} parent=5 // pred_check
        %p307 = pneg %p306
      $region38: #{mobilenet_forward.9} parent=5 // pred_check_branch
        %309 = sbr.rel (%p307) target = $region40
      $region39: #{mobilenet_forward.9} parent=5 // pred_region
        %s310 = ssub.s32 %s12, 2
        // Predicated region
        $region41: #{mobilenet_forward.9} parent=39 // pred_check
          %p311 = pneg %p109
        $region42: #{mobilenet_forward.9} parent=39 // pred_check_branch
          %313 = sbr.rel (%p311) target = $region44
        $region43: #{mobilenet_forward.9} parent=39 // pred_region
          %s314 = sand.u32 %s94, 1
          %s315 = scalar_lea.sflag [#allocation3], %s314
          %s316 = sand.u32 %s94, 1
          %s317 = scalar_lea.vmem [#allocation2], %s316
          %318 = dma.done %s315, 16
        $region44: #{mobilenet_forward.9} parent=39 // pred_fallthru
          _
      $region40: #{mobilenet_forward.9} parent=5 // pred_fallthru
        _
    $region6: #{mobilenet_forward.9} parent=1 // loop_footer
      %s16 = sadd.s32 1, %s12
    $region7: #{mobilenet_forward.9} parent=1 // loop_footer_branch
      %11 = sbr.rel target = $region3
    $region8: #{mobilenet_forward.9} parent=1 // loop_exit
      _
    %319 = vsyncpa [#allocation3], 1
    %s320 = scalar_lea.sflag [#allocation3], 1
    %321 = vsyncpa %s320, 1

</llo_original>
